<compile_context>
chip_gen: v7x
topology: tpu7x:2x2x1
jax: 0.10.0
libtpu: 0.0.40
codegen_flags: <defaults>
</compile_context>

<pallas_src>
import math

import jax
import jax.numpy as jnp
from jax import lax
from jax.experimental import pallas as pl
from jax.experimental.pallas import tpu as pltpu


def _layer_norm(x, gamma, beta, eps=1e-5):
    # PyTorch nn.LayerNorm semantics: biased variance over last dim, eps=1e-5.
    mu = jnp.mean(x, axis=-1, keepdims=True)
    var = jnp.mean((x - mu) ** 2, axis=-1, keepdims=True)
    return (x - mu) * lax.rsqrt(var + eps) * gamma + beta


def _gelu_exact(x):
    # F.gelu default (approximate='none'): 0.5*x*(1+erf(x/sqrt(2)))
    return 0.5 * x * (1.0 + lax.erf(x * jnp.float32(0.7071067811865476)))


def _step_vmem_bytes(bb, L, D, FF, H):
    """Rough per-grid-step VMEM footprint (bytes)."""
    N = bb * L
    io = 2 * 2 * N * D * 4                                     # in/out blocks, double-buffered
    params = 2 * 2 * (3 * D * D + D * D + D * FF + FF * D)     # bf16 weights, double-buffered
    inter = (N * 3 * D * 2                                     # fused qkv (bf16)
             + 3 * N * D * 2                                   # head-major q/k/v (bf16)
             + 2 * H * bb * L * L * 4                          # scores + probs (f32)
             + N * D * 2                                       # attention out (bf16)
             + N * FF * 4                                      # FFN hidden (f32)
             + 6 * N * D * 4)                                  # residual / layernorm temps (f32)
    return io + params + inter


def _pick_bb(B, L, D, FF, H, max_rows=1024, vmem_budget=40 * 1024 * 1024):
    """Batch items folded per grid step.

    Preference order:
      1. per-step VMEM estimate stays under `vmem_budget` (v5e/v7x headroom),
      2. folded matmul M = Bb*L <= max_rows,
      3. grid = B // Bb is >= 2 and even (keeps both v7x TensorCores busy),
      4. otherwise the largest Bb (largest MXU M for projections / FFN).
    """
    divisors = [d for d in range(1, B + 1) if B % d == 0]

    def ok(bb):
        return (bb * L <= max(max_rows, L)
                and _step_vmem_bytes(bb, L, D, FF, H) <= vmem_budget)

    cands = [d for d in divisors if ok(d)] or [1]
    even_grid = [d for d in cands if (B // d) >= 2 and (B // d) % 2 == 0]
    pool = even_grid or cands
    return max(pool)


def make_encoder_kernel(L, D, FF, H, Bb):
    E = D // H
    N = Bb * L            # folded rows for the projection / FFN matmuls
    G = H * Bb            # attention batch axis (head-major, then batch)
    bf16 = jnp.bfloat16
    f32 = jnp.float32

    def kernel(x_ref, wqkv_ref, bqkv_ref, wo_ref, w1_ref, b1_ref, w2_ref,
               vec_ref, o_ref):
        # vec_ref rows: 0=bo, 1=b2, 2=gamma1, 3=beta1, 4=gamma2, 5=beta2, 6=gammaF, 7=betaF
        vecs = vec_ref[...]                                    # (8, D) f32

        x = x_ref[...].reshape(N, D)                           # (N, D) f32
        xb = x.astype(bf16)

        # --- fused Q/K/V projection: one (N, D) @ (D, 3D) matmul, f32 accumulate.
        #     1/sqrt(E) is already folded into Wq / bq host-side.
        qkv = jnp.dot(xb, wqkv_ref[...], preferred_element_type=f32) + bqkv_ref[...]
        qkv = qkv.astype(bf16)                                 # carry bf16 from here

        def split_heads(off):
            # (N, 3D) -> per-head E=16 lane slices -> (H, N, E) -> (G, L, E)
            hs = [qkv[:, off + h * E: off + (h + 1) * E] for h in range(H)]
            return jnp.stack(hs, axis=0).reshape(G, L, E)

        q = split_heads(0)                                     # (G, L, E) bf16, pre-scaled
        k = split_heads(D)
        v = split_heads(2 * D)

        # --- FullAttention, exact and per batch item (no block-diagonal mask) ---
        s = jnp.einsum('gle,gme->glm', q, k,
                       preferred_element_type=f32)             # (G, L, L) f32
        s = s - jnp.max(s, axis=-1, keepdims=True)
        p = jnp.exp(s)
        p = p * pl.reciprocal(jnp.sum(p, axis=-1, keepdims=True), approx=True)

        a = jnp.einsum('glm,gme->gle', p.astype(bf16), v,
                       preferred_element_type=f32)             # (G, L, E) f32
        a = a.astype(bf16).reshape(H, N, E)

        # --- out-projection: merge heads on the lane axis, one K=128 matmul ---
        a_merged = jnp.concatenate([a[h] for h in range(H)], axis=-1)   # (N, D) bf16
        new_x = jnp.dot(a_merged, wo_ref[...],
                        preferred_element_type=f32) + vecs[0:1, :]      # (N, D) f32

        # --- EncoderLayer residual + norm1 (dropout == identity in eval) ---
        x1 = x + new_x
        x1n = _layer_norm(x1, vecs[2:3, :], vecs[3:4, :])

        # --- FFN: Conv1d(k=1) -> gelu -> Conv1d(k=1) ---
        y = jnp.dot(x1n.astype(bf16), w1_ref[...],
                    preferred_element_type=f32) + b1_ref[...]           # (N, FF)
        y = _gelu_exact(y)
        y = jnp.dot(y.astype(bf16), w2_ref[...],
                    preferred_element_type=f32) + vecs[1:2, :]          # (N, D)

        # --- residual + norm2, then the Encoder's final LayerNorm ---
        x2n = _layer_norm(x1n + y, vecs[4:5, :], vecs[5:6, :])
        out = _layer_norm(x2n, vecs[6:7, :], vecs[7:8, :])
        o_ref[...] = out.reshape(Bb, L, D)

    return kernel


def init_params(key, D, FF, H):
    """Deterministic synthetic parameters, pre-packed in kernel-friendly layouts."""
    E = D // H
    scale = 1.0 / math.sqrt(E)          # FullAttention default scale
    ks = jax.random.split(key, 6)
    s = 0.1

    def dense(k, din, dout):
        kw, kb = jax.random.split(k)
        w = jax.random.normal(kw, (din, dout), jnp.float32) * s   # (in, out) = torch W.T
        b = jax.random.normal(kb, (dout,), jnp.float32) * s
        return w, b

    wq, bq = dense(ks[0], D, D)   # query_projection
    wk, bk = dense(ks[1], D, D)   # key_projection
    wv, bv = dense(ks[2], D, D)   # value_projection
    wo, bo = dense(ks[3], D, D)   # out_projection
    w1, b1 = dense(ks[4], D, FF)  # conv1 (1x1)
    w2, b2 = dense(ks[5], FF, D)  # conv2 (1x1)

    # Fused QKV weight (D, 3D); 1/sqrt(E) folded into the query projection.
    w_qkv = jnp.concatenate([wq * scale, wk, wv], axis=1).astype(jnp.bfloat16)
    b_qkv = jnp.concatenate([bq * scale, bk, bv]).reshape(1, 3 * D)       # f32

    ones = jnp.ones((D,), jnp.float32)    # LayerNorm default weight
    zeros = jnp.zeros((D,), jnp.float32)  # LayerNorm default bias
    # rows: bo, b2, g1, beta1, g2, beta2, gF, betaF
    vec_d = jnp.stack([bo, b2, ones, zeros, ones, zeros, ones, zeros])    # (8, D) f32

    return [w_qkv, b_qkv, wo.astype(jnp.bfloat16),
            w1.astype(jnp.bfloat16), b1.reshape(1, FF),
            w2.astype(jnp.bfloat16), vec_d]


def times_se_forward(x, params, n_heads):
    B, L, D = x.shape
    assert D % n_heads == 0
    FF = params[3].shape[1]
    E = D // n_heads

    Bb = _pick_bb(B, L, D, FF, n_heads)
    grid = (B // Bb,)
    kernel = make_encoder_kernel(L, D, FF, n_heads, Bb)

    param_specs = [pl.BlockSpec(p.shape, lambda i, n=p.ndim: (0,) * n) for p in params]

    # Advisory cost estimate for the XLA scheduler.
    flops = int(2 * B * L * D * (3 * D + D + 2 * FF)        # qkv + out-proj + FFN
                + 4 * B * n_heads * L * L * E)              # qk^T + pv
    transcendentals = int(B * n_heads * L * L + B * L * FF)
    bytes_accessed = int(2 * B * L * D * 4
                         + sum(int(p.size) * p.dtype.itemsize for p in params))

    vmem_est = _step_vmem_bytes(Bb, L, D, FF, n_heads)
    vmem_limit = int(min(max(2 * vmem_est, 16 * 2 ** 20), 48 * 2 ** 20))

    return pl.pallas_call(
        kernel,
        out_shape=jax.ShapeDtypeStruct((B, L, D), jnp.float32),
        grid_spec=pltpu.PrefetchScalarGridSpec(
            num_scalar_prefetch=0,
            grid=grid,
            in_specs=[pl.BlockSpec((Bb, L, D), lambda i: (i, 0, 0))] + param_specs,
            out_specs=pl.BlockSpec((Bb, L, D), lambda i: (i, 0, 0)),
        ),
        compiler_params=pltpu.CompilerParams(
            dimension_semantics=("parallel",),
            vmem_limit_bytes=vmem_limit,
        ),
        cost_estimate=pl.CostEstimate(flops=flops,
                                      transcendentals=transcendentals,
                                      bytes_accessed=bytes_accessed),
    )(x, *params)


def times_se_reference(x, params, n_heads):
    """Pure-JAX f32 reference matching the PyTorch forward (eval mode)."""
    w_qkv, b_qkv, wo, w1, b1, w2, vec_d = params
    B, L, D = x.shape
    H = n_heads
    E = D // H
    w_qkv = w_qkv.astype(jnp.float32)
    wo = wo.astype(jnp.float32)
    w1 = w1.astype(jnp.float32)
    w2 = w2.astype(jnp.float32)
    bo, b2, g1, be1, g2, be2, gF, beF = [vec_d[i] for i in range(8)]

    x0 = x.reshape(B * L, D)
    qkv = x0 @ w_qkv + b_qkv[0]                      # scale already folded into Wq/bq
    q, k, v = jnp.split(qkv, 3, axis=-1)

    def split_heads(t):
        return t.reshape(B, L, H, E).transpose(0, 2, 1, 3)

    qh, kh, vh = split_heads(q), split_heads(k), split_heads(v)
    s = jnp.einsum('bhle,bhme->bhlm', qh, kh)
    p = jax.nn.softmax(s, axis=-1)
    a = jnp.einsum('bhlm,bhme->bhle', p, vh)
    a = a.transpose(0, 2, 1, 3).reshape(B * L, D)
    new_x = a @ wo + bo

    x1 = x0 + new_x
    x1n = _layer_norm(x1, g1, be1)
    y = _gelu_exact(x1n @ w1 + b1[0])
    y = y @ w2 + b2
    x2n = _layer_norm(x1n + y, g2, be2)
    out = _layer_norm(x2n, gF, beF)
    return out.reshape(B, L, D)


if __name__ == "__main__":
    # Small shapes consistent with Times_se(seq_len, horizon, d_model, d_ff, n_heads).
    # d_model=128 keeps all I/O blocks lane-dense; B=4 gives an even grid >= 2.
    B, L, D, FF, H = 4, 8, 128, 256, 8

    key = jax.random.PRNGKey(0)
    kx, kp = jax.random.split(key)
    x = jax.random.normal(kx, (B, L, D), jnp.float32)
    params = init_params(kp, D, FF, H)

    out = times_se_forward(x, params, n_heads=H)
    out = jax.block_until_ready(out)

    assert out.shape == (B, L, D), out.shape
    assert bool(jnp.all(jnp.isfinite(out)))

    # Loose tolerance: kernel uses bf16 MXU operands + approx reciprocal.
    ref = times_se_reference(x, params, n_heads=H)
    max_err = float(jnp.max(jnp.abs(out - ref)))
    assert max_err < 0.15, f"max abs error vs f32 reference: {max_err}"

    print("KERNEL_OK")
</pallas_src>

<mosaic_0001>
module attributes {stable_mosaic.version = 11 : i64} {
  func.func @kernel(%arg0: i32, %arg1: memref<2x8x128xf32, #tpu.memory_space<vmem>>, %arg2: memref<128x384xbf16, #tpu.memory_space<vmem>>, %arg3: memref<1x384xf32, #tpu.memory_space<vmem>>, %arg4: memref<128x128xbf16, #tpu.memory_space<vmem>>, %arg5: memref<128x256xbf16, #tpu.memory_space<vmem>>, %arg6: memref<1x256xf32, #tpu.memory_space<vmem>>, %arg7: memref<256x128xbf16, #tpu.memory_space<vmem>>, %arg8: memref<8x128xf32, #tpu.memory_space<vmem>>, %arg9: memref<2x8x128xf32, #tpu.memory_space<vmem>>) attributes {dimension_semantics = [#tpu.dimension_semantics<parallel>], iteration_bounds = array<i64: 2>, scalar_prefetch = 0 : i64, scratch_operands = 0 : i64, tpu.core_type = #tpu.core_type<tc>, window_params = [{transform_indices = @transform_0, window_bounds = array<i64: 2, 8, 128>}, {pipeline_mode = #tpu.pipeline_mode<synchronous>, transform_indices = @transform_1, window_bounds = array<i64: 128, 384>}, {pipeline_mode = #tpu.pipeline_mode<synchronous>, transform_indices = @transform_2, window_bounds = array<i64: 1, 384>}, {pipeline_mode = #tpu.pipeline_mode<synchronous>, transform_indices = @transform_3, window_bounds = array<i64: 128, 128>}, {pipeline_mode = #tpu.pipeline_mode<synchronous>, transform_indices = @transform_4, window_bounds = array<i64: 128, 256>}, {pipeline_mode = #tpu.pipeline_mode<synchronous>, transform_indices = @transform_5, window_bounds = array<i64: 1, 256>}, {pipeline_mode = #tpu.pipeline_mode<synchronous>, transform_indices = @transform_6, window_bounds = array<i64: 256, 128>}, {pipeline_mode = #tpu.pipeline_mode<synchronous>, transform_indices = @transform_7, window_bounds = array<i64: 8, 128>}, {transform_indices = @transform_8, window_bounds = array<i64: 2, 8, 128>}]} {
    %c0 = arith.constant 0 : index
    %c0_0 = arith.constant 0 : index
    %0 = vector.load %arg8[%c0, %c0_0] : memref<8x128xf32, #tpu.memory_space<vmem>>, vector<8x128xf32>
    %c0_1 = arith.constant 0 : index
    %c0_2 = arith.constant 0 : index
    %c0_3 = arith.constant 0 : index
    %1 = vector.load %arg1[%c0_1, %c0_2, %c0_3] : memref<2x8x128xf32, #tpu.memory_space<vmem>>, vector<2x8x128xf32>
    %2 = vector.shape_cast %1 : vector<2x8x128xf32> to vector<16x128xf32>
    %3 = arith.truncf %2 : vector<16x128xf32> to vector<16x128xbf16>
    %c0_4 = arith.constant 0 : index
    %c0_5 = arith.constant 0 : index
    %4 = vector.load %arg2[%c0_4, %c0_5] : memref<128x384xbf16, #tpu.memory_space<vmem>>, vector<128x384xbf16>
    %cst = arith.constant dense<0.000000e+00> : vector<16x384xf32>
    %5 = tpu.matmul %3, %4, %cst {dimension_numbers = #tpu.dot_dimension_numbers<[1], [0], [0], [1], [0, 0, 1, 1], [], []>} : vector<16x128xbf16>, vector<128x384xbf16>, vector<16x384xf32> -> vector<16x384xf32>
    %c0_6 = arith.constant 0 : index
    %c0_7 = arith.constant 0 : index
    %6 = vector.load %arg3[%c0_6, %c0_7] : memref<1x384xf32, #tpu.memory_space<vmem>>, vector<1x384xf32>
    %7 = vector.broadcast %6 : vector<1x384xf32> to vector<16x384xf32>
    %8 = arith.addf %5, %7 : vector<16x384xf32>
    %9 = arith.truncf %8 : vector<16x384xf32> to vector<16x384xbf16>
    %10 = vector.extract_strided_slice %9 {offsets = [0, 0], sizes = [16, 16], strides = [1, 1]} : vector<16x384xbf16> to vector<16x16xbf16>
    %11 = vector.extract_strided_slice %9 {offsets = [0, 16], sizes = [16, 16], strides = [1, 1]} : vector<16x384xbf16> to vector<16x16xbf16>
    %12 = vector.extract_strided_slice %9 {offsets = [0, 32], sizes = [16, 16], strides = [1, 1]} : vector<16x384xbf16> to vector<16x16xbf16>
    %13 = vector.extract_strided_slice %9 {offsets = [0, 48], sizes = [16, 16], strides = [1, 1]} : vector<16x384xbf16> to vector<16x16xbf16>
    %14 = vector.extract_strided_slice %9 {offsets = [0, 64], sizes = [16, 16], strides = [1, 1]} : vector<16x384xbf16> to vector<16x16xbf16>
    %15 = vector.extract_strided_slice %9 {offsets = [0, 80], sizes = [16, 16], strides = [1, 1]} : vector<16x384xbf16> to vector<16x16xbf16>
    %16 = vector.extract_strided_slice %9 {offsets = [0, 96], sizes = [16, 16], strides = [1, 1]} : vector<16x384xbf16> to vector<16x16xbf16>
    %17 = vector.extract_strided_slice %9 {offsets = [0, 112], sizes = [16, 16], strides = [1, 1]} : vector<16x384xbf16> to vector<16x16xbf16>
    %18 = vector.shape_cast %10 : vector<16x16xbf16> to vector<1x16x16xbf16>
    %19 = vector.shape_cast %11 : vector<16x16xbf16> to vector<1x16x16xbf16>
    %20 = vector.shape_cast %12 : vector<16x16xbf16> to vector<1x16x16xbf16>
    %21 = vector.shape_cast %13 : vector<16x16xbf16> to vector<1x16x16xbf16>
    %22 = vector.shape_cast %14 : vector<16x16xbf16> to vector<1x16x16xbf16>
    %23 = vector.shape_cast %15 : vector<16x16xbf16> to vector<1x16x16xbf16>
    %24 = vector.shape_cast %16 : vector<16x16xbf16> to vector<1x16x16xbf16>
    %25 = vector.shape_cast %17 : vector<16x16xbf16> to vector<1x16x16xbf16>
    %26 = tpu.concatenate %18, %19, %20, %21, %22, %23, %24, %25 in 0 : vector<1x16x16xbf16>, vector<1x16x16xbf16>, vector<1x16x16xbf16>, vector<1x16x16xbf16>, vector<1x16x16xbf16>, vector<1x16x16xbf16>, vector<1x16x16xbf16>, vector<1x16x16xbf16> -> vector<8x16x16xbf16>
    %27 = vector.shape_cast %26 : vector<8x16x16xbf16> to vector<16x8x16xbf16>
    %28 = vector.extract_strided_slice %9 {offsets = [0, 128], sizes = [16, 16], strides = [1, 1]} : vector<16x384xbf16> to vector<16x16xbf16>
    %29 = vector.extract_strided_slice %9 {offsets = [0, 144], sizes = [16, 16], strides = [1, 1]} : vector<16x384xbf16> to vector<16x16xbf16>
    %30 = vector.extract_strided_slice %9 {offsets = [0, 160], sizes = [16, 16], strides = [1, 1]} : vector<16x384xbf16> to vector<16x16xbf16>
    %31 = vector.extract_strided_slice %9 {offsets = [0, 176], sizes = [16, 16], strides = [1, 1]} : vector<16x384xbf16> to vector<16x16xbf16>
    %32 = vector.extract_strided_slice %9 {offsets = [0, 192], sizes = [16, 16], strides = [1, 1]} : vector<16x384xbf16> to vector<16x16xbf16>
    %33 = vector.extract_strided_slice %9 {offsets = [0, 208], sizes = [16, 16], strides = [1, 1]} : vector<16x384xbf16> to vector<16x16xbf16>
    %34 = vector.extract_strided_slice %9 {offsets = [0, 224], sizes = [16, 16], strides = [1, 1]} : vector<16x384xbf16> to vector<16x16xbf16>
    %35 = vector.extract_strided_slice %9 {offsets = [0, 240], sizes = [16, 16], strides = [1, 1]} : vector<16x384xbf16> to vector<16x16xbf16>
    %36 = vector.shape_cast %28 : vector<16x16xbf16> to vector<1x16x16xbf16>
    %37 = vector.shape_cast %29 : vector<16x16xbf16> to vector<1x16x16xbf16>
    %38 = vector.shape_cast %30 : vector<16x16xbf16> to vector<1x16x16xbf16>
    %39 = vector.shape_cast %31 : vector<16x16xbf16> to vector<1x16x16xbf16>
    %40 = vector.shape_cast %32 : vector<16x16xbf16> to vector<1x16x16xbf16>
    %41 = vector.shape_cast %33 : vector<16x16xbf16> to vector<1x16x16xbf16>
    %42 = vector.shape_cast %34 : vector<16x16xbf16> to vector<1x16x16xbf16>
    %43 = vector.shape_cast %35 : vector<16x16xbf16> to vector<1x16x16xbf16>
    %44 = tpu.concatenate %36, %37, %38, %39, %40, %41, %42, %43 in 0 : vector<1x16x16xbf16>, vector<1x16x16xbf16>, vector<1x16x16xbf16>, vector<1x16x16xbf16>, vector<1x16x16xbf16>, vector<1x16x16xbf16>, vector<1x16x16xbf16>, vector<1x16x16xbf16> -> vector<8x16x16xbf16>
    %45 = vector.shape_cast %44 : vector<8x16x16xbf16> to vector<16x8x16xbf16>
    %46 = vector.extract_strided_slice %9 {offsets = [0, 256], sizes = [16, 16], strides = [1, 1]} : vector<16x384xbf16> to vector<16x16xbf16>
    %47 = vector.extract_strided_slice %9 {offsets = [0, 272], sizes = [16, 16], strides = [1, 1]} : vector<16x384xbf16> to vector<16x16xbf16>
    %48 = vector.extract_strided_slice %9 {offsets = [0, 288], sizes = [16, 16], strides = [1, 1]} : vector<16x384xbf16> to vector<16x16xbf16>
    %49 = vector.extract_strided_slice %9 {offsets = [0, 304], sizes = [16, 16], strides = [1, 1]} : vector<16x384xbf16> to vector<16x16xbf16>
    %50 = vector.extract_strided_slice %9 {offsets = [0, 320], sizes = [16, 16], strides = [1, 1]} : vector<16x384xbf16> to vector<16x16xbf16>
    %51 = vector.extract_strided_slice %9 {offsets = [0, 336], sizes = [16, 16], strides = [1, 1]} : vector<16x384xbf16> to vector<16x16xbf16>
    %52 = vector.extract_strided_slice %9 {offsets = [0, 352], sizes = [16, 16], strides = [1, 1]} : vector<16x384xbf16> to vector<16x16xbf16>
    %53 = vector.extract_strided_slice %9 {offsets = [0, 368], sizes = [16, 16], strides = [1, 1]} : vector<16x384xbf16> to vector<16x16xbf16>
    %54 = vector.shape_cast %46 : vector<16x16xbf16> to vector<1x16x16xbf16>
    %55 = vector.shape_cast %47 : vector<16x16xbf16> to vector<1x16x16xbf16>
    %56 = vector.shape_cast %48 : vector<16x16xbf16> to vector<1x16x16xbf16>
    %57 = vector.shape_cast %49 : vector<16x16xbf16> to vector<1x16x16xbf16>
    %58 = vector.shape_cast %50 : vector<16x16xbf16> to vector<1x16x16xbf16>
    %59 = vector.shape_cast %51 : vector<16x16xbf16> to vector<1x16x16xbf16>
    %60 = vector.shape_cast %52 : vector<16x16xbf16> to vector<1x16x16xbf16>
    %61 = vector.shape_cast %53 : vector<16x16xbf16> to vector<1x16x16xbf16>
    %62 = tpu.concatenate %54, %55, %56, %57, %58, %59, %60, %61 in 0 : vector<1x16x16xbf16>, vector<1x16x16xbf16>, vector<1x16x16xbf16>, vector<1x16x16xbf16>, vector<1x16x16xbf16>, vector<1x16x16xbf16>, vector<1x16x16xbf16>, vector<1x16x16xbf16> -> vector<8x16x16xbf16>
    %63 = vector.shape_cast %62 : vector<8x16x16xbf16> to vector<16x8x16xbf16>
    "tpu.trace_start"() <{level = 10 : i32, message = "gle,gme->glm"}> : () -> ()
    %cst_8 = arith.constant dense<0.000000e+00> : vector<16x8x8xf32>
    %64 = tpu.matmul %27, %45, %cst_8 {dimension_numbers = #tpu.dot_dimension_numbers<[2], [2], [1], [1], [0, 0, 0, 1, 1, 1], [0], [0]>} : vector<16x8x16xbf16>, vector<16x8x16xbf16>, vector<16x8x8xf32> -> vector<16x8x8xf32>
    "tpu.trace_stop"() : () -> ()
    %cst_9 = arith.constant dense<0xFF800000> : vector<16x8xf32>
    %65 = vector.multi_reduction <maximumf>, %64, %cst_9 [2] : vector<16x8x8xf32> to vector<16x8xf32>
    %66 = vector.shape_cast %65 : vector<16x8xf32> to vector<16x8x1xf32>
    %67 = vector.broadcast %66 : vector<16x8x1xf32> to vector<16x8x8xf32>
    %68 = arith.subf %64, %67 : vector<16x8x8xf32>
    %69 = math.exp %68 : vector<16x8x8xf32>
    %cst_10 = arith.constant dense<0.000000e+00> : vector<16x8xf32>
    %70 = vector.multi_reduction <add>, %69, %cst_10 [2] : vector<16x8x8xf32> to vector<16x8xf32>
    %71 = vector.shape_cast %70 : vector<16x8xf32> to vector<16x8x1xf32>
    %72 = tpu.reciprocal %71 {approx = true} : vector<16x8x1xf32> -> vector<16x8x1xf32>
    %73 = vector.broadcast %72 : vector<16x8x1xf32> to vector<16x8x8xf32>
    %74 = arith.mulf %69, %73 : vector<16x8x8xf32>
    %75 = arith.truncf %74 : vector<16x8x8xf32> to vector<16x8x8xbf16>
    "tpu.trace_start"() <{level = 10 : i32, message = "glm,gme->gle"}> : () -> ()
    %cst_11 = arith.constant dense<0.000000e+00> : vector<16x8x16xf32>
    %76 = tpu.matmul %75, %63, %cst_11 {dimension_numbers = #tpu.dot_dimension_numbers<[2], [1], [1], [2], [0, 0, 0, 1, 1, 2], [0], [0]>} : vector<16x8x8xbf16>, vector<16x8x16xbf16>, vector<16x8x16xf32> -> vector<16x8x16xf32>
    "tpu.trace_stop"() : () -> ()
    %77 = arith.truncf %76 : vector<16x8x16xf32> to vector<16x8x16xbf16>
    %78 = vector.shape_cast %77 : vector<16x8x16xbf16> to vector<8x16x16xbf16>
    %79 = vector.extract_strided_slice %78 {offsets = [0, 0, 0], sizes = [1, 16, 16], strides = [1, 1, 1]} : vector<8x16x16xbf16> to vector<1x16x16xbf16>
    %80 = vector.shape_cast %79 : vector<1x16x16xbf16> to vector<16x16xbf16>
    %81 = vector.extract_strided_slice %78 {offsets = [1, 0, 0], sizes = [1, 16, 16], strides = [1, 1, 1]} : vector<8x16x16xbf16> to vector<1x16x16xbf16>
    %82 = vector.shape_cast %81 : vector<1x16x16xbf16> to vector<16x16xbf16>
    %83 = vector.extract_strided_slice %78 {offsets = [2, 0, 0], sizes = [1, 16, 16], strides = [1, 1, 1]} : vector<8x16x16xbf16> to vector<1x16x16xbf16>
    %84 = vector.shape_cast %83 : vector<1x16x16xbf16> to vector<16x16xbf16>
    %85 = vector.extract_strided_slice %78 {offsets = [3, 0, 0], sizes = [1, 16, 16], strides = [1, 1, 1]} : vector<8x16x16xbf16> to vector<1x16x16xbf16>
    %86 = vector.shape_cast %85 : vector<1x16x16xbf16> to vector<16x16xbf16>
    %87 = vector.extract_strided_slice %78 {offsets = [4, 0, 0], sizes = [1, 16, 16], strides = [1, 1, 1]} : vector<8x16x16xbf16> to vector<1x16x16xbf16>
    %88 = vector.shape_cast %87 : vector<1x16x16xbf16> to vector<16x16xbf16>
    %89 = vector.extract_strided_slice %78 {offsets = [5, 0, 0], sizes = [1, 16, 16], strides = [1, 1, 1]} : vector<8x16x16xbf16> to vector<1x16x16xbf16>
    %90 = vector.shape_cast %89 : vector<1x16x16xbf16> to vector<16x16xbf16>
    %91 = vector.extract_strided_slice %78 {offsets = [6, 0, 0], sizes = [1, 16, 16], strides = [1, 1, 1]} : vector<8x16x16xbf16> to vector<1x16x16xbf16>
    %92 = vector.shape_cast %91 : vector<1x16x16xbf16> to vector<16x16xbf16>
    %93 = vector.extract_strided_slice %78 {offsets = [7, 0, 0], sizes = [1, 16, 16], strides = [1, 1, 1]} : vector<8x16x16xbf16> to vector<1x16x16xbf16>
    %94 = vector.shape_cast %93 : vector<1x16x16xbf16> to vector<16x16xbf16>
    %95 = tpu.concatenate %80, %82, %84, %86, %88, %90, %92, %94 in 1 : vector<16x16xbf16>, vector<16x16xbf16>, vector<16x16xbf16>, vector<16x16xbf16>, vector<16x16xbf16>, vector<16x16xbf16>, vector<16x16xbf16>, vector<16x16xbf16> -> vector<16x128xbf16>
    %c0_12 = arith.constant 0 : index
    %c0_13 = arith.constant 0 : index
    %96 = vector.load %arg4[%c0_12, %c0_13] : memref<128x128xbf16, #tpu.memory_space<vmem>>, vector<128x128xbf16>
    %cst_14 = arith.constant dense<0.000000e+00> : vector<16x128xf32>
    %97 = tpu.matmul %95, %96, %cst_14 {dimension_numbers = #tpu.dot_dimension_numbers<[1], [0], [0], [1], [0, 0, 1, 1], [], []>} : vector<16x128xbf16>, vector<128x128xbf16>, vector<16x128xf32> -> vector<16x128xf32>
    %98 = vector.extract_strided_slice %0 {offsets = [0, 0], sizes = [1, 128], strides = [1, 1]} : vector<8x128xf32> to vector<1x128xf32>
    %99 = vector.broadcast %98 : vector<1x128xf32> to vector<16x128xf32>
    %100 = arith.addf %97, %99 : vector<16x128xf32>
    %101 = arith.addf %2, %100 : vector<16x128xf32>
    %102 = vector.extract_strided_slice %0 {offsets = [2, 0], sizes = [1, 128], strides = [1, 1]} : vector<8x128xf32> to vector<1x128xf32>
    %103 = vector.extract_strided_slice %0 {offsets = [3, 0], sizes = [1, 128], strides = [1, 1]} : vector<8x128xf32> to vector<1x128xf32>
    %cst_15 = arith.constant dense<0.000000e+00> : vector<16xf32>
    %104 = vector.multi_reduction <add>, %101, %cst_15 [1] : vector<16x128xf32> to vector<16xf32>
    %105 = vector.shape_cast %104 : vector<16xf32> to vector<16x1xf32>
    %cst_16 = arith.constant 1.280000e+02 : f32
    %106 = vector.broadcast %cst_16 : f32 to vector<16x1xf32>
    %107 = arith.divf %105, %106 : vector<16x1xf32>
    %108 = vector.broadcast %107 : vector<16x1xf32> to vector<16x128xf32>
    %109 = arith.subf %101, %108 : vector<16x128xf32>
    %110 = arith.mulf %109, %109 : vector<16x128xf32>
    %cst_17 = arith.constant dense<0.000000e+00> : vector<16xf32>
    %111 = vector.multi_reduction <add>, %110, %cst_17 [1] : vector<16x128xf32> to vector<16xf32>
    %112 = vector.shape_cast %111 : vector<16xf32> to vector<16x1xf32>
    %cst_18 = arith.constant 1.280000e+02 : f32
    %113 = vector.broadcast %cst_18 : f32 to vector<16x1xf32>
    %114 = arith.divf %112, %113 : vector<16x1xf32>
    %115 = vector.broadcast %107 : vector<16x1xf32> to vector<16x128xf32>
    %116 = arith.subf %101, %115 : vector<16x128xf32>
    %cst_19 = arith.constant 9.99999974E-6 : f32
    %117 = vector.broadcast %cst_19 : f32 to vector<16x1xf32>
    %118 = arith.addf %114, %117 : vector<16x1xf32>
    %119 = math.rsqrt %118 : vector<16x1xf32>
    %120 = vector.broadcast %119 : vector<16x1xf32> to vector<16x128xf32>
    %121 = arith.mulf %116, %120 : vector<16x128xf32>
    %122 = vector.broadcast %102 : vector<1x128xf32> to vector<16x128xf32>
    %123 = arith.mulf %121, %122 : vector<16x128xf32>
    %124 = vector.broadcast %103 : vector<1x128xf32> to vector<16x128xf32>
    %125 = arith.addf %123, %124 : vector<16x128xf32>
    %126 = arith.truncf %125 : vector<16x128xf32> to vector<16x128xbf16>
    %c0_20 = arith.constant 0 : index
    %c0_21 = arith.constant 0 : index
    %127 = vector.load %arg5[%c0_20, %c0_21] : memref<128x256xbf16, #tpu.memory_space<vmem>>, vector<128x256xbf16>
    %cst_22 = arith.constant dense<0.000000e+00> : vector<16x256xf32>
    %128 = tpu.matmul %126, %127, %cst_22 {dimension_numbers = #tpu.dot_dimension_numbers<[1], [0], [0], [1], [0, 0, 1, 1], [], []>} : vector<16x128xbf16>, vector<128x256xbf16>, vector<16x256xf32> -> vector<16x256xf32>
    %c0_23 = arith.constant 0 : index
    %c0_24 = arith.constant 0 : index
    %129 = vector.load %arg6[%c0_23, %c0_24] : memref<1x256xf32, #tpu.memory_space<vmem>>, vector<1x256xf32>
    %130 = vector.broadcast %129 : vector<1x256xf32> to vector<16x256xf32>
    %131 = arith.addf %128, %130 : vector<16x256xf32>
    %cst_25 = arith.constant 5.000000e-01 : f32
    %132 = vector.broadcast %cst_25 : f32 to vector<16x256xf32>
    %133 = arith.mulf %132, %131 : vector<16x256xf32>
    %cst_26 = arith.constant 0.707106769 : f32
    %134 = vector.broadcast %cst_26 : f32 to vector<16x256xf32>
    %135 = arith.mulf %131, %134 : vector<16x256xf32>
    %136 = math.erf %135 : vector<16x256xf32>
    %cst_27 = arith.constant 1.000000e+00 : f32
    %137 = vector.broadcast %cst_27 : f32 to vector<16x256xf32>
    %138 = arith.addf %137, %136 : vector<16x256xf32>
    %139 = arith.mulf %133, %138 : vector<16x256xf32>
    %140 = arith.truncf %139 : vector<16x256xf32> to vector<16x256xbf16>
    %c0_28 = arith.constant 0 : index
    %c0_29 = arith.constant 0 : index
    %141 = vector.load %arg7[%c0_28, %c0_29] : memref<256x128xbf16, #tpu.memory_space<vmem>>, vector<256x128xbf16>
    %cst_30 = arith.constant dense<0.000000e+00> : vector<16x128xf32>
    %142 = tpu.matmul %140, %141, %cst_30 {dimension_numbers = #tpu.dot_dimension_numbers<[1], [0], [0], [1], [0, 0, 1, 1], [], []>} : vector<16x256xbf16>, vector<256x128xbf16>, vector<16x128xf32> -> vector<16x128xf32>
    %143 = vector.extract_strided_slice %0 {offsets = [1, 0], sizes = [1, 128], strides = [1, 1]} : vector<8x128xf32> to vector<1x128xf32>
    %144 = vector.broadcast %143 : vector<1x128xf32> to vector<16x128xf32>
    %145 = arith.addf %142, %144 : vector<16x128xf32>
    %146 = arith.addf %125, %145 : vector<16x128xf32>
    %147 = vector.extract_strided_slice %0 {offsets = [4, 0], sizes = [1, 128], strides = [1, 1]} : vector<8x128xf32> to vector<1x128xf32>
    %148 = vector.extract_strided_slice %0 {offsets = [5, 0], sizes = [1, 128], strides = [1, 1]} : vector<8x128xf32> to vector<1x128xf32>
    %cst_31 = arith.constant dense<0.000000e+00> : vector<16xf32>
    %149 = vector.multi_reduction <add>, %146, %cst_31 [1] : vector<16x128xf32> to vector<16xf32>
    %150 = vector.shape_cast %149 : vector<16xf32> to vector<16x1xf32>
    %cst_32 = arith.constant 1.280000e+02 : f32
    %151 = vector.broadcast %cst_32 : f32 to vector<16x1xf32>
    %152 = arith.divf %150, %151 : vector<16x1xf32>
    %153 = vector.broadcast %152 : vector<16x1xf32> to vector<16x128xf32>
    %154 = arith.subf %146, %153 : vector<16x128xf32>
    %155 = arith.mulf %154, %154 : vector<16x128xf32>
    %cst_33 = arith.constant dense<0.000000e+00> : vector<16xf32>
    %156 = vector.multi_reduction <add>, %155, %cst_33 [1] : vector<16x128xf32> to vector<16xf32>
    %157 = vector.shape_cast %156 : vector<16xf32> to vector<16x1xf32>
    %cst_34 = arith.constant 1.280000e+02 : f32
    %158 = vector.broadcast %cst_34 : f32 to vector<16x1xf32>
    %159 = arith.divf %157, %158 : vector<16x1xf32>
    %160 = vector.broadcast %152 : vector<16x1xf32> to vector<16x128xf32>
    %161 = arith.subf %146, %160 : vector<16x128xf32>
    %cst_35 = arith.constant 9.99999974E-6 : f32
    %162 = vector.broadcast %cst_35 : f32 to vector<16x1xf32>
    %163 = arith.addf %159, %162 : vector<16x1xf32>
    %164 = math.rsqrt %163 : vector<16x1xf32>
    %165 = vector.broadcast %164 : vector<16x1xf32> to vector<16x128xf32>
    %166 = arith.mulf %161, %165 : vector<16x128xf32>
    %167 = vector.broadcast %147 : vector<1x128xf32> to vector<16x128xf32>
    %168 = arith.mulf %166, %167 : vector<16x128xf32>
    %169 = vector.broadcast %148 : vector<1x128xf32> to vector<16x128xf32>
    %170 = arith.addf %168, %169 : vector<16x128xf32>
    %171 = vector.extract_strided_slice %0 {offsets = [6, 0], sizes = [1, 128], strides = [1, 1]} : vector<8x128xf32> to vector<1x128xf32>
    %172 = vector.extract_strided_slice %0 {offsets = [7, 0], sizes = [1, 128], strides = [1, 1]} : vector<8x128xf32> to vector<1x128xf32>
    %cst_36 = arith.constant dense<0.000000e+00> : vector<16xf32>
    %173 = vector.multi_reduction <add>, %170, %cst_36 [1] : vector<16x128xf32> to vector<16xf32>
    %174 = vector.shape_cast %173 : vector<16xf32> to vector<16x1xf32>
    %cst_37 = arith.constant 1.280000e+02 : f32
    %175 = vector.broadcast %cst_37 : f32 to vector<16x1xf32>
    %176 = arith.divf %174, %175 : vector<16x1xf32>
    %177 = vector.broadcast %176 : vector<16x1xf32> to vector<16x128xf32>
    %178 = arith.subf %170, %177 : vector<16x128xf32>
    %179 = arith.mulf %178, %178 : vector<16x128xf32>
    %cst_38 = arith.constant dense<0.000000e+00> : vector<16xf32>
    %180 = vector.multi_reduction <add>, %179, %cst_38 [1] : vector<16x128xf32> to vector<16xf32>
    %181 = vector.shape_cast %180 : vector<16xf32> to vector<16x1xf32>
    %cst_39 = arith.constant 1.280000e+02 : f32
    %182 = vector.broadcast %cst_39 : f32 to vector<16x1xf32>
    %183 = arith.divf %181, %182 : vector<16x1xf32>
    %184 = vector.broadcast %176 : vector<16x1xf32> to vector<16x128xf32>
    %185 = arith.subf %170, %184 : vector<16x128xf32>
    %cst_40 = arith.constant 9.99999974E-6 : f32
    %186 = vector.broadcast %cst_40 : f32 to vector<16x1xf32>
    %187 = arith.addf %183, %186 : vector<16x1xf32>
    %188 = math.rsqrt %187 : vector<16x1xf32>
    %189 = vector.broadcast %188 : vector<16x1xf32> to vector<16x128xf32>
    %190 = arith.mulf %185, %189 : vector<16x128xf32>
    %191 = vector.broadcast %171 : vector<1x128xf32> to vector<16x128xf32>
    %192 = arith.mulf %190, %191 : vector<16x128xf32>
    %193 = vector.broadcast %172 : vector<1x128xf32> to vector<16x128xf32>
    %194 = arith.addf %192, %193 : vector<16x128xf32>
    %195 = vector.shape_cast %194 : vector<16x128xf32> to vector<2x8x128xf32>
    %c0_41 = arith.constant 0 : index
    %c0_42 = arith.constant 0 : index
    %c0_43 = arith.constant 0 : index
    %196 = vector.load %arg9[%c0_41, %c0_42, %c0_43] : memref<2x8x128xf32, #tpu.memory_space<vmem>>, vector<2x8x128xf32>
    tpu.vector_store %arg9[%c0_41, %c0_42, %c0_43], %195 {strides = array<i32>} : memref<2x8x128xf32, #tpu.memory_space<vmem>>, vector<2x8x128xf32>,
    return
  }
  func.func @transform_0(%arg0: i32) -> (i32, i32, i32) {
    %c0_i32 = arith.constant 0 : i32
    %c0_i32_0 = arith.constant 0 : i32
    %c0_i32_1 = arith.constant 0 : i32
    return %arg0, %c0_i32, %c0_i32_0 : i32, i32, i32
  }
  func.func @transform_1(%arg0: i32) -> (i32, i32) {
    %c0_i32 = arith.constant 0 : i32
    %c0_i32_0 = arith.constant 0 : i32
    %c0_i32_1 = arith.constant 0 : i32
    return %c0_i32, %c0_i32_0 : i32, i32
  }
  func.func @transform_2(%arg0: i32) -> (i32, i32) {
    %c0_i32 = arith.constant 0 : i32
    %c0_i32_0 = arith.constant 0 : i32
    %c0_i32_1 = arith.constant 0 : i32
    return %c0_i32, %c0_i32_0 : i32, i32
  }
  func.func @transform_3(%arg0: i32) -> (i32, i32) {
    %c0_i32 = arith.constant 0 : i32
    %c0_i32_0 = arith.constant 0 : i32
    %c0_i32_1 = arith.constant 0 : i32
    return %c0_i32, %c0_i32_0 : i32, i32
  }
  func.func @transform_4(%arg0: i32) -> (i32, i32) {
    %c0_i32 = arith.constant 0 : i32
    %c0_i32_0 = arith.constant 0 : i32
    %c0_i32_1 = arith.constant 0 : i32
    return %c0_i32, %c0_i32_0 : i32, i32
  }
  func.func @transform_5(%arg0: i32) -> (i32, i32) {
    %c0_i32 = arith.constant 0 : i32
    %c0_i32_0 = arith.constant 0 : i32
    %c0_i32_1 = arith.constant 0 : i32
    return %c0_i32, %c0_i32_0 : i32, i32
  }
  func.func @transform_6(%arg0: i32) -> (i32, i32) {
    %c0_i32 = arith.constant 0 : i32
    %c0_i32_0 = arith.constant 0 : i32
    %c0_i32_1 = arith.constant 0 : i32
    return %c0_i32, %c0_i32_0 : i32, i32
  }
  func.func @transform_7(%arg0: i32) -> (i32, i32) {
    %c0_i32 = arith.constant 0 : i32
    %c0_i32_0 = arith.constant 0 : i32
    %c0_i32_1 = arith.constant 0 : i32
    return %c0_i32, %c0_i32_0 : i32, i32
  }
  func.func @transform_8(%arg0: i32) -> (i32, i32, i32) {
    %c0_i32 = arith.constant 0 : i32
    %c0_i32_0 = arith.constant 0 : i32
    %c0_i32_1 = arith.constant 0 : i32
    return %arg0, %c0_i32, %c0_i32_0 : i32, i32, i32
  }
}

</mosaic_0001>

<llo_original>
// kernel: tpu_custom_call.1
$region0: #{tpu_custom_call.1}
  #allocation0 [shape = 'u32[]', space=smem, size = 0x4, offset = 0x4, fixed_abs, tag = 'smem constant byte address 0x4 - core index']
  #allocation1 [shape = 'u32[144,128]{1,0:T(1,128)}', space=vmem, size = 0x12000, scoped, tag = 'internal scratch']
  %s0 = inlined_call_operand.hbm [shape: f32[4,8,128], index: 0, kind: input, shape index: {}]
  %s1 = inlined_call_operand.hbm [shape: bf16[128,384], index: 1, kind: input, shape index: {}]
  %s2 = inlined_call_operand.vmem [shape: f32[1,384], index: 2, kind: input, shape index: {}]
  %s3 = inlined_call_operand.hbm [shape: bf16[128,128], index: 3, kind: input, shape index: {}]
  %s4 = inlined_call_operand.hbm [shape: bf16[128,256], index: 4, kind: input, shape index: {}]
  %s5 = inlined_call_operand.vmem [shape: f32[1,256], index: 5, kind: input, shape index: {}]
  %s6 = inlined_call_operand.hbm [shape: bf16[256,128], index: 6, kind: input, shape index: {}]
  %s7 = inlined_call_operand.vmem [shape: f32[8,128], index: 7, kind: input, shape index: {}]
  %s8 = inlined_call_operand.hbm [shape: f32[4,8,128], index: 8, kind: output, shape index: {}]
  %s9 = sld [smem:[#allocation0]]
  $region85: #{tpu_custom_call.1} parent=0
    _
  %s11 = ssub.s32 1, %s9
  %s12 = scalar_select 0, %s11, %s9
  $region1: #{tpu_custom_call.1} parent=0
    #allocation2 [shape = 'u8[16384]{0}', space=vmem, size = 0x4000, scoped, tag = 'input window, operand 0']
    #allocation3 [shape = 's32[2]{0}', space=sflag, size = 0x8, scoped, tag = 'scoped memory for tpu_custom_call.1']
    #allocation4 [shape = 's32[2]{0}', space=sflag, size = 0x8, scoped, tag = 'scoped memory for tpu_custom_call.1']
    #allocation5 [shape = 'u8[98304]{0}', space=vmem, size = 0x18000, scoped, tag = 'input window, operand 1, single buffered']
    #allocation6 [shape = 's32[1]{0}', space=sflag, size = 0x4, scoped, tag = 'scoped memory for tpu_custom_call.1']
    #allocation7 [shape = 'u8[32768]{0}', space=vmem, size = 0x8000, scoped, tag = 'input window, operand 3, single buffered']
    #allocation8 [shape = 'u8[65536]{0}', space=vmem, size = 0x10000, scoped, tag = 'input window, operand 4, single buffered']
    #allocation9 [shape = 's32[1]{0}', space=sflag, size = 0x4, scoped, tag = 'scoped memory for tpu_custom_call.1']
    #allocation10 [shape = 'u8[65536]{0}', space=vmem, size = 0x10000, scoped, tag = 'input window, operand 6, single buffered']
    #allocation11 [shape = 'u8[16384]{0}', space=vmem, size = 0x4000, scoped, tag = 'output window, operand 0']
    %13 = vsyncpa [#allocation3], 0
    %s14 = scalar_lea.sflag [#allocation3], 1
    %15 = vsyncpa %s14, 0
    %16 = vsyncpa [#allocation6], 0
    %17 = vsyncpa [#allocation9], 0
    %18 = vsyncpa [#allocation4], 0
    %s19 = scalar_lea.sflag [#allocation4], 1
    %20 = vsyncpa %s19, 0
    loop: start=0, step=1, limit=4
    $region2: #{tpu_custom_call.1} parent=1 // loop_pre_header
      _
    $region3: #{tpu_custom_call.1} parent=1 // loop_header
      %s22 = sphi 0, %s26
      %p23 = scmp.ge.s32.totalorder %s22, 4
      %s32 = sphi 0, %s34
      %s35 = sphi 0, %s32
      %s36 = sphi 0, %s35
      %s52 = sphi 0, %s36
      %s56 = sphi 0, %s56
      %s58 = sphi 0, %s56
      %s59 = sphi 0, %s58
      %s73 = sphi 0, %s59
      %s77 = sphi 0, %s77
      %s79 = sphi 0, %s77
      %s80 = sphi 0, %s79
      %s94 = sphi 0, %s80
      %s98 = sphi 0, %s98
      %s100 = sphi 0, %s98
      %s101 = sphi 0, %s100
      %s115 = sphi 0, %s101
      %s119 = sphi 0, %s119
      %s121 = sphi 0, %s119
      %s122 = sphi 0, %s121
      %s136 = sphi 0, %s122
      %s140 = sphi 0, %s140
      %s142 = sphi 0, %s140
      %s143 = sphi 0, %s142
      %s157 = sphi 0, %s143
      %s161 = sphi 0, %s161
      %s163 = sphi 0, %s161
      %s164 = sphi 0, %s163
      %s178 = sphi 0, %s164
      %s182 = sphi 0, %s182
      %s184 = sphi 0, %s182
      %s185 = sphi 0, %s184
      %s199 = sphi 0, %s185
      %s205 = sphi 0, %s207
      %s208 = sphi 0, %s205
      %s209 = sphi 0, %s208
      %s225 = sphi 0, %s209
    $region4: #{tpu_custom_call.1} parent=1 // loop_header_branch
      %25 = sbr.rel (%p23) target = $region8
    $region5: #{tpu_custom_call.1} parent=1 // loop_body
      %s27 = ssub.s32 %s22, 1
      %s28 = ssub.s32 %s22, 2
      %s29 = sadd.s32 %s22, 1
      %s30 = ssub.s32 %s22, %s29
      %p31 = scmp.eq.s32.totalorder %s30, 0
      %s33 = sadd.s32 %s32, 1
      %s34 = scalar_select %p31, %s32, %s33
      %p37 = pneg %p31
      %p38 = scmp.eq.s32.totalorder %s22, 1
      %p39 = por %p37, %p38
      %p40 = scmp.ne.s32.totalorder %s32, %s35
      %p41 = scmp.eq.s32.totalorder %s22, 0
      %p42 = por %p40, %p41
      %p43 = scmp.ne.s32.totalorder %s32, %s35
      %p44 = scmp.eq.s32.totalorder %s27, 1
      %p45 = por %p43, %p44
      %p46 = scmp.ne.s32.totalorder %s35, %s36
      %p47 = scmp.eq.s32.totalorder %s27, 0
      %p48 = por %p46, %p47
      %p49 = scmp.ne.s32.totalorder %s35, %s36
      %p50 = scmp.eq.s32.totalorder %s28, 1
      %p51 = por %p49, %p50
      %p53 = scmp.ne.s32.totalorder %s36, %s52
      %p54 = scmp.eq.s32.totalorder %s28, 0
      %p55 = por %p53, %p54
      %s57 = sadd.s32 %s56, 1
      %p60 = scmp.eq.s32.totalorder %s22, 1
      %p61 = scmp.ne.s32.totalorder %s56, %s58
      %p62 = scmp.eq.s32.totalorder %s22, 0
      %p63 = por %p61, %p62
      %p64 = scmp.ne.s32.totalorder %s56, %s58
      %p65 = scmp.eq.s32.totalorder %s27, 1
      %p66 = por %p64, %p65
      %p67 = scmp.ne.s32.totalorder %s58, %s59
      %p68 = scmp.eq.s32.totalorder %s27, 0
      %p69 = por %p67, %p68
      %p70 = scmp.ne.s32.totalorder %s58, %s59
      %p71 = scmp.eq.s32.totalorder %s28, 1
      %p72 = por %p70, %p71
      %p74 = scmp.ne.s32.totalorder %s59, %s73
      %p75 = scmp.eq.s32.totalorder %s28, 0
      %p76 = por %p74, %p75
      %s78 = sadd.s32 %s77, 1
      %p81 = scmp.eq.s32.totalorder %s22, 1
      %p82 = scmp.ne.s32.totalorder %s77, %s79
      %p83 = scmp.eq.s32.totalorder %s22, 0
      %p84 = por %p82, %p83
      %p85 = scmp.ne.s32.totalorder %s77, %s79
      %p86 = scmp.eq.s32.totalorder %s27, 1
      %p87 = por %p85, %p86
      %p88 = scmp.ne.s32.totalorder %s79, %s80
      %p89 = scmp.eq.s32.totalorder %s27, 0
      %p90 = por %p88, %p89
      %p91 = scmp.ne.s32.totalorder %s79, %s80
      %p92 = scmp.eq.s32.totalorder %s28, 1
      %p93 = por %p91, %p92
      %p95 = scmp.ne.s32.totalorder %s80, %s94
      %p96 = scmp.eq.s32.totalorder %s28, 0
      %p97 = por %p95, %p96
      %s99 = sadd.s32 %s98, 1
      %p102 = scmp.eq.s32.totalorder %s22, 1
      %p103 = scmp.ne.s32.totalorder %s98, %s100
      %p104 = scmp.eq.s32.totalorder %s22, 0
      %p105 = por %p103, %p104
      %p106 = scmp.ne.s32.totalorder %s98, %s100
      %p107 = scmp.eq.s32.totalorder %s27, 1
      %p108 = por %p106, %p107
      %p109 = scmp.ne.s32.totalorder %s100, %s101
      %p110 = scmp.eq.s32.totalorder %s27, 0
      %p111 = por %p109, %p110
      %p112 = scmp.ne.s32.totalorder %s100, %s101
      %p113 = scmp.eq.s32.totalorder %s28, 1
      %p114 = por %p112, %p113
      %p116 = scmp.ne.s32.totalorder %s101, %s115
      %p117 = scmp.eq.s32.totalorder %s28, 0
      %p118 = por %p116, %p117
      %s120 = sadd.s32 %s119, 1
      %p123 = scmp.eq.s32.totalorder %s22, 1
      %p124 = scmp.ne.s32.totalorder %s119, %s121
      %p125 = scmp.eq.s32.totalorder %s22, 0
      %p126 = por %p124, %p125
      %p127 = scmp.ne.s32.totalorder %s119, %s121
      %p128 = scmp.eq.s32.totalorder %s27, 1
      %p129 = por %p127, %p128
      %p130 = scmp.ne.s32.totalorder %s121, %s122
      %p131 = scmp.eq.s32.totalorder %s27, 0
      %p132 = por %p130, %p131
      %p133 = scmp.ne.s32.totalorder %s121, %s122
      %p134 = scmp.eq.s32.totalorder %s28, 1
      %p135 = por %p133, %p134
      %p137 = scmp.ne.s32.totalorder %s122, %s136
      %p138 = scmp.eq.s32.totalorder %s28, 0
      %p139 = por %p137, %p138
      %s141 = sadd.s32 %s140, 1
      %p144 = scmp.eq.s32.totalorder %s22, 1
      %p145 = scmp.ne.s32.totalorder %s140, %s142
      %p146 = scmp.eq.s32.totalorder %s22, 0
      %p147 = por %p145, %p146
      %p148 = scmp.ne.s32.totalorder %s140, %s142
      %p149 = scmp.eq.s32.totalorder %s27, 1
      %p150 = por %p148, %p149
      %p151 = scmp.ne.s32.totalorder %s142, %s143
      %p152 = scmp.eq.s32.totalorder %s27, 0
      %p153 = por %p151, %p152
      %p154 = scmp.ne.s32.totalorder %s142, %s143
      %p155 = scmp.eq.s32.totalorder %s28, 1
      %p156 = por %p154, %p155
      %p158 = scmp.ne.s32.totalorder %s143, %s157
      %p159 = scmp.eq.s32.totalorder %s28, 0
      %p160 = por %p158, %p159
      %s162 = sadd.s32 %s161, 1
      %p165 = scmp.eq.s32.totalorder %s22, 1
      %p166 = scmp.ne.s32.totalorder %s161, %s163
      %p167 = scmp.eq.s32.totalorder %s22, 0
      %p168 = por %p166, %p167
      %p169 = scmp.ne.s32.totalorder %s161, %s163
      %p170 = scmp.eq.s32.totalorder %s27, 1
      %p171 = por %p169, %p170
      %p172 = scmp.ne.s32.totalorder %s163, %s164
      %p173 = scmp.eq.s32.totalorder %s27, 0
      %p174 = por %p172, %p173
      %p175 = scmp.ne.s32.totalorder %s163, %s164
      %p176 = scmp.eq.s32.totalorder %s28, 1
      %p177 = por %p175, %p176
      %p179 = scmp.ne.s32.totalorder %s164, %s178
      %p180 = scmp.eq.s32.totalorder %s28, 0
      %p181 = por %p179, %p180
      %s183 = sadd.s32 %s182, 1
      %p186 = scmp.eq.s32.totalorder %s22, 1
      %p187 = scmp.ne.s32.totalorder %s182, %s184
      %p188 = scmp.eq.s32.totalorder %s22, 0
      %p189 = por %p187, %p188
      %p190 = scmp.ne.s32.totalorder %s182, %s184
      %p191 = scmp.eq.s32.totalorder %s27, 1
      %p192 = por %p190, %p191
      %p193 = scmp.ne.s32.totalorder %s184, %s185
      %p194 = scmp.eq.s32.totalorder %s27, 0
      %p195 = por %p193, %p194
      %p196 = scmp.ne.s32.totalorder %s184, %s185
      %p197 = scmp.eq.s32.totalorder %s28, 1
      %p198 = por %p196, %p197
      %p200 = scmp.ne.s32.totalorder %s185, %s199
      %p201 = scmp.eq.s32.totalorder %s28, 0
      %p202 = por %p200, %p201
      %s203 = ssub.s32 %s22, %s29
      %p204 = scmp.eq.s32.totalorder %s203, 0
      %s206 = sadd.s32 %s205, 1
      %s207 = scalar_select %p204, %s205, %s206
      %p210 = pneg %p204
      %p211 = scmp.eq.s32.totalorder %s22, 1
      %p212 = por %p210, %p211
      %p213 = scmp.ne.s32.totalorder %s205, %s208
      %p214 = scmp.eq.s32.totalorder %s22, 0
      %p215 = por %p213, %p214
      %p216 = scmp.ne.s32.totalorder %s205, %s208
      %p217 = scmp.eq.s32.totalorder %s27, 1
      %p218 = por %p216, %p217
      %p219 = scmp.ne.s32.totalorder %s208, %s209
      %p220 = scmp.eq.s32.totalorder %s27, 0
      %p221 = por %p219, %p220
      %p222 = scmp.ne.s32.totalorder %s208, %s209
      %p223 = scmp.eq.s32.totalorder %s28, 1
      %p224 = por %p222, %p223
      %p226 = scmp.ne.s32.totalorder %s209, %s225
      %p227 = scmp.eq.s32.totalorder %s28, 0
      %p228 = por %p226, %p227
      %p229 = scmp.le.s32.totalorder 1, %s22
      %p230 = scmp.lt.s32.totalorder %s22, 3
      %p231 = pnand %p229, %p230
      %p232 = pneg %p231
      // Predicated region
      $region9: #{tpu_custom_call.1} parent=5 // pred_check
        _
      $region10: #{tpu_custom_call.1} parent=5 // pred_check_branch
        %234 = sbr.rel (%p231) target = $region12
      $region11: #{tpu_custom_call.1} parent=5 // pred_region
        %s235 = ssub.s32 %s22, 1
        // Predicated region
        $region13: #{tpu_custom_call.1} parent=11 // pred_check
          %p236 = pneg %p69
        $region14: #{tpu_custom_call.1} parent=11 // pred_check_branch
          %238 = sbr.rel (%p236) target = $region16
        $region15: #{tpu_custom_call.1} parent=11 // pred_region
          %s240 = ssub.s32 3072, 3072
          %241 = vsyncadd [#allocation6], %s240
          %s242 = sshll.u32 [#allocation5], 4
          %s243 = int_to_ptr.vmem [resolvable:$true] %s242
          %248 = dma.hbm_to_vmem [thread:$0]  %s1, 3072, %s243, [#allocation6], 192, 192, 12
        $region16: #{tpu_custom_call.1} parent=11 // pred_fallthru
          _
        // Predicated region
        $region17: #{tpu_custom_call.1} parent=11 // pred_check
          %p249 = pneg %p90
        $region18: #{tpu_custom_call.1} parent=11 // pred_check_branch
          %251 = sbr.rel (%p249) target = $region20
        $region19: #{tpu_custom_call.1} parent=11 // pred_region
          _
        $region20: #{tpu_custom_call.1} parent=11 // pred_fallthru
          _
        // Predicated region
        $region21: #{tpu_custom_call.1} parent=11 // pred_check
          %p252 = pneg %p111
        $region22: #{tpu_custom_call.1} parent=11 // pred_check_branch
          %254 = sbr.rel (%p252) target = $region24
        $region23: #{tpu_custom_call.1} parent=11 // pred_region
          %s256 = ssub.s32 1024, 1024
          %257 = vsyncadd [#allocation6], %s256
          %s258 = sshll.u32 [#allocation7], 4
          %s259 = int_to_ptr.vmem [resolvable:$true] %s258
          %264 = dma.hbm_to_vmem [thread:$0]  %s3, 1024, %s259, [#allocation6], 64, 64, 4
        $region24: #{tpu_custom_call.1} parent=11 // pred_fallthru
          _
        // Predicated region
        $region25: #{tpu_custom_call.1} parent=11 // pred_check
          %p265 = pneg %p132
        $region26: #{tpu_custom_call.1} parent=11 // pred_check_branch
          %267 = sbr.rel (%p265) target = $region28
        $region27: #{tpu_custom_call.1} parent=11 // pred_region
          %s269 = ssub.s32 2048, 2048
          %270 = vsyncadd [#allocation9], %s269
          %s271 = sshll.u32 [#allocation8], 4
          %s272 = int_to_ptr.vmem [resolvable:$true] %s271
          %277 = dma.hbm_to_vmem [thread:$0]  %s4, 2048, %s272, [#allocation9], 128, 128, 8
        $region28: #{tpu_custom_call.1} parent=11 // pred_fallthru
          _
        // Predicated region
        $region29: #{tpu_custom_call.1} parent=11 // pred_check
          %p278 = pneg %p153
        $region30: #{tpu_custom_call.1} parent=11 // pred_check_branch
          %280 = sbr.rel (%p278) target = $region32
        $region31: #{tpu_custom_call.1} parent=11 // pred_region
          _
        $region32: #{tpu_custom_call.1} parent=11 // pred_fallthru
          _
        // Predicated region
        $region33: #{tpu_custom_call.1} parent=11 // pred_check
          %p281 = pneg %p174
        $region34: #{tpu_custom_call.1} parent=11 // pred_check_branch
          %283 = sbr.rel (%p281) target = $region36
        $region35: #{tpu_custom_call.1} parent=11 // pred_region
          %s285 = ssub.s32 2048, 2048
          %286 = vsyncadd [#allocation9], %s285
          %s287 = sshll.u32 [#allocation10], 4
          %s288 = int_to_ptr.vmem [resolvable:$true] %s287
          %293 = dma.hbm_to_vmem [thread:$0]  %s6, 2048, %s288, [#allocation9], 64, 64, 4
        $region36: #{tpu_custom_call.1} parent=11 // pred_fallthru
          _
        // Predicated region
        $region37: #{tpu_custom_call.1} parent=11 // pred_check
          %p294 = pneg %p195
        $region38: #{tpu_custom_call.1} parent=11 // pred_check_branch
          %296 = sbr.rel (%p294) target = $region40
        $region39: #{tpu_custom_call.1} parent=11 // pred_region
          _
        $region40: #{tpu_custom_call.1} parent=11 // pred_fallthru
          _
      $region12: #{tpu_custom_call.1} parent=5 // pred_fallthru
        _
      %p297 = scmp.lt.s32.totalorder %s22, 2
      // Predicated region
      $region41: #{tpu_custom_call.1} parent=5 // pred_check
        %p298 = pneg %p297
      $region42: #{tpu_custom_call.1} parent=5 // pred_check_branch
        %300 = sbr.rel (%p298) target = $region44
      $region43: #{tpu_custom_call.1} parent=5 // pred_region
        // Predicated region
        $region45: #{tpu_custom_call.1} parent=43 // pred_check
          %p301 = pneg %p42
        $region46: #{tpu_custom_call.1} parent=43 // pred_check_branch
          %303 = sbr.rel (%p301) target = $region48
        $region47: #{tpu_custom_call.1} parent=43 // pred_region
          %s304 = sand.u32 %s32, 1
          %s305 = scalar_lea.sflag [#allocation3], %s304
          %s306 = sand.u32 %s32, 1
          %s307 = smul.addr %s306, 16
          %s308 = scalar_lea.vmem [#allocation2], %s307
          %s309 = smul.u32 2, %s22
          %s311 = ssub.s32 256, 256
          %312 = vsyncadd %s305, %s311
          %s313 = smul.addr %s309, 128
          %s314 = scalar_lea.hbm %s0, %s313
          %s315 = sshll.u32 %s308, 4
          %s316 = int_to_ptr.vmem [resolvable:$true] %s315
          %321 = dma.hbm_to_vmem [thread:$0]  %s314, 256, %s316, %s305, 128, 128, 8
        $region48: #{tpu_custom_call.1} parent=43 // pred_fallthru
          _
      $region44: #{tpu_custom_call.1} parent=5 // pred_fallthru
        _
      %p322 = scmp.le.s32.totalorder 1, %s22
      %p323 = scmp.lt.s32.totalorder %s22, 3
      %p324 = pnand %p322, %p323
      %p325 = pneg %p324
      // Predicated region
      $region49: #{tpu_custom_call.1} parent=5 // pred_check
        _
      $region50: #{tpu_custom_call.1} parent=5 // pred_check_branch
        %327 = sbr.rel (%p324) target = $region52
      $region51: #{tpu_custom_call.1} parent=5 // pred_region
        %s328 = ssub.s32 %s22, 1
        %s329 = sand.u32 %s35, 1
        %s330 = scalar_lea.sflag [#allocation3], %s329
        %s331 = sand.u32 %s35, 1
        %s332 = smul.addr %s331, 16
        %s333 = scalar_lea.vmem [#allocation2], %s332
        // Predicated region
        $region53: #{tpu_custom_call.1} parent=51 // pred_check
          %p334 = pneg %p48
        $region54: #{tpu_custom_call.1} parent=51 // pred_check_branch
          %336 = sbr.rel (%p334) target = $region56
        $region55: #{tpu_custom_call.1} parent=51 // pred_region
          %337 = dma.done %s330, 256
        $region56: #{tpu_custom_call.1} parent=51 // pred_fallthru
          _
        // Predicated region
        $region57: #{tpu_custom_call.1} parent=51 // pred_check
          %p338 = pneg %p69
        $region58: #{tpu_custom_call.1} parent=51 // pred_check_branch
          %340 = sbr.rel (%p338) target = $region60
        $region59: #{tpu_custom_call.1} parent=51 // pred_region
          %341 = dma.done [#allocation6], 3072
        $region60: #{tpu_custom_call.1} parent=51 // pred_fallthru
          _
        // Predicated region
        $region61: #{tpu_custom_call.1} parent=51 // pred_check
          %p342 = pneg %p111
        $region62: #{tpu_custom_call.1} parent=51 // pred_check_branch
          %344 = sbr.rel (%p342) target = $region64
        $region63: #{tpu_custom_call.1} parent=51 // pred_region
          %345 = dma.done [#allocation6], 1024
        $region64: #{tpu_custom_call.1} parent=51 // pred_fallthru
          _
        // Predicated region
        $region65: #{tpu_custom_call.1} parent=51 // pred_check
          %p346 = pneg %p132
        $region66: #{tpu_custom_call.1} parent=51 // pred_check_branch
          %348 = sbr.rel (%p346) target = $region68
        $region67: #{tpu_custom_call.1} parent=51 // pred_region
          %349 = dma.done [#allocation9], 2048
        $region68: #{tpu_custom_call.1} parent=51 // pred_fallthru
          _
        // Predicated region
        $region69: #{tpu_custom_call.1} parent=51 // pred_check
          %p350 = pneg %p174
        $region70: #{tpu_custom_call.1} parent=51 // pred_check_branch
          %352 = sbr.rel (%p350) target = $region72
        $region71: #{tpu_custom_call.1} parent=51 // pred_region
          %353 = dma.done [#allocation9], 2048
        $region72: #{tpu_custom_call.1} parent=51 // pred_fallthru
          _
        %s354 = sand.u32 %s35, 1
        %s355 = scalar_lea.sflag [#allocation3], %s354
        %s356 = sand.u32 %s35, 1
        %s357 = smul.addr %s356, 16
        %s358 = scalar_lea.vmem [#allocation2], %s357
        %p359 = pneg %p48
        %p360 = pneg %p45
        %p361 = pneg %p69
        %p362 = pneg %p66
        %p363 = pneg %p90
        %p364 = pneg %p87
        %p365 = pneg %p111
        %p366 = pneg %p108
        %p367 = pneg %p132
        %p368 = pneg %p129
        %p369 = pneg %p153
        %p370 = pneg %p150
        %p371 = pneg %p174
        %p372 = pneg %p171
        %p373 = pneg %p195
        %p374 = pneg %p192
        %p375 = pneg %p221
        %p376 = pneg %p218
        %s377 = sand.u32 %s208, 1
        %s378 = scalar_lea.sflag [#allocation4], %s377
        %s379 = sand.u32 %s208, 1
        %s380 = smul.addr %s379, 16
        %s381 = scalar_lea.vmem [#allocation11], %s380
        %s382 = smul.u32 2, %s27
        %s383 = smul.u32 2, %s27
        %v385 = vld [vmem:[%s7] sm:$0xff]
        %v386 = vld [vmem:[%s333] sm:$0xff]
        %v387 = vld [vmem:[%s333 + $0x8] sm:$0xff]
        %v388 = vpack.c.bf16 %v387, %v386
        %v389 = vld [vmem:[#allocation5] sm:$0xff]
        %v390 = vld [vmem:[#allocation5 + $0x8] sm:$0xf]
        %v391 = vld [vmem:[#allocation5 + $0xc] sm:$0xff]
        %v392 = vld [vmem:[#allocation5 + $0x14] sm:$0xf]
        %v393 = vld [vmem:[#allocation5 + $0x18] sm:$0xff]
        %v394 = vld [vmem:[#allocation5 + $0x20] sm:$0xf]
        %v395 = vld [vmem:[#allocation5 + $0x24] sm:$0xff]
        %v396 = vld [vmem:[#allocation5 + $0x2c] sm:$0xf]
        %v397 = vld [vmem:[#allocation5 + $0x30] sm:$0xff]
        %v398 = vld [vmem:[#allocation5 + $0x38] sm:$0xf]
        %v399 = vld [vmem:[#allocation5 + $0x3c] sm:$0xff]
        %v400 = vld [vmem:[#allocation5 + $0x44] sm:$0xf]
        %v401 = vld [vmem:[#allocation5 + $0x48] sm:$0xff]
        %v402 = vld [vmem:[#allocation5 + $0x50] sm:$0xf]
        %v403 = vld [vmem:[#allocation5 + $0x54] sm:$0xff]
        %v404 = vld [vmem:[#allocation5 + $0x5c] sm:$0xf]
        %v405 = vld [vmem:[#allocation5 + $0x60] sm:$0xff]
        %v406 = vld [vmem:[#allocation5 + $0x68] sm:$0xf]
        %v407 = vld [vmem:[#allocation5 + $0x6c] sm:$0xff]
        %v408 = vld [vmem:[#allocation5 + $0x74] sm:$0xf]
        %v409 = vld [vmem:[#allocation5 + $0x78] sm:$0xff]
        %v410 = vld [vmem:[#allocation5 + $0x80] sm:$0xf]
        %v411 = vld [vmem:[#allocation5 + $0x84] sm:$0xff]
        %v412 = vld [vmem:[#allocation5 + $0x8c] sm:$0xf]
        %v413 = vld [vmem:[#allocation5 + $0x90] sm:$0xff]
        %v414 = vld [vmem:[#allocation5 + $0x98] sm:$0xf]
        %v415 = vld [vmem:[#allocation5 + $0x9c] sm:$0xff]
        %v416 = vld [vmem:[#allocation5 + $0xa4] sm:$0xf]
        %v417 = vld [vmem:[#allocation5 + $0xa8] sm:$0xff]
        %v418 = vld [vmem:[#allocation5 + $0xb0] sm:$0xf]
        %v419 = vld [vmem:[#allocation5 + $0xb4] sm:$0xff]
        %v420 = vld [vmem:[#allocation5 + $0xbc] sm:$0xf]
        %v421 = vld [vmem:[%s2] sm:$0x7]
        %v423 = vlaneseq
        %v424 = vshrl.u32 %v423, 7
        %v425 = vsub.s32 0, %v424
        %v426 = vrot.slane %v421, %v425
        %v427 = vlaneseq
        %v428 = vshrl.u32 %v427, 7
        %v429 = vsub.s32 1, %v428
        %v430 = vrot.slane %v421, %v429
        %v431 = vlaneseq
        %v432 = vshrl.u32 %v431, 7
        %v433 = vsub.s32 2, %v432
        %v434 = vrot.slane %v421, %v433
        %v470 = vunpack.c.l.b16 %v389
        %v471 = vunpack.c.h.b16 %v389
        %v472 = vunpack.c.l.b16 %v390
        %v473 = vunpack.c.l.b16 %v391
        %v474 = vunpack.c.h.b16 %v391
        %v475 = vunpack.c.l.b16 %v392
        %v476 = vunpack.c.l.b16 %v393
        %v477 = vunpack.c.h.b16 %v393
        %v478 = vunpack.c.l.b16 %v394
        %v479 = vunpack.c.l.b16 %v395
        %v480 = vunpack.c.h.b16 %v395
        %v481 = vunpack.c.l.b16 %v396
        %v482 = vunpack.c.l.b16 %v397
        %v483 = vunpack.c.h.b16 %v397
        %v484 = vunpack.c.l.b16 %v398
        %v485 = vunpack.c.l.b16 %v399
        %v486 = vunpack.c.h.b16 %v399
        %v487 = vunpack.c.l.b16 %v400
        %v488 = vunpack.c.l.b16 %v401
        %v489 = vunpack.c.h.b16 %v401
        %v490 = vunpack.c.l.b16 %v402
        %v491 = vunpack.c.l.b16 %v403
        %v492 = vunpack.c.h.b16 %v403
        %v493 = vunpack.c.l.b16 %v404
        %v494 = vunpack.c.l.b16 %v405
        %v495 = vunpack.c.h.b16 %v405
        %v496 = vunpack.c.l.b16 %v406
        %v497 = vunpack.c.l.b16 %v407
        %v498 = vunpack.c.h.b16 %v407
        %v499 = vunpack.c.l.b16 %v408
        %v500 = vunpack.c.l.b16 %v409
        %v501 = vunpack.c.h.b16 %v409
        %v502 = vunpack.c.l.b16 %v410
        %v503 = vunpack.c.l.b16 %v411
        %v504 = vunpack.c.h.b16 %v411
        %v505 = vunpack.c.l.b16 %v412
        %v506 = vunpack.c.l.b16 %v413
        %v507 = vunpack.c.h.b16 %v413
        %v508 = vunpack.c.l.b16 %v414
        %v509 = vunpack.c.l.b16 %v415
        %v510 = vunpack.c.h.b16 %v415
        %v511 = vunpack.c.l.b16 %v416
        %v512 = vunpack.c.l.b16 %v417
        %v513 = vunpack.c.h.b16 %v417
        %v514 = vunpack.c.l.b16 %v418
        %v515 = vunpack.c.l.b16 %v419
        %v516 = vunpack.c.h.b16 %v419
        %v517 = vunpack.c.l.b16 %v420
        %v518 = vpack.c.b16 %v473, %v470
        %v519 = vpack.c.b16 %v474, %v471
        %v520 = vpack.c.b16 %v475, %v472
        %v521 = vpack.c.b16 %v479, %v476
        %v522 = vpack.c.b16 %v480, %v477
        %v523 = vpack.c.b16 %v481, %v478
        %v524 = vpack.c.b16 %v485, %v482
        %v525 = vpack.c.b16 %v486, %v483
        %v526 = vpack.c.b16 %v487, %v484
        %v527 = vpack.c.b16 %v491, %v488
        %v528 = vpack.c.b16 %v492, %v489
        %v529 = vpack.c.b16 %v493, %v490
        %v530 = vpack.c.b16 %v497, %v494
        %v531 = vpack.c.b16 %v498, %v495
        %v532 = vpack.c.b16 %v499, %v496
        %v533 = vpack.c.b16 %v503, %v500
        %v534 = vpack.c.b16 %v504, %v501
        %v535 = vpack.c.b16 %v505, %v502
        %v536 = vpack.c.b16 %v509, %v506
        %v537 = vpack.c.b16 %v510, %v507
        %v538 = vpack.c.b16 %v511, %v508
        %v539 = vpack.c.b16 %v515, %v512
        %v540 = vpack.c.b16 %v516, %v513
        %v541 = vpack.c.b16 %v517, %v514
        %566 = vmatprep.subr.bf16.mxu0 %v519
        %567 = vmatpush1.bf16.msra.mxu0 %v518
        %568 = vmatprep.subr.bf16.mxu0 %v522
        %569 = vmatpush1.bf16.msra.mxu0 %v521
        %570 = vmatprep.subr.bf16.mxu0 %v525
        %571 = vmatpush1.bf16.msra.mxu0 %v524
        %572 = vmatprep.subr.bf16.mxu0 %v528
        %573 = vmatpush1.bf16.msra.mxu0 %v527
        %574 = vmatprep.subr.bf16.mxu0 %v531
        %575 = vmatpush1.bf16.msra.mxu0 %v530
        %576 = vmatprep.subr.bf16.mxu0 %v534
        %577 = vmatpush1.bf16.msra.mxu0 %v533
        %578 = vmatprep.subr.bf16.mxu0 %v537
        %579 = vmatpush1.bf16.msra.mxu0 %v536
        %580 = vmatprep.subr.bf16.mxu0 %v540
        %581 = vmatpush1.bf16.msra.mxu0 %v539
        %582 = vmatprep.subr.bf16.mxu0 0
        %583 = vmatpush1.bf16.msra.mxu0 0
        %584 = vmatprep.subr.bf16.mxu0 0
        %585 = vmatpush1.bf16.msra.mxu0 0
        %586 = vmatprep.subr.bf16.mxu0 0
        %587 = vmatpush1.bf16.msra.mxu0 0
        %588 = vmatprep.subr.bf16.mxu0 0
        %589 = vmatpush1.bf16.msra.mxu0 0
        %590 = vmatprep.subr.bf16.mxu0 0
        %591 = vmatpush1.bf16.msra.mxu0 0
        %592 = vmatprep.subr.bf16.mxu0 0
        %593 = vmatpush1.bf16.msra.mxu0 0
        %594 = vmatprep.subr.bf16.mxu0 0
        %595 = vmatpush1.bf16.msra.mxu0 0
        %596 = vmatprep.subr.bf16.mxu0 0
        %597 = vmatpush1.bf16.msra.mxu0 0
        %598 = vmatprep.mubr.bf16.mxu0 0
        %599 = vmatmul.mubr.bf16.gmra.mrb[0].mxu0 %v388
        %v600 = vpop.f32.mrb[0].mxu0
        %v601 = vadd.f32 %v426, %v600
        %v602 = vpop.f32.mrb[0].mxu0
        %v603 = vadd.f32 %v430, %v602
        %v604 = vpop.f32.mrb[0].mxu0
        %v605 = vadd.f32 %v426, %v604
        %v606 = vpop.f32.mrb[0].mxu0
        %v607 = vadd.f32 %v430, %v606
        %608 = vdwg.mxu0
        %609 = vmatprep.subr.bf16.mxu0 0
        %610 = vmatpush1.bf16.msra.mxu0 %v520
        %611 = vmatprep.subr.bf16.mxu0 0
        %612 = vmatpush1.bf16.msra.mxu0 %v523
        %613 = vmatprep.subr.bf16.mxu0 0
        %614 = vmatpush1.bf16.msra.mxu0 %v526
        %615 = vmatprep.subr.bf16.mxu0 0
        %616 = vmatpush1.bf16.msra.mxu0 %v529
        %617 = vmatprep.subr.bf16.mxu0 0
        %618 = vmatpush1.bf16.msra.mxu0 %v532
        %619 = vmatprep.subr.bf16.mxu0 0
        %620 = vmatpush1.bf16.msra.mxu0 %v535
        %621 = vmatprep.subr.bf16.mxu0 0
        %622 = vmatpush1.bf16.msra.mxu0 %v538
        %623 = vmatprep.subr.bf16.mxu0 0
        %624 = vmatpush1.bf16.msra.mxu0 %v541
        %625 = vmatprep.subr.bf16.mxu0 0
        %626 = vmatpush1.bf16.msra.mxu0 0
        %627 = vmatprep.subr.bf16.mxu0 0
        %628 = vmatpush1.bf16.msra.mxu0 0
        %629 = vmatprep.subr.bf16.mxu0 0
        %630 = vmatpush1.bf16.msra.mxu0 0
        %631 = vmatprep.subr.bf16.mxu0 0
        %632 = vmatpush1.bf16.msra.mxu0 0
        %633 = vmatprep.subr.bf16.mxu0 0
        %634 = vmatpush1.bf16.msra.mxu0 0
        %635 = vmatprep.subr.bf16.mxu0 0
        %636 = vmatpush1.bf16.msra.mxu0 0
        %637 = vmatprep.subr.bf16.mxu0 0
        %638 = vmatpush1.bf16.msra.mxu0 0
        %639 = vmatprep.subr.bf16.mxu0 0
        %640 = vmatpush1.bf16.msra.mxu0 0
        %641 = vmatprep.mubr.bf16.mxu0 0
        %642 = vmatmul.mubr.bf16.gmra.mrb[0].mxu0 %v388
        %v643 = vpop.f32.mrb[0].mxu0
        %v644 = vadd.f32 %v434, %v643
        %v645 = vpop.f32.mrb[0].mxu0
        %v646 = vpop.f32.mrb[0].mxu0
        %v647 = vadd.f32 %v434, %v646
        %v648 = vpop.f32.mrb[0].mxu0
        %649 = vdwg.mxu0
        %v650 = vpack.c.bf16 %v605, %v601
        %v651 = vpack.c.bf16 %v607, %v603
        %v652 = vpack.c.bf16 %v647, %v644
        %654 = vrot.lane.b32.xlu0 %v650, 112
        %v655 = vpop.permute.xlu0 %654
        %656 = vrot.lane.b32.xlu0 %v650, 96
        %v657 = vpop.permute.xlu0 %656
        %658 = vrot.lane.b32.xlu0 %v650, 80
        %v659 = vpop.permute.xlu0 %658
        %660 = vrot.lane.b32.xlu0 %v650, 64
        %v661 = vpop.permute.xlu0 %660
        %662 = vrot.lane.b32.xlu0 %v650, 48
        %v663 = vpop.permute.xlu0 %662
        %664 = vrot.lane.b32.xlu0 %v650, 32
        %v665 = vpop.permute.xlu0 %664
        %666 = vrot.lane.b32.xlu0 %v650, 16
        %v667 = vpop.permute.xlu0 %666
        %v668 = vunpack.c.l.b16 %v650
        %v669 = vunpack.c.h.b16 %v650
        %v670 = vunpack.c.l.b16 %v655
        %v671 = vunpack.c.h.b16 %v655
        %v672 = vunpack.c.l.b16 %v657
        %v673 = vunpack.c.h.b16 %v657
        %v674 = vunpack.c.l.b16 %v659
        %v675 = vunpack.c.h.b16 %v659
        %v676 = vunpack.c.l.b16 %v661
        %v677 = vunpack.c.h.b16 %v661
        %v678 = vunpack.c.l.b16 %v663
        %v679 = vunpack.c.h.b16 %v663
        %v680 = vunpack.c.l.b16 %v665
        %v681 = vunpack.c.h.b16 %v665
        %v682 = vunpack.c.l.b16 %v667
        %v683 = vunpack.c.h.b16 %v667
        %v684 = vpack.c.b16 %v668, %v668
        %v685 = vpack.c.b16 %v669, %v669
        %v686 = vpack.c.b16 %v670, %v670
        %v687 = vpack.c.b16 %v671, %v671
        %v688 = vpack.c.b16 %v672, %v672
        %v689 = vpack.c.b16 %v673, %v673
        %v690 = vpack.c.b16 %v674, %v674
        %v691 = vpack.c.b16 %v675, %v675
        %v692 = vpack.c.b16 %v676, %v676
        %v693 = vpack.c.b16 %v677, %v677
        %v694 = vpack.c.b16 %v678, %v678
        %v695 = vpack.c.b16 %v679, %v679
        %v696 = vpack.c.b16 %v680, %v680
        %v697 = vpack.c.b16 %v681, %v681
        %v698 = vpack.c.b16 %v682, %v682
        %v699 = vpack.c.b16 %v683, %v683
        %701 = vrot.lane.b32.xlu0 %v651, 112
        %v702 = vpop.permute.xlu0 %701
        %703 = vrot.lane.b32.xlu0 %v651, 96
        %v704 = vpop.permute.xlu0 %703
        %705 = vrot.lane.b32.xlu0 %v651, 80
        %v706 = vpop.permute.xlu0 %705
        %707 = vrot.lane.b32.xlu0 %v651, 64
        %v708 = vpop.permute.xlu0 %707
        %709 = vrot.lane.b32.xlu0 %v651, 48
        %v710 = vpop.permute.xlu0 %709
        %711 = vrot.lane.b32.xlu0 %v651, 32
        %v712 = vpop.permute.xlu0 %711
        %713 = vrot.lane.b32.xlu0 %v651, 16
        %v714 = vpop.permute.xlu0 %713
        %v715 = vunpack.c.l.b16 %v651
        %v716 = vunpack.c.h.b16 %v651
        %v717 = vunpack.c.l.b16 %v702
        %v718 = vunpack.c.h.b16 %v702
        %v719 = vunpack.c.l.b16 %v704
        %v720 = vunpack.c.h.b16 %v704
        %v721 = vunpack.c.l.b16 %v706
        %v722 = vunpack.c.h.b16 %v706
        %v723 = vunpack.c.l.b16 %v708
        %v724 = vunpack.c.h.b16 %v708
        %v725 = vunpack.c.l.b16 %v710
        %v726 = vunpack.c.h.b16 %v710
        %v727 = vunpack.c.l.b16 %v712
        %v728 = vunpack.c.h.b16 %v712
        %v729 = vunpack.c.l.b16 %v714
        %v730 = vunpack.c.h.b16 %v714
        %v731 = vpack.c.b16 %v715, %v715
        %v732 = vpack.c.b16 %v716, %v716
        %v733 = vpack.c.b16 %v717, %v717
        %v734 = vpack.c.b16 %v718, %v718
        %v735 = vpack.c.b16 %v719, %v719
        %v736 = vpack.c.b16 %v720, %v720
        %v737 = vpack.c.b16 %v721, %v721
        %v738 = vpack.c.b16 %v722, %v722
        %v739 = vpack.c.b16 %v723, %v723
        %v740 = vpack.c.b16 %v724, %v724
        %v741 = vpack.c.b16 %v725, %v725
        %v742 = vpack.c.b16 %v726, %v726
        %v743 = vpack.c.b16 %v727, %v727
        %v744 = vpack.c.b16 %v728, %v728
        %v745 = vpack.c.b16 %v729, %v729
        %v746 = vpack.c.b16 %v730, %v730
        %748 = vrot.lane.b32.xlu0 %v652, 112
        %v749 = vpop.permute.xlu0 %748
        %750 = vrot.lane.b32.xlu0 %v652, 96
        %v751 = vpop.permute.xlu0 %750
        %752 = vrot.lane.b32.xlu0 %v652, 80
        %v753 = vpop.permute.xlu0 %752
        %754 = vrot.lane.b32.xlu0 %v652, 64
        %v755 = vpop.permute.xlu0 %754
        %756 = vrot.lane.b32.xlu0 %v652, 48
        %v757 = vpop.permute.xlu0 %756
        %758 = vrot.lane.b32.xlu0 %v652, 32
        %v759 = vpop.permute.xlu0 %758
        %760 = vrot.lane.b32.xlu0 %v652, 16
        %v761 = vpop.permute.xlu0 %760
        %v762 = vunpack.c.l.b16 %v652
        %v763 = vunpack.c.h.b16 %v652
        %v764 = vunpack.c.l.b16 %v749
        %v765 = vunpack.c.h.b16 %v749
        %v766 = vunpack.c.l.b16 %v751
        %v767 = vunpack.c.h.b16 %v751
        %v768 = vunpack.c.l.b16 %v753
        %v769 = vunpack.c.h.b16 %v753
        %v770 = vunpack.c.l.b16 %v755
        %v771 = vunpack.c.h.b16 %v755
        %v772 = vunpack.c.l.b16 %v757
        %v773 = vunpack.c.h.b16 %v757
        %v774 = vunpack.c.l.b16 %v759
        %v775 = vunpack.c.h.b16 %v759
        %v776 = vunpack.c.l.b16 %v761
        %v777 = vunpack.c.h.b16 %v761
        %v778 = vpack.c.b16 %v762, %v762
        %v779 = vpack.c.b16 %v763, %v763
        %v780 = vpack.c.b16 %v764, %v764
        %v781 = vpack.c.b16 %v765, %v765
        %v782 = vpack.c.b16 %v766, %v766
        %v783 = vpack.c.b16 %v767, %v767
        %v784 = vpack.c.b16 %v768, %v768
        %v785 = vpack.c.b16 %v769, %v769
        %v786 = vpack.c.b16 %v770, %v770
        %v787 = vpack.c.b16 %v771, %v771
        %v788 = vpack.c.b16 %v772, %v772
        %v789 = vpack.c.b16 %v773, %v773
        %v790 = vpack.c.b16 %v774, %v774
        %v791 = vpack.c.b16 %v775, %v775
        %v792 = vpack.c.b16 %v776, %v776
        %v793 = vpack.c.b16 %v777, %v777
        %vm794 = vcmask 130048
        %v796 = vsel %vm794, %v684, 0
        %v799 = vsel %vm794, %v731, 0
        %801 = vmatprep.subr.bf16.mxu0 0
        %802 = vmatpush1.bf16.xpose.msra.mxu0 %v799
        %803 = vmatprep.subr.bf16.mxu0 0
        %804 = vmatpush1.bf16.xpose.msra.mxu0 0
        %805 = vmatprep.subr.bf16.mxu0 0
        %806 = vmatpush1.bf16.xpose.msra.mxu0 0
        %807 = vmatprep.subr.bf16.mxu0 0
        %808 = vmatpush1.bf16.xpose.msra.mxu0 0
        %809 = vmatprep.subr.bf16.mxu0 0
        %810 = vmatpush1.bf16.xpose.msra.mxu0 0
        %811 = vmatprep.subr.bf16.mxu0 0
        %812 = vmatpush1.bf16.xpose.msra.mxu0 0
        %813 = vmatprep.subr.bf16.mxu0 0
        %814 = vmatpush1.bf16.xpose.msra.mxu0 0
        %815 = vmatprep.subr.bf16.mxu0 0
        %816 = vmatpush1.bf16.xpose.msra.mxu0 0
        %817 = vmatprep.subr.bf16.mxu0 0
        %818 = vmatpush1.bf16.xpose.msra.mxu0 0
        %819 = vmatprep.subr.bf16.mxu0 0
        %820 = vmatpush1.bf16.xpose.msra.mxu0 0
        %821 = vmatprep.subr.bf16.mxu0 0
        %822 = vmatpush1.bf16.xpose.msra.mxu0 0
        %823 = vmatprep.subr.bf16.mxu0 0
        %824 = vmatpush1.bf16.xpose.msra.mxu0 0
        %825 = vmatprep.subr.bf16.mxu0 0
        %826 = vmatpush1.bf16.xpose.msra.mxu0 0
        %827 = vmatprep.subr.bf16.mxu0 0
        %828 = vmatpush1.bf16.xpose.msra.mxu0 0
        %829 = vmatprep.subr.bf16.mxu0 0
        %830 = vmatpush1.bf16.xpose.msra.mxu0 0
        %831 = vmatprep.subr.bf16.mxu0 0
        %832 = vmatpush1.bf16.xpose.msra.mxu0 0
        %833 = vmatprep.mubr.bf16.mxu0 0
        %834 = vmatmul.mubr.bf16.gmra.mrb[0].mxu0 %v796
        %v835 = vpop.f32.mrb[0].mxu0
        %v836 = vadd.f32 0.0, %v835
        %v837 = vpop.f32.mrb[0].mxu0
        %v838 = vpop.f32.mrb[0].mxu0
        %v839 = vpop.f32.mrb[0].mxu0
        %840 = vdwg.mxu0
        %v842 = vsel %vm794, %v685, 0
        %v845 = vsel %vm794, %v732, 0
        %847 = vmatprep.subr.bf16.mxu0 0
        %848 = vmatpush1.bf16.xpose.msra.mxu0 %v845
        %849 = vmatprep.subr.bf16.mxu0 0
        %850 = vmatpush1.bf16.xpose.msra.mxu0 0
        %851 = vmatprep.subr.bf16.mxu0 0
        %852 = vmatpush1.bf16.xpose.msra.mxu0 0
        %853 = vmatprep.subr.bf16.mxu0 0
        %854 = vmatpush1.bf16.xpose.msra.mxu0 0
        %855 = vmatprep.subr.bf16.mxu0 0
        %856 = vmatpush1.bf16.xpose.msra.mxu0 0
        %857 = vmatprep.subr.bf16.mxu0 0
        %858 = vmatpush1.bf16.xpose.msra.mxu0 0
        %859 = vmatprep.subr.bf16.mxu0 0
        %860 = vmatpush1.bf16.xpose.msra.mxu0 0
        %861 = vmatprep.subr.bf16.mxu0 0
        %862 = vmatpush1.bf16.xpose.msra.mxu0 0
        %863 = vmatprep.subr.bf16.mxu0 0
        %864 = vmatpush1.bf16.xpose.msra.mxu0 0
        %865 = vmatprep.subr.bf16.mxu0 0
        %866 = vmatpush1.bf16.xpose.msra.mxu0 0
        %867 = vmatprep.subr.bf16.mxu0 0
        %868 = vmatpush1.bf16.xpose.msra.mxu0 0
        %869 = vmatprep.subr.bf16.mxu0 0
        %870 = vmatpush1.bf16.xpose.msra.mxu0 0
        %871 = vmatprep.subr.bf16.mxu0 0
        %872 = vmatpush1.bf16.xpose.msra.mxu0 0
        %873 = vmatprep.subr.bf16.mxu0 0
        %874 = vmatpush1.bf16.xpose.msra.mxu0 0
        %875 = vmatprep.subr.bf16.mxu0 0
        %876 = vmatpush1.bf16.xpose.msra.mxu0 0
        %877 = vmatprep.subr.bf16.mxu0 0
        %878 = vmatpush1.bf16.xpose.msra.mxu0 0
        %879 = vmatprep.mubr.bf16.mxu0 0
        %880 = vmatmul.mubr.bf16.gmra.mrb[0].mxu0 %v842
        %v881 = vpop.f32.mrb[0].mxu0
        %v882 = vadd.f32 0.0, %v881
        %v883 = vpop.f32.mrb[0].mxu0
        %v884 = vpop.f32.mrb[0].mxu0
        %v885 = vpop.f32.mrb[0].mxu0
        %886 = vdwg.mxu0
        %v888 = vsel %vm794, %v686, 0
        %v891 = vsel %vm794, %v733, 0
        %893 = vmatprep.subr.bf16.mxu0 0
        %894 = vmatpush1.bf16.xpose.msra.mxu0 %v891
        %895 = vmatprep.subr.bf16.mxu0 0
        %896 = vmatpush1.bf16.xpose.msra.mxu0 0
        %897 = vmatprep.subr.bf16.mxu0 0
        %898 = vmatpush1.bf16.xpose.msra.mxu0 0
        %899 = vmatprep.subr.bf16.mxu0 0
        %900 = vmatpush1.bf16.xpose.msra.mxu0 0
        %901 = vmatprep.subr.bf16.mxu0 0
        %902 = vmatpush1.bf16.xpose.msra.mxu0 0
        %903 = vmatprep.subr.bf16.mxu0 0
        %904 = vmatpush1.bf16.xpose.msra.mxu0 0
        %905 = vmatprep.subr.bf16.mxu0 0
        %906 = vmatpush1.bf16.xpose.msra.mxu0 0
        %907 = vmatprep.subr.bf16.mxu0 0
        %908 = vmatpush1.bf16.xpose.msra.mxu0 0
        %909 = vmatprep.subr.bf16.mxu0 0
        %910 = vmatpush1.bf16.xpose.msra.mxu0 0
        %911 = vmatprep.subr.bf16.mxu0 0
        %912 = vmatpush1.bf16.xpose.msra.mxu0 0
        %913 = vmatprep.subr.bf16.mxu0 0
        %914 = vmatpush1.bf16.xpose.msra.mxu0 0
        %915 = vmatprep.subr.bf16.mxu0 0
        %916 = vmatpush1.bf16.xpose.msra.mxu0 0
        %917 = vmatprep.subr.bf16.mxu0 0
        %918 = vmatpush1.bf16.xpose.msra.mxu0 0
        %919 = vmatprep.subr.bf16.mxu0 0
        %920 = vmatpush1.bf16.xpose.msra.mxu0 0
        %921 = vmatprep.subr.bf16.mxu0 0
        %922 = vmatpush1.bf16.xpose.msra.mxu0 0
        %923 = vmatprep.subr.bf16.mxu0 0
        %924 = vmatpush1.bf16.xpose.msra.mxu0 0
        %925 = vmatprep.mubr.bf16.mxu0 0
        %926 = vmatmul.mubr.bf16.gmra.mrb[0].mxu0 %v888
        %v927 = vpop.f32.mrb[0].mxu0
        %v928 = vadd.f32 0.0, %v927
        %v929 = vpop.f32.mrb[0].mxu0
        %v930 = vpop.f32.mrb[0].mxu0
        %v931 = vpop.f32.mrb[0].mxu0
        %932 = vdwg.mxu0
        %v934 = vsel %vm794, %v687, 0
        %v937 = vsel %vm794, %v734, 0
        %939 = vmatprep.subr.bf16.mxu0 0
        %940 = vmatpush1.bf16.xpose.msra.mxu0 %v937
        %941 = vmatprep.subr.bf16.mxu0 0
        %942 = vmatpush1.bf16.xpose.msra.mxu0 0
        %943 = vmatprep.subr.bf16.mxu0 0
        %944 = vmatpush1.bf16.xpose.msra.mxu0 0
        %945 = vmatprep.subr.bf16.mxu0 0
        %946 = vmatpush1.bf16.xpose.msra.mxu0 0
        %947 = vmatprep.subr.bf16.mxu0 0
        %948 = vmatpush1.bf16.xpose.msra.mxu0 0
        %949 = vmatprep.subr.bf16.mxu0 0
        %950 = vmatpush1.bf16.xpose.msra.mxu0 0
        %951 = vmatprep.subr.bf16.mxu0 0
        %952 = vmatpush1.bf16.xpose.msra.mxu0 0
        %953 = vmatprep.subr.bf16.mxu0 0
        %954 = vmatpush1.bf16.xpose.msra.mxu0 0
        %955 = vmatprep.subr.bf16.mxu0 0
        %956 = vmatpush1.bf16.xpose.msra.mxu0 0
        %957 = vmatprep.subr.bf16.mxu0 0
        %958 = vmatpush1.bf16.xpose.msra.mxu0 0
        %959 = vmatprep.subr.bf16.mxu0 0
        %960 = vmatpush1.bf16.xpose.msra.mxu0 0
        %961 = vmatprep.subr.bf16.mxu0 0
        %962 = vmatpush1.bf16.xpose.msra.mxu0 0
        %963 = vmatprep.subr.bf16.mxu0 0
        %964 = vmatpush1.bf16.xpose.msra.mxu0 0
        %965 = vmatprep.subr.bf16.mxu0 0
        %966 = vmatpush1.bf16.xpose.msra.mxu0 0
        %967 = vmatprep.subr.bf16.mxu0 0
        %968 = vmatpush1.bf16.xpose.msra.mxu0 0
        %969 = vmatprep.subr.bf16.mxu0 0
        %970 = vmatpush1.bf16.xpose.msra.mxu0 0
        %971 = vmatprep.mubr.bf16.mxu0 0
        %972 = vmatmul.mubr.bf16.gmra.mrb[0].mxu0 %v934
        %v973 = vpop.f32.mrb[0].mxu0
        %v974 = vadd.f32 0.0, %v973
        %v975 = vpop.f32.mrb[0].mxu0
        %v976 = vpop.f32.mrb[0].mxu0
        %v977 = vpop.f32.mrb[0].mxu0
        %978 = vdwg.mxu0
        %v980 = vsel %vm794, %v688, 0
        %v983 = vsel %vm794, %v735, 0
        %985 = vmatprep.subr.bf16.mxu0 0
        %986 = vmatpush1.bf16.xpose.msra.mxu0 %v983
        %987 = vmatprep.subr.bf16.mxu0 0
        %988 = vmatpush1.bf16.xpose.msra.mxu0 0
        %989 = vmatprep.subr.bf16.mxu0 0
        %990 = vmatpush1.bf16.xpose.msra.mxu0 0
        %991 = vmatprep.subr.bf16.mxu0 0
        %992 = vmatpush1.bf16.xpose.msra.mxu0 0
        %993 = vmatprep.subr.bf16.mxu0 0
        %994 = vmatpush1.bf16.xpose.msra.mxu0 0
        %995 = vmatprep.subr.bf16.mxu0 0
        %996 = vmatpush1.bf16.xpose.msra.mxu0 0
        %997 = vmatprep.subr.bf16.mxu0 0
        %998 = vmatpush1.bf16.xpose.msra.mxu0 0
        %999 = vmatprep.subr.bf16.mxu0 0
        %1000 = vmatpush1.bf16.xpose.msra.mxu0 0
        %1001 = vmatprep.subr.bf16.mxu0 0
        %1002 = vmatpush1.bf16.xpose.msra.mxu0 0
        %1003 = vmatprep.subr.bf16.mxu0 0
        %1004 = vmatpush1.bf16.xpose.msra.mxu0 0
        %1005 = vmatprep.subr.bf16.mxu0 0
        %1006 = vmatpush1.bf16.xpose.msra.mxu0 0
        %1007 = vmatprep.subr.bf16.mxu0 0
        %1008 = vmatpush1.bf16.xpose.msra.mxu0 0
        %1009 = vmatprep.subr.bf16.mxu0 0
        %1010 = vmatpush1.bf16.xpose.msra.mxu0 0
        %1011 = vmatprep.subr.bf16.mxu0 0
        %1012 = vmatpush1.bf16.xpose.msra.mxu0 0
        %1013 = vmatprep.subr.bf16.mxu0 0
        %1014 = vmatpush1.bf16.xpose.msra.mxu0 0
        %1015 = vmatprep.subr.bf16.mxu0 0
        %1016 = vmatpush1.bf16.xpose.msra.mxu0 0
        %1017 = vmatprep.mubr.bf16.mxu0 0
        %1018 = vmatmul.mubr.bf16.gmra.mrb[0].mxu0 %v980
        %v1019 = vpop.f32.mrb[0].mxu0
        %v1020 = vadd.f32 0.0, %v1019
        %v1021 = vpop.f32.mrb[0].mxu0
        %v1022 = vpop.f32.mrb[0].mxu0
        %v1023 = vpop.f32.mrb[0].mxu0
        %1024 = vdwg.mxu0
        %v1026 = vsel %vm794, %v689, 0
        %v1029 = vsel %vm794, %v736, 0
        %1031 = vmatprep.subr.bf16.mxu0 0
        %1032 = vmatpush1.bf16.xpose.msra.mxu0 %v1029
        %1033 = vmatprep.subr.bf16.mxu0 0
        %1034 = vmatpush1.bf16.xpose.msra.mxu0 0
        %1035 = vmatprep.subr.bf16.mxu0 0
        %1036 = vmatpush1.bf16.xpose.msra.mxu0 0
        %1037 = vmatprep.subr.bf16.mxu0 0
        %1038 = vmatpush1.bf16.xpose.msra.mxu0 0
        %1039 = vmatprep.subr.bf16.mxu0 0
        %1040 = vmatpush1.bf16.xpose.msra.mxu0 0
        %1041 = vmatprep.subr.bf16.mxu0 0
        %1042 = vmatpush1.bf16.xpose.msra.mxu0 0
        %1043 = vmatprep.subr.bf16.mxu0 0
        %1044 = vmatpush1.bf16.xpose.msra.mxu0 0
        %1045 = vmatprep.subr.bf16.mxu0 0
        %1046 = vmatpush1.bf16.xpose.msra.mxu0 0
        %1047 = vmatprep.subr.bf16.mxu0 0
        %1048 = vmatpush1.bf16.xpose.msra.mxu0 0
        %1049 = vmatprep.subr.bf16.mxu0 0
        %1050 = vmatpush1.bf16.xpose.msra.mxu0 0
        %1051 = vmatprep.subr.bf16.mxu0 0
        %1052 = vmatpush1.bf16.xpose.msra.mxu0 0
        %1053 = vmatprep.subr.bf16.mxu0 0
        %1054 = vmatpush1.bf16.xpose.msra.mxu0 0
        %1055 = vmatprep.subr.bf16.mxu0 0
        %1056 = vmatpush1.bf16.xpose.msra.mxu0 0
        %1057 = vmatprep.subr.bf16.mxu0 0
        %1058 = vmatpush1.bf16.xpose.msra.mxu0 0
        %1059 = vmatprep.subr.bf16.mxu0 0
        %1060 = vmatpush1.bf16.xpose.msra.mxu0 0
        %1061 = vmatprep.subr.bf16.mxu0 0
        %1062 = vmatpush1.bf16.xpose.msra.mxu0 0
        %1063 = vmatprep.mubr.bf16.mxu0 0
        %1064 = vmatmul.mubr.bf16.gmra.mrb[0].mxu0 %v1026
        %v1065 = vpop.f32.mrb[0].mxu0
        %v1066 = vadd.f32 0.0, %v1065
        %v1067 = vpop.f32.mrb[0].mxu0
        %v1068 = vpop.f32.mrb[0].mxu0
        %v1069 = vpop.f32.mrb[0].mxu0
        %1070 = vdwg.mxu0
        %v1072 = vsel %vm794, %v690, 0
        %v1075 = vsel %vm794, %v737, 0
        %1077 = vmatprep.subr.bf16.mxu0 0
        %1078 = vmatpush1.bf16.xpose.msra.mxu0 %v1075
        %1079 = vmatprep.subr.bf16.mxu0 0
        %1080 = vmatpush1.bf16.xpose.msra.mxu0 0
        %1081 = vmatprep.subr.bf16.mxu0 0
        %1082 = vmatpush1.bf16.xpose.msra.mxu0 0
        %1083 = vmatprep.subr.bf16.mxu0 0
        %1084 = vmatpush1.bf16.xpose.msra.mxu0 0
        %1085 = vmatprep.subr.bf16.mxu0 0
        %1086 = vmatpush1.bf16.xpose.msra.mxu0 0
        %1087 = vmatprep.subr.bf16.mxu0 0
        %1088 = vmatpush1.bf16.xpose.msra.mxu0 0
        %1089 = vmatprep.subr.bf16.mxu0 0
        %1090 = vmatpush1.bf16.xpose.msra.mxu0 0
        %1091 = vmatprep.subr.bf16.mxu0 0
        %1092 = vmatpush1.bf16.xpose.msra.mxu0 0
        %1093 = vmatprep.subr.bf16.mxu0 0
        %1094 = vmatpush1.bf16.xpose.msra.mxu0 0
        %1095 = vmatprep.subr.bf16.mxu0 0
        %1096 = vmatpush1.bf16.xpose.msra.mxu0 0
        %1097 = vmatprep.subr.bf16.mxu0 0
        %1098 = vmatpush1.bf16.xpose.msra.mxu0 0
        %1099 = vmatprep.subr.bf16.mxu0 0
        %1100 = vmatpush1.bf16.xpose.msra.mxu0 0
        %1101 = vmatprep.subr.bf16.mxu0 0
        %1102 = vmatpush1.bf16.xpose.msra.mxu0 0
        %1103 = vmatprep.subr.bf16.mxu0 0
        %1104 = vmatpush1.bf16.xpose.msra.mxu0 0
        %1105 = vmatprep.subr.bf16.mxu0 0
        %1106 = vmatpush1.bf16.xpose.msra.mxu0 0
        %1107 = vmatprep.subr.bf16.mxu0 0
        %1108 = vmatpush1.bf16.xpose.msra.mxu0 0
        %1109 = vmatprep.mubr.bf16.mxu0 0
        %1110 = vmatmul.mubr.bf16.gmra.mrb[0].mxu0 %v1072
        %v1111 = vpop.f32.mrb[0].mxu0
        %v1112 = vadd.f32 0.0, %v1111
        %v1113 = vpop.f32.mrb[0].mxu0
        %v1114 = vpop.f32.mrb[0].mxu0
        %v1115 = vpop.f32.mrb[0].mxu0
        %1116 = vdwg.mxu0
        %v1118 = vsel %vm794, %v691, 0
        %v1121 = vsel %vm794, %v738, 0
        %1123 = vmatprep.subr.bf16.mxu0 0
        %1124 = vmatpush1.bf16.xpose.msra.mxu0 %v1121
        %1125 = vmatprep.subr.bf16.mxu0 0
        %1126 = vmatpush1.bf16.xpose.msra.mxu0 0
        %1127 = vmatprep.subr.bf16.mxu0 0
        %1128 = vmatpush1.bf16.xpose.msra.mxu0 0
        %1129 = vmatprep.subr.bf16.mxu0 0
        %1130 = vmatpush1.bf16.xpose.msra.mxu0 0
        %1131 = vmatprep.subr.bf16.mxu0 0
        %1132 = vmatpush1.bf16.xpose.msra.mxu0 0
        %1133 = vmatprep.subr.bf16.mxu0 0
        %1134 = vmatpush1.bf16.xpose.msra.mxu0 0
        %1135 = vmatprep.subr.bf16.mxu0 0
        %1136 = vmatpush1.bf16.xpose.msra.mxu0 0
        %1137 = vmatprep.subr.bf16.mxu0 0
        %1138 = vmatpush1.bf16.xpose.msra.mxu0 0
        %1139 = vmatprep.subr.bf16.mxu0 0
        %1140 = vmatpush1.bf16.xpose.msra.mxu0 0
        %1141 = vmatprep.subr.bf16.mxu0 0
        %1142 = vmatpush1.bf16.xpose.msra.mxu0 0
        %1143 = vmatprep.subr.bf16.mxu0 0
        %1144 = vmatpush1.bf16.xpose.msra.mxu0 0
        %1145 = vmatprep.subr.bf16.mxu0 0
        %1146 = vmatpush1.bf16.xpose.msra.mxu0 0
        %1147 = vmatprep.subr.bf16.mxu0 0
        %1148 = vmatpush1.bf16.xpose.msra.mxu0 0
        %1149 = vmatprep.subr.bf16.mxu0 0
        %1150 = vmatpush1.bf16.xpose.msra.mxu0 0
        %1151 = vmatprep.subr.bf16.mxu0 0
        %1152 = vmatpush1.bf16.xpose.msra.mxu0 0
        %1153 = vmatprep.subr.bf16.mxu0 0
        %1154 = vmatpush1.bf16.xpose.msra.mxu0 0
        %1155 = vmatprep.mubr.bf16.mxu0 0
        %1156 = vmatmul.mubr.bf16.gmra.mrb[0].mxu0 %v1118
        %v1157 = vpop.f32.mrb[0].mxu0
        %v1158 = vadd.f32 0.0, %v1157
        %v1159 = vpop.f32.mrb[0].mxu0
        %v1160 = vpop.f32.mrb[0].mxu0
        %v1161 = vpop.f32.mrb[0].mxu0
        %1162 = vdwg.mxu0
        %v1164 = vsel %vm794, %v692, 0
        %v1167 = vsel %vm794, %v739, 0
        %1169 = vmatprep.subr.bf16.mxu0 0
        %1170 = vmatpush1.bf16.xpose.msra.mxu0 %v1167
        %1171 = vmatprep.subr.bf16.mxu0 0
        %1172 = vmatpush1.bf16.xpose.msra.mxu0 0
        %1173 = vmatprep.subr.bf16.mxu0 0
        %1174 = vmatpush1.bf16.xpose.msra.mxu0 0
        %1175 = vmatprep.subr.bf16.mxu0 0
        %1176 = vmatpush1.bf16.xpose.msra.mxu0 0
        %1177 = vmatprep.subr.bf16.mxu0 0
        %1178 = vmatpush1.bf16.xpose.msra.mxu0 0
        %1179 = vmatprep.subr.bf16.mxu0 0
        %1180 = vmatpush1.bf16.xpose.msra.mxu0 0
        %1181 = vmatprep.subr.bf16.mxu0 0
        %1182 = vmatpush1.bf16.xpose.msra.mxu0 0
        %1183 = vmatprep.subr.bf16.mxu0 0
        %1184 = vmatpush1.bf16.xpose.msra.mxu0 0
        %1185 = vmatprep.subr.bf16.mxu0 0
        %1186 = vmatpush1.bf16.xpose.msra.mxu0 0
        %1187 = vmatprep.subr.bf16.mxu0 0
        %1188 = vmatpush1.bf16.xpose.msra.mxu0 0
        %1189 = vmatprep.subr.bf16.mxu0 0
        %1190 = vmatpush1.bf16.xpose.msra.mxu0 0
        %1191 = vmatprep.subr.bf16.mxu0 0
        %1192 = vmatpush1.bf16.xpose.msra.mxu0 0
        %1193 = vmatprep.subr.bf16.mxu0 0
        %1194 = vmatpush1.bf16.xpose.msra.mxu0 0
        %1195 = vmatprep.subr.bf16.mxu0 0
        %1196 = vmatpush1.bf16.xpose.msra.mxu0 0
        %1197 = vmatprep.subr.bf16.mxu0 0
        %1198 = vmatpush1.bf16.xpose.msra.mxu0 0
        %1199 = vmatprep.subr.bf16.mxu0 0
        %1200 = vmatpush1.bf16.xpose.msra.mxu0 0
        %1201 = vmatprep.mubr.bf16.mxu0 0
        %1202 = vmatmul.mubr.bf16.gmra.mrb[0].mxu0 %v1164
        %v1203 = vpop.f32.mrb[0].mxu0
        %v1204 = vadd.f32 0.0, %v1203
        %v1205 = vpop.f32.mrb[0].mxu0
        %v1206 = vpop.f32.mrb[0].mxu0
        %v1207 = vpop.f32.mrb[0].mxu0
        %1208 = vdwg.mxu0
        %v1210 = vsel %vm794, %v693, 0
        %v1213 = vsel %vm794, %v740, 0
        %1215 = vmatprep.subr.bf16.mxu0 0
        %1216 = vmatpush1.bf16.xpose.msra.mxu0 %v1213
        %1217 = vmatprep.subr.bf16.mxu0 0
        %1218 = vmatpush1.bf16.xpose.msra.mxu0 0
        %1219 = vmatprep.subr.bf16.mxu0 0
        %1220 = vmatpush1.bf16.xpose.msra.mxu0 0
        %1221 = vmatprep.subr.bf16.mxu0 0
        %1222 = vmatpush1.bf16.xpose.msra.mxu0 0
        %1223 = vmatprep.subr.bf16.mxu0 0
        %1224 = vmatpush1.bf16.xpose.msra.mxu0 0
        %1225 = vmatprep.subr.bf16.mxu0 0
        %1226 = vmatpush1.bf16.xpose.msra.mxu0 0
        %1227 = vmatprep.subr.bf16.mxu0 0
        %1228 = vmatpush1.bf16.xpose.msra.mxu0 0
        %1229 = vmatprep.subr.bf16.mxu0 0
        %1230 = vmatpush1.bf16.xpose.msra.mxu0 0
        %1231 = vmatprep.subr.bf16.mxu0 0
        %1232 = vmatpush1.bf16.xpose.msra.mxu0 0
        %1233 = vmatprep.subr.bf16.mxu0 0
        %1234 = vmatpush1.bf16.xpose.msra.mxu0 0
        %1235 = vmatprep.subr.bf16.mxu0 0
        %1236 = vmatpush1.bf16.xpose.msra.mxu0 0
        %1237 = vmatprep.subr.bf16.mxu0 0
        %1238 = vmatpush1.bf16.xpose.msra.mxu0 0
        %1239 = vmatprep.subr.bf16.mxu0 0
        %1240 = vmatpush1.bf16.xpose.msra.mxu0 0
        %1241 = vmatprep.subr.bf16.mxu0 0
        %1242 = vmatpush1.bf16.xpose.msra.mxu0 0
        %1243 = vmatprep.subr.bf16.mxu0 0
        %1244 = vmatpush1.bf16.xpose.msra.mxu0 0
        %1245 = vmatprep.subr.bf16.mxu0 0
        %1246 = vmatpush1.bf16.xpose.msra.mxu0 0
        %1247 = vmatprep.mubr.bf16.mxu0 0
        %1248 = vmatmul.mubr.bf16.gmra.mrb[0].mxu0 %v1210
        %v1249 = vpop.f32.mrb[0].mxu0
        %v1250 = vadd.f32 0.0, %v1249
        %v1251 = vpop.f32.mrb[0].mxu0
        %v1252 = vpop.f32.mrb[0].mxu0
        %v1253 = vpop.f32.mrb[0].mxu0
        %1254 = vdwg.mxu0
        %v1256 = vsel %vm794, %v694, 0
        %v1259 = vsel %vm794, %v741, 0
        %1261 = vmatprep.subr.bf16.mxu0 0
        %1262 = vmatpush1.bf16.xpose.msra.mxu0 %v1259
        %1263 = vmatprep.subr.bf16.mxu0 0
        %1264 = vmatpush1.bf16.xpose.msra.mxu0 0
        %1265 = vmatprep.subr.bf16.mxu0 0
        %1266 = vmatpush1.bf16.xpose.msra.mxu0 0
        %1267 = vmatprep.subr.bf16.mxu0 0
        %1268 = vmatpush1.bf16.xpose.msra.mxu0 0
        %1269 = vmatprep.subr.bf16.mxu0 0
        %1270 = vmatpush1.bf16.xpose.msra.mxu0 0
        %1271 = vmatprep.subr.bf16.mxu0 0
        %1272 = vmatpush1.bf16.xpose.msra.mxu0 0
        %1273 = vmatprep.subr.bf16.mxu0 0
        %1274 = vmatpush1.bf16.xpose.msra.mxu0 0
        %1275 = vmatprep.subr.bf16.mxu0 0
        %1276 = vmatpush1.bf16.xpose.msra.mxu0 0
        %1277 = vmatprep.subr.bf16.mxu0 0
        %1278 = vmatpush1.bf16.xpose.msra.mxu0 0
        %1279 = vmatprep.subr.bf16.mxu0 0
        %1280 = vmatpush1.bf16.xpose.msra.mxu0 0
        %1281 = vmatprep.subr.bf16.mxu0 0
        %1282 = vmatpush1.bf16.xpose.msra.mxu0 0
        %1283 = vmatprep.subr.bf16.mxu0 0
        %1284 = vmatpush1.bf16.xpose.msra.mxu0 0
        %1285 = vmatprep.subr.bf16.mxu0 0
        %1286 = vmatpush1.bf16.xpose.msra.mxu0 0
        %1287 = vmatprep.subr.bf16.mxu0 0
        %1288 = vmatpush1.bf16.xpose.msra.mxu0 0
        %1289 = vmatprep.subr.bf16.mxu0 0
        %1290 = vmatpush1.bf16.xpose.msra.mxu0 0
        %1291 = vmatprep.subr.bf16.mxu0 0
        %1292 = vmatpush1.bf16.xpose.msra.mxu0 0
        %1293 = vmatprep.mubr.bf16.mxu0 0
        %1294 = vmatmul.mubr.bf16.gmra.mrb[0].mxu0 %v1256
        %v1295 = vpop.f32.mrb[0].mxu0
        %v1296 = vadd.f32 0.0, %v1295
        %v1297 = vpop.f32.mrb[0].mxu0
        %v1298 = vpop.f32.mrb[0].mxu0
        %v1299 = vpop.f32.mrb[0].mxu0
        %1300 = vdwg.mxu0
        %v1302 = vsel %vm794, %v695, 0
        %v1305 = vsel %vm794, %v742, 0
        %1307 = vmatprep.subr.bf16.mxu0 0
        %1308 = vmatpush1.bf16.xpose.msra.mxu0 %v1305
        %1309 = vmatprep.subr.bf16.mxu0 0
        %1310 = vmatpush1.bf16.xpose.msra.mxu0 0
        %1311 = vmatprep.subr.bf16.mxu0 0
        %1312 = vmatpush1.bf16.xpose.msra.mxu0 0
        %1313 = vmatprep.subr.bf16.mxu0 0
        %1314 = vmatpush1.bf16.xpose.msra.mxu0 0
        %1315 = vmatprep.subr.bf16.mxu0 0
        %1316 = vmatpush1.bf16.xpose.msra.mxu0 0
        %1317 = vmatprep.subr.bf16.mxu0 0
        %1318 = vmatpush1.bf16.xpose.msra.mxu0 0
        %1319 = vmatprep.subr.bf16.mxu0 0
        %1320 = vmatpush1.bf16.xpose.msra.mxu0 0
        %1321 = vmatprep.subr.bf16.mxu0 0
        %1322 = vmatpush1.bf16.xpose.msra.mxu0 0
        %1323 = vmatprep.subr.bf16.mxu0 0
        %1324 = vmatpush1.bf16.xpose.msra.mxu0 0
        %1325 = vmatprep.subr.bf16.mxu0 0
        %1326 = vmatpush1.bf16.xpose.msra.mxu0 0
        %1327 = vmatprep.subr.bf16.mxu0 0
        %1328 = vmatpush1.bf16.xpose.msra.mxu0 0
        %1329 = vmatprep.subr.bf16.mxu0 0
        %1330 = vmatpush1.bf16.xpose.msra.mxu0 0
        %1331 = vmatprep.subr.bf16.mxu0 0
        %1332 = vmatpush1.bf16.xpose.msra.mxu0 0
        %1333 = vmatprep.subr.bf16.mxu0 0
        %1334 = vmatpush1.bf16.xpose.msra.mxu0 0
        %1335 = vmatprep.subr.bf16.mxu0 0
        %1336 = vmatpush1.bf16.xpose.msra.mxu0 0
        %1337 = vmatprep.subr.bf16.mxu0 0
        %1338 = vmatpush1.bf16.xpose.msra.mxu0 0
        %1339 = vmatprep.mubr.bf16.mxu0 0
        %1340 = vmatmul.mubr.bf16.gmra.mrb[0].mxu0 %v1302
        %v1341 = vpop.f32.mrb[0].mxu0
        %v1342 = vadd.f32 0.0, %v1341
        %v1343 = vpop.f32.mrb[0].mxu0
        %v1344 = vpop.f32.mrb[0].mxu0
        %v1345 = vpop.f32.mrb[0].mxu0
        %1346 = vdwg.mxu0
        %v1348 = vsel %vm794, %v696, 0
        %v1351 = vsel %vm794, %v743, 0
        %1353 = vmatprep.subr.bf16.mxu0 0
        %1354 = vmatpush1.bf16.xpose.msra.mxu0 %v1351
        %1355 = vmatprep.subr.bf16.mxu0 0
        %1356 = vmatpush1.bf16.xpose.msra.mxu0 0
        %1357 = vmatprep.subr.bf16.mxu0 0
        %1358 = vmatpush1.bf16.xpose.msra.mxu0 0
        %1359 = vmatprep.subr.bf16.mxu0 0
        %1360 = vmatpush1.bf16.xpose.msra.mxu0 0
        %1361 = vmatprep.subr.bf16.mxu0 0
        %1362 = vmatpush1.bf16.xpose.msra.mxu0 0
        %1363 = vmatprep.subr.bf16.mxu0 0
        %1364 = vmatpush1.bf16.xpose.msra.mxu0 0
        %1365 = vmatprep.subr.bf16.mxu0 0
        %1366 = vmatpush1.bf16.xpose.msra.mxu0 0
        %1367 = vmatprep.subr.bf16.mxu0 0
        %1368 = vmatpush1.bf16.xpose.msra.mxu0 0
        %1369 = vmatprep.subr.bf16.mxu0 0
        %1370 = vmatpush1.bf16.xpose.msra.mxu0 0
        %1371 = vmatprep.subr.bf16.mxu0 0
        %1372 = vmatpush1.bf16.xpose.msra.mxu0 0
        %1373 = vmatprep.subr.bf16.mxu0 0
        %1374 = vmatpush1.bf16.xpose.msra.mxu0 0
        %1375 = vmatprep.subr.bf16.mxu0 0
        %1376 = vmatpush1.bf16.xpose.msra.mxu0 0
        %1377 = vmatprep.subr.bf16.mxu0 0
        %1378 = vmatpush1.bf16.xpose.msra.mxu0 0
        %1379 = vmatprep.subr.bf16.mxu0 0
        %1380 = vmatpush1.bf16.xpose.msra.mxu0 0
        %1381 = vmatprep.subr.bf16.mxu0 0
        %1382 = vmatpush1.bf16.xpose.msra.mxu0 0
        %1383 = vmatprep.subr.bf16.mxu0 0
        %1384 = vmatpush1.bf16.xpose.msra.mxu0 0
        %1385 = vmatprep.mubr.bf16.mxu0 0
        %1386 = vmatmul.mubr.bf16.gmra.mrb[0].mxu0 %v1348
        %v1387 = vpop.f32.mrb[0].mxu0
        %v1388 = vadd.f32 0.0, %v1387
        %v1389 = vpop.f32.mrb[0].mxu0
        %v1390 = vpop.f32.mrb[0].mxu0
        %v1391 = vpop.f32.mrb[0].mxu0
        %1392 = vdwg.mxu0
        %v1394 = vsel %vm794, %v697, 0
        %v1397 = vsel %vm794, %v744, 0
        %1399 = vmatprep.subr.bf16.mxu0 0
        %1400 = vmatpush1.bf16.xpose.msra.mxu0 %v1397
        %1401 = vmatprep.subr.bf16.mxu0 0
        %1402 = vmatpush1.bf16.xpose.msra.mxu0 0
        %1403 = vmatprep.subr.bf16.mxu0 0
        %1404 = vmatpush1.bf16.xpose.msra.mxu0 0
        %1405 = vmatprep.subr.bf16.mxu0 0
        %1406 = vmatpush1.bf16.xpose.msra.mxu0 0
        %1407 = vmatprep.subr.bf16.mxu0 0
        %1408 = vmatpush1.bf16.xpose.msra.mxu0 0
        %1409 = vmatprep.subr.bf16.mxu0 0
        %1410 = vmatpush1.bf16.xpose.msra.mxu0 0
        %1411 = vmatprep.subr.bf16.mxu0 0
        %1412 = vmatpush1.bf16.xpose.msra.mxu0 0
        %1413 = vmatprep.subr.bf16.mxu0 0
        %1414 = vmatpush1.bf16.xpose.msra.mxu0 0
        %1415 = vmatprep.subr.bf16.mxu0 0
        %1416 = vmatpush1.bf16.xpose.msra.mxu0 0
        %1417 = vmatprep.subr.bf16.mxu0 0
        %1418 = vmatpush1.bf16.xpose.msra.mxu0 0
        %1419 = vmatprep.subr.bf16.mxu0 0
        %1420 = vmatpush1.bf16.xpose.msra.mxu0 0
        %1421 = vmatprep.subr.bf16.mxu0 0
        %1422 = vmatpush1.bf16.xpose.msra.mxu0 0
        %1423 = vmatprep.subr.bf16.mxu0 0
        %1424 = vmatpush1.bf16.xpose.msra.mxu0 0
        %1425 = vmatprep.subr.bf16.mxu0 0
        %1426 = vmatpush1.bf16.xpose.msra.mxu0 0
        %1427 = vmatprep.subr.bf16.mxu0 0
        %1428 = vmatpush1.bf16.xpose.msra.mxu0 0
        %1429 = vmatprep.subr.bf16.mxu0 0
        %1430 = vmatpush1.bf16.xpose.msra.mxu0 0
        %1431 = vmatprep.mubr.bf16.mxu0 0
        %1432 = vmatmul.mubr.bf16.gmra.mrb[0].mxu0 %v1394
        %v1433 = vpop.f32.mrb[0].mxu0
        %v1434 = vadd.f32 0.0, %v1433
        %v1435 = vpop.f32.mrb[0].mxu0
        %v1436 = vpop.f32.mrb[0].mxu0
        %v1437 = vpop.f32.mrb[0].mxu0
        %1438 = vdwg.mxu0
        %v1440 = vsel %vm794, %v698, 0
        %v1443 = vsel %vm794, %v745, 0
        %1445 = vmatprep.subr.bf16.mxu0 0
        %1446 = vmatpush1.bf16.xpose.msra.mxu0 %v1443
        %1447 = vmatprep.subr.bf16.mxu0 0
        %1448 = vmatpush1.bf16.xpose.msra.mxu0 0
        %1449 = vmatprep.subr.bf16.mxu0 0
        %1450 = vmatpush1.bf16.xpose.msra.mxu0 0
        %1451 = vmatprep.subr.bf16.mxu0 0
        %1452 = vmatpush1.bf16.xpose.msra.mxu0 0
        %1453 = vmatprep.subr.bf16.mxu0 0
        %1454 = vmatpush1.bf16.xpose.msra.mxu0 0
        %1455 = vmatprep.subr.bf16.mxu0 0
        %1456 = vmatpush1.bf16.xpose.msra.mxu0 0
        %1457 = vmatprep.subr.bf16.mxu0 0
        %1458 = vmatpush1.bf16.xpose.msra.mxu0 0
        %1459 = vmatprep.subr.bf16.mxu0 0
        %1460 = vmatpush1.bf16.xpose.msra.mxu0 0
        %1461 = vmatprep.subr.bf16.mxu0 0
        %1462 = vmatpush1.bf16.xpose.msra.mxu0 0
        %1463 = vmatprep.subr.bf16.mxu0 0
        %1464 = vmatpush1.bf16.xpose.msra.mxu0 0
        %1465 = vmatprep.subr.bf16.mxu0 0
        %1466 = vmatpush1.bf16.xpose.msra.mxu0 0
        %1467 = vmatprep.subr.bf16.mxu0 0
        %1468 = vmatpush1.bf16.xpose.msra.mxu0 0
        %1469 = vmatprep.subr.bf16.mxu0 0
        %1470 = vmatpush1.bf16.xpose.msra.mxu0 0
        %1471 = vmatprep.subr.bf16.mxu0 0
        %1472 = vmatpush1.bf16.xpose.msra.mxu0 0
        %1473 = vmatprep.subr.bf16.mxu0 0
        %1474 = vmatpush1.bf16.xpose.msra.mxu0 0
        %1475 = vmatprep.subr.bf16.mxu0 0
        %1476 = vmatpush1.bf16.xpose.msra.mxu0 0
        %1477 = vmatprep.mubr.bf16.mxu0 0
        %1478 = vmatmul.mubr.bf16.gmra.mrb[0].mxu0 %v1440
        %v1479 = vpop.f32.mrb[0].mxu0
        %v1480 = vadd.f32 0.0, %v1479
        %v1481 = vpop.f32.mrb[0].mxu0
        %v1482 = vpop.f32.mrb[0].mxu0
        %v1483 = vpop.f32.mrb[0].mxu0
        %1484 = vdwg.mxu0
        %v1486 = vsel %vm794, %v699, 0
        %v1489 = vsel %vm794, %v746, 0
        %1491 = vmatprep.subr.bf16.mxu0 0
        %1492 = vmatpush1.bf16.xpose.msra.mxu0 %v1489
        %1493 = vmatprep.subr.bf16.mxu0 0
        %1494 = vmatpush1.bf16.xpose.msra.mxu0 0
        %1495 = vmatprep.subr.bf16.mxu0 0
        %1496 = vmatpush1.bf16.xpose.msra.mxu0 0
        %1497 = vmatprep.subr.bf16.mxu0 0
        %1498 = vmatpush1.bf16.xpose.msra.mxu0 0
        %1499 = vmatprep.subr.bf16.mxu0 0
        %1500 = vmatpush1.bf16.xpose.msra.mxu0 0
        %1501 = vmatprep.subr.bf16.mxu0 0
        %1502 = vmatpush1.bf16.xpose.msra.mxu0 0
        %1503 = vmatprep.subr.bf16.mxu0 0
        %1504 = vmatpush1.bf16.xpose.msra.mxu0 0
        %1505 = vmatprep.subr.bf16.mxu0 0
        %1506 = vmatpush1.bf16.xpose.msra.mxu0 0
        %1507 = vmatprep.subr.bf16.mxu0 0
        %1508 = vmatpush1.bf16.xpose.msra.mxu0 0
        %1509 = vmatprep.subr.bf16.mxu0 0
        %1510 = vmatpush1.bf16.xpose.msra.mxu0 0
        %1511 = vmatprep.subr.bf16.mxu0 0
        %1512 = vmatpush1.bf16.xpose.msra.mxu0 0
        %1513 = vmatprep.subr.bf16.mxu0 0
        %1514 = vmatpush1.bf16.xpose.msra.mxu0 0
        %1515 = vmatprep.subr.bf16.mxu0 0
        %1516 = vmatpush1.bf16.xpose.msra.mxu0 0
        %1517 = vmatprep.subr.bf16.mxu0 0
        %1518 = vmatpush1.bf16.xpose.msra.mxu0 0
        %1519 = vmatprep.subr.bf16.mxu0 0
        %1520 = vmatpush1.bf16.xpose.msra.mxu0 0
        %1521 = vmatprep.subr.bf16.mxu0 0
        %1522 = vmatpush1.bf16.xpose.msra.mxu0 0
        %1523 = vmatprep.mubr.bf16.mxu0 0
        %1524 = vmatmul.mubr.bf16.gmra.mrb[0].mxu0 %v1486
        %v1525 = vpop.f32.mrb[0].mxu0
        %v1526 = vadd.f32 0.0, %v1525
        %v1527 = vpop.f32.mrb[0].mxu0
        %v1528 = vpop.f32.mrb[0].mxu0
        %v1529 = vpop.f32.mrb[0].mxu0
        %1530 = vdwg.mxu0
        %vm1531 = vcmask 64512
        %v1532 = vsel %vm1531, %v836, -inf
        %1533 = vmax.xlane.f32.xlu0 %v1532
        %v1534 = vpop.xlane.xlu0 %1533
        %v1535 = vsel %vm1531, %v882, -inf
        %1536 = vmax.xlane.f32.xlu0 %v1535
        %v1537 = vpop.xlane.xlu0 %1536
        %v1538 = vsel %vm1531, %v928, -inf
        %1539 = vmax.xlane.f32.xlu0 %v1538
        %v1540 = vpop.xlane.xlu0 %1539
        %v1541 = vsel %vm1531, %v974, -inf
        %1542 = vmax.xlane.f32.xlu0 %v1541
        %v1543 = vpop.xlane.xlu0 %1542
        %v1544 = vsel %vm1531, %v1020, -inf
        %1545 = vmax.xlane.f32.xlu0 %v1544
        %v1546 = vpop.xlane.xlu0 %1545
        %v1547 = vsel %vm1531, %v1066, -inf
        %1548 = vmax.xlane.f32.xlu0 %v1547
        %v1549 = vpop.xlane.xlu0 %1548
        %v1550 = vsel %vm1531, %v1112, -inf
        %1551 = vmax.xlane.f32.xlu0 %v1550
        %v1552 = vpop.xlane.xlu0 %1551
        %v1553 = vsel %vm1531, %v1158, -inf
        %1554 = vmax.xlane.f32.xlu0 %v1553
        %v1555 = vpop.xlane.xlu0 %1554
        %v1556 = vsel %vm1531, %v1204, -inf
        %1557 = vmax.xlane.f32.xlu0 %v1556
        %v1558 = vpop.xlane.xlu0 %1557
        %v1559 = vsel %vm1531, %v1250, -inf
        %1560 = vmax.xlane.f32.xlu0 %v1559
        %v1561 = vpop.xlane.xlu0 %1560
        %v1562 = vsel %vm1531, %v1296, -inf
        %1563 = vmax.xlane.f32.xlu0 %v1562
        %v1564 = vpop.xlane.xlu0 %1563
        %v1565 = vsel %vm1531, %v1342, -inf
        %1566 = vmax.xlane.f32.xlu0 %v1565
        %v1567 = vpop.xlane.xlu0 %1566
        %v1568 = vsel %vm1531, %v1388, -inf
        %1569 = vmax.xlane.f32.xlu0 %v1568
        %v1570 = vpop.xlane.xlu0 %1569
        %v1571 = vsel %vm1531, %v1434, -inf
        %1572 = vmax.xlane.f32.xlu0 %v1571
        %v1573 = vpop.xlane.xlu0 %1572
        %v1574 = vsel %vm1531, %v1480, -inf
        %1575 = vmax.xlane.f32.xlu0 %v1574
        %v1576 = vpop.xlane.xlu0 %1575
        %v1577 = vsel %vm1531, %v1526, -inf
        %1578 = vmax.xlane.f32.xlu0 %v1577
        %v1579 = vpop.xlane.xlu0 %1578
        %v1580 = vsub.f32 %v836, %v1534
        %v1581 = vsub.f32 %v882, %v1537
        %v1582 = vsub.f32 %v928, %v1540
        %v1583 = vsub.f32 %v974, %v1543
        %v1584 = vsub.f32 %v1020, %v1546
        %v1585 = vsub.f32 %v1066, %v1549
        %v1586 = vsub.f32 %v1112, %v1552
        %v1587 = vsub.f32 %v1158, %v1555
        %v1588 = vsub.f32 %v1204, %v1558
        %v1589 = vsub.f32 %v1250, %v1561
        %v1590 = vsub.f32 %v1296, %v1564
        %v1591 = vsub.f32 %v1342, %v1567
        %v1592 = vsub.f32 %v1388, %v1570
        %v1593 = vsub.f32 %v1434, %v1573
        %v1594 = vsub.f32 %v1480, %v1576
        %v1595 = vsub.f32 %v1526, %v1579
        %v1596 = vmul.f32 %v1580, 1.442695
        %v1597 = vpow.pop %v1596
        %v1598 = vmul.f32 %v1581, 1.442695
        %v1599 = vpow.pop %v1598
        %v1600 = vmul.f32 %v1582, 1.442695
        %v1601 = vpow.pop %v1600
        %v1602 = vmul.f32 %v1583, 1.442695
        %v1603 = vpow.pop %v1602
        %v1604 = vmul.f32 %v1584, 1.442695
        %v1605 = vpow.pop %v1604
        %v1606 = vmul.f32 %v1585, 1.442695
        %v1607 = vpow.pop %v1606
        %v1608 = vmul.f32 %v1586, 1.442695
        %v1609 = vpow.pop %v1608
        %v1610 = vmul.f32 %v1587, 1.442695
        %v1611 = vpow.pop %v1610
        %v1612 = vmul.f32 %v1588, 1.442695
        %v1613 = vpow.pop %v1612
        %v1614 = vmul.f32 %v1589, 1.442695
        %v1615 = vpow.pop %v1614
        %v1616 = vmul.f32 %v1590, 1.442695
        %v1617 = vpow.pop %v1616
        %v1618 = vmul.f32 %v1591, 1.442695
        %v1619 = vpow.pop %v1618
        %v1620 = vmul.f32 %v1592, 1.442695
        %v1621 = vpow.pop %v1620
        %v1622 = vmul.f32 %v1593, 1.442695
        %v1623 = vpow.pop %v1622
        %v1624 = vmul.f32 %v1594, 1.442695
        %v1625 = vpow.pop %v1624
        %v1626 = vmul.f32 %v1595, 1.442695
        %v1627 = vpow.pop %v1626
        %v1628 = vsel %vm1531, %v1597, 0.0
        %1629 = vadd.xlane.f32.xlu0 %v1628
        %v1630 = vpop.xlane.xlu0 %1629
        %v1631 = vsel %vm1531, %v1599, 0.0
        %1632 = vadd.xlane.f32.xlu0 %v1631
        %v1633 = vpop.xlane.xlu0 %1632
        %v1634 = vsel %vm1531, %v1601, 0.0
        %1635 = vadd.xlane.f32.xlu0 %v1634
        %v1636 = vpop.xlane.xlu0 %1635
        %v1637 = vsel %vm1531, %v1603, 0.0
        %1638 = vadd.xlane.f32.xlu0 %v1637
        %v1639 = vpop.xlane.xlu0 %1638
        %v1640 = vsel %vm1531, %v1605, 0.0
        %1641 = vadd.xlane.f32.xlu0 %v1640
        %v1642 = vpop.xlane.xlu0 %1641
        %v1643 = vsel %vm1531, %v1607, 0.0
        %1644 = vadd.xlane.f32.xlu0 %v1643
        %v1645 = vpop.xlane.xlu0 %1644
        %v1646 = vsel %vm1531, %v1609, 0.0
        %1647 = vadd.xlane.f32.xlu0 %v1646
        %v1648 = vpop.xlane.xlu0 %1647
        %v1649 = vsel %vm1531, %v1611, 0.0
        %1650 = vadd.xlane.f32.xlu0 %v1649
        %v1651 = vpop.xlane.xlu0 %1650
        %v1652 = vsel %vm1531, %v1613, 0.0
        %1653 = vadd.xlane.f32.xlu0 %v1652
        %v1654 = vpop.xlane.xlu0 %1653
        %v1655 = vsel %vm1531, %v1615, 0.0
        %1656 = vadd.xlane.f32.xlu0 %v1655
        %v1657 = vpop.xlane.xlu0 %1656
        %v1658 = vsel %vm1531, %v1617, 0.0
        %1659 = vadd.xlane.f32.xlu0 %v1658
        %v1660 = vpop.xlane.xlu0 %1659
        %v1661 = vsel %vm1531, %v1619, 0.0
        %1662 = vadd.xlane.f32.xlu0 %v1661
        %v1663 = vpop.xlane.xlu0 %1662
        %v1664 = vsel %vm1531, %v1621, 0.0
        %1665 = vadd.xlane.f32.xlu0 %v1664
        %v1666 = vpop.xlane.xlu0 %1665
        %v1667 = vsel %vm1531, %v1623, 0.0
        %1668 = vadd.xlane.f32.xlu0 %v1667
        %v1669 = vpop.xlane.xlu0 %1668
        %v1670 = vsel %vm1531, %v1625, 0.0
        %1671 = vadd.xlane.f32.xlu0 %v1670
        %v1672 = vpop.xlane.xlu0 %1671
        %v1673 = vsel %vm1531, %v1627, 0.0
        %1674 = vadd.xlane.f32.xlu0 %v1673
        %v1675 = vpop.xlane.xlu0 %1674
        %v1676 = vrcp.pop %v1630
        %v1677 = vrcp.pop %v1633
        %v1678 = vrcp.pop %v1636
        %v1679 = vrcp.pop %v1639
        %v1680 = vrcp.pop %v1642
        %v1681 = vrcp.pop %v1645
        %v1682 = vrcp.pop %v1648
        %v1683 = vrcp.pop %v1651
        %v1684 = vrcp.pop %v1654
        %v1685 = vrcp.pop %v1657
        %v1686 = vrcp.pop %v1660
        %v1687 = vrcp.pop %v1663
        %v1688 = vrcp.pop %v1666
        %v1689 = vrcp.pop %v1669
        %v1690 = vrcp.pop %v1672
        %v1691 = vrcp.pop %v1675
        %v1692 = vmul.f32 %v1597, %v1676
        %v1693 = vmul.f32 %v1599, %v1677
        %v1694 = vmul.f32 %v1601, %v1678
        %v1695 = vmul.f32 %v1603, %v1679
        %v1696 = vmul.f32 %v1605, %v1680
        %v1697 = vmul.f32 %v1607, %v1681
        %v1698 = vmul.f32 %v1609, %v1682
        %v1699 = vmul.f32 %v1611, %v1683
        %v1700 = vmul.f32 %v1613, %v1684
        %v1701 = vmul.f32 %v1615, %v1685
        %v1702 = vmul.f32 %v1617, %v1686
        %v1703 = vmul.f32 %v1619, %v1687
        %v1704 = vmul.f32 %v1621, %v1688
        %v1705 = vmul.f32 %v1623, %v1689
        %v1706 = vmul.f32 %v1625, %v1690
        %v1707 = vmul.f32 %v1627, %v1691
        %v1708 = vpack.c.bf16 %v1692, %v1692
        %v1709 = vpack.c.bf16 %v1693, %v1693
        %v1710 = vpack.c.bf16 %v1694, %v1694
        %v1711 = vpack.c.bf16 %v1695, %v1695
        %v1712 = vpack.c.bf16 %v1696, %v1696
        %v1713 = vpack.c.bf16 %v1697, %v1697
        %v1714 = vpack.c.bf16 %v1698, %v1698
        %v1715 = vpack.c.bf16 %v1699, %v1699
        %v1716 = vpack.c.bf16 %v1700, %v1700
        %v1717 = vpack.c.bf16 %v1701, %v1701
        %v1718 = vpack.c.bf16 %v1702, %v1702
        %v1719 = vpack.c.bf16 %v1703, %v1703
        %v1720 = vpack.c.bf16 %v1704, %v1704
        %v1721 = vpack.c.bf16 %v1705, %v1705
        %v1722 = vpack.c.bf16 %v1706, %v1706
        %v1723 = vpack.c.bf16 %v1707, %v1707
        %v1725 = vsel %vm1531, %v1708, 0
        %vm1727 = vcmask 1043456
        %v1729 = vsel %vm1727, %v778, 0
        %1731 = vmatprep.subr.bf16.mxu0 0
        %1732 = vmatpush1.bf16.msra.mxu0 %v1729
        %1733 = vmatprep.subr.bf16.mxu0 0
        %1734 = vmatpush1.bf16.msra.mxu0 0
        %1735 = vmatprep.subr.bf16.mxu0 0
        %1736 = vmatpush1.bf16.msra.mxu0 0
        %1737 = vmatprep.subr.bf16.mxu0 0
        %1738 = vmatpush1.bf16.msra.mxu0 0
        %1739 = vmatprep.subr.bf16.mxu0 0
        %1740 = vmatpush1.bf16.msra.mxu0 0
        %1741 = vmatprep.subr.bf16.mxu0 0
        %1742 = vmatpush1.bf16.msra.mxu0 0
        %1743 = vmatprep.subr.bf16.mxu0 0
        %1744 = vmatpush1.bf16.msra.mxu0 0
        %1745 = vmatprep.subr.bf16.mxu0 0
        %1746 = vmatpush1.bf16.msra.mxu0 0
        %1747 = vmatprep.subr.bf16.mxu0 0
        %1748 = vmatpush1.bf16.msra.mxu0 0
        %1749 = vmatprep.subr.bf16.mxu0 0
        %1750 = vmatpush1.bf16.msra.mxu0 0
        %1751 = vmatprep.subr.bf16.mxu0 0
        %1752 = vmatpush1.bf16.msra.mxu0 0
        %1753 = vmatprep.subr.bf16.mxu0 0
        %1754 = vmatpush1.bf16.msra.mxu0 0
        %1755 = vmatprep.subr.bf16.mxu0 0
        %1756 = vmatpush1.bf16.msra.mxu0 0
        %1757 = vmatprep.subr.bf16.mxu0 0
        %1758 = vmatpush1.bf16.msra.mxu0 0
        %1759 = vmatprep.subr.bf16.mxu0 0
        %1760 = vmatpush1.bf16.msra.mxu0 0
        %1761 = vmatprep.subr.bf16.mxu0 0
        %1762 = vmatpush1.bf16.msra.mxu0 0
        %1763 = vmatprep.mubr.bf16.mxu0 0
        %1764 = vmatmul.mubr.bf16.gmra.mrb[0].mxu0 %v1725
        %v1765 = vpop.f32.mrb[0].mxu0
        %v1766 = vadd.f32 0.0, %v1765
        %v1767 = vpop.f32.mrb[0].mxu0
        %v1768 = vpop.f32.mrb[0].mxu0
        %v1769 = vpop.f32.mrb[0].mxu0
        %1770 = vdwg.mxu0
        %v1772 = vsel %vm1531, %v1709, 0
        %v1775 = vsel %vm1727, %v779, 0
        %1777 = vmatprep.subr.bf16.mxu0 0
        %1778 = vmatpush1.bf16.msra.mxu0 %v1775
        %1779 = vmatprep.subr.bf16.mxu0 0
        %1780 = vmatpush1.bf16.msra.mxu0 0
        %1781 = vmatprep.subr.bf16.mxu0 0
        %1782 = vmatpush1.bf16.msra.mxu0 0
        %1783 = vmatprep.subr.bf16.mxu0 0
        %1784 = vmatpush1.bf16.msra.mxu0 0
        %1785 = vmatprep.subr.bf16.mxu0 0
        %1786 = vmatpush1.bf16.msra.mxu0 0
        %1787 = vmatprep.subr.bf16.mxu0 0
        %1788 = vmatpush1.bf16.msra.mxu0 0
        %1789 = vmatprep.subr.bf16.mxu0 0
        %1790 = vmatpush1.bf16.msra.mxu0 0
        %1791 = vmatprep.subr.bf16.mxu0 0
        %1792 = vmatpush1.bf16.msra.mxu0 0
        %1793 = vmatprep.subr.bf16.mxu0 0
        %1794 = vmatpush1.bf16.msra.mxu0 0
        %1795 = vmatprep.subr.bf16.mxu0 0
        %1796 = vmatpush1.bf16.msra.mxu0 0
        %1797 = vmatprep.subr.bf16.mxu0 0
        %1798 = vmatpush1.bf16.msra.mxu0 0
        %1799 = vmatprep.subr.bf16.mxu0 0
        %1800 = vmatpush1.bf16.msra.mxu0 0
        %1801 = vmatprep.subr.bf16.mxu0 0
        %1802 = vmatpush1.bf16.msra.mxu0 0
        %1803 = vmatprep.subr.bf16.mxu0 0
        %1804 = vmatpush1.bf16.msra.mxu0 0
        %1805 = vmatprep.subr.bf16.mxu0 0
        %1806 = vmatpush1.bf16.msra.mxu0 0
        %1807 = vmatprep.subr.bf16.mxu0 0
        %1808 = vmatpush1.bf16.msra.mxu0 0
        %1809 = vmatprep.mubr.bf16.mxu0 0
        %1810 = vmatmul.mubr.bf16.gmra.mrb[0].mxu0 %v1772
        %v1811 = vpop.f32.mrb[0].mxu0
        %v1812 = vadd.f32 0.0, %v1811
        %v1813 = vpop.f32.mrb[0].mxu0
        %v1814 = vpop.f32.mrb[0].mxu0
        %v1815 = vpop.f32.mrb[0].mxu0
        %1816 = vdwg.mxu0
        %v1818 = vsel %vm1531, %v1710, 0
        %v1821 = vsel %vm1727, %v780, 0
        %1823 = vmatprep.subr.bf16.mxu0 0
        %1824 = vmatpush1.bf16.msra.mxu0 %v1821
        %1825 = vmatprep.subr.bf16.mxu0 0
        %1826 = vmatpush1.bf16.msra.mxu0 0
        %1827 = vmatprep.subr.bf16.mxu0 0
        %1828 = vmatpush1.bf16.msra.mxu0 0
        %1829 = vmatprep.subr.bf16.mxu0 0
        %1830 = vmatpush1.bf16.msra.mxu0 0
        %1831 = vmatprep.subr.bf16.mxu0 0
        %1832 = vmatpush1.bf16.msra.mxu0 0
        %1833 = vmatprep.subr.bf16.mxu0 0
        %1834 = vmatpush1.bf16.msra.mxu0 0
        %1835 = vmatprep.subr.bf16.mxu0 0
        %1836 = vmatpush1.bf16.msra.mxu0 0
        %1837 = vmatprep.subr.bf16.mxu0 0
        %1838 = vmatpush1.bf16.msra.mxu0 0
        %1839 = vmatprep.subr.bf16.mxu0 0
        %1840 = vmatpush1.bf16.msra.mxu0 0
        %1841 = vmatprep.subr.bf16.mxu0 0
        %1842 = vmatpush1.bf16.msra.mxu0 0
        %1843 = vmatprep.subr.bf16.mxu0 0
        %1844 = vmatpush1.bf16.msra.mxu0 0
        %1845 = vmatprep.subr.bf16.mxu0 0
        %1846 = vmatpush1.bf16.msra.mxu0 0
        %1847 = vmatprep.subr.bf16.mxu0 0
        %1848 = vmatpush1.bf16.msra.mxu0 0
        %1849 = vmatprep.subr.bf16.mxu0 0
        %1850 = vmatpush1.bf16.msra.mxu0 0
        %1851 = vmatprep.subr.bf16.mxu0 0
        %1852 = vmatpush1.bf16.msra.mxu0 0
        %1853 = vmatprep.subr.bf16.mxu0 0
        %1854 = vmatpush1.bf16.msra.mxu0 0
        %1855 = vmatprep.mubr.bf16.mxu0 0
        %1856 = vmatmul.mubr.bf16.gmra.mrb[0].mxu0 %v1818
        %v1857 = vpop.f32.mrb[0].mxu0
        %v1858 = vadd.f32 0.0, %v1857
        %v1859 = vpop.f32.mrb[0].mxu0
        %v1860 = vpop.f32.mrb[0].mxu0
        %v1861 = vpop.f32.mrb[0].mxu0
        %1862 = vdwg.mxu0
        %v1864 = vsel %vm1531, %v1711, 0
        %v1867 = vsel %vm1727, %v781, 0
        %1869 = vmatprep.subr.bf16.mxu0 0
        %1870 = vmatpush1.bf16.msra.mxu0 %v1867
        %1871 = vmatprep.subr.bf16.mxu0 0
        %1872 = vmatpush1.bf16.msra.mxu0 0
        %1873 = vmatprep.subr.bf16.mxu0 0
        %1874 = vmatpush1.bf16.msra.mxu0 0
        %1875 = vmatprep.subr.bf16.mxu0 0
        %1876 = vmatpush1.bf16.msra.mxu0 0
        %1877 = vmatprep.subr.bf16.mxu0 0
        %1878 = vmatpush1.bf16.msra.mxu0 0
        %1879 = vmatprep.subr.bf16.mxu0 0
        %1880 = vmatpush1.bf16.msra.mxu0 0
        %1881 = vmatprep.subr.bf16.mxu0 0
        %1882 = vmatpush1.bf16.msra.mxu0 0
        %1883 = vmatprep.subr.bf16.mxu0 0
        %1884 = vmatpush1.bf16.msra.mxu0 0
        %1885 = vmatprep.subr.bf16.mxu0 0
        %1886 = vmatpush1.bf16.msra.mxu0 0
        %1887 = vmatprep.subr.bf16.mxu0 0
        %1888 = vmatpush1.bf16.msra.mxu0 0
        %1889 = vmatprep.subr.bf16.mxu0 0
        %1890 = vmatpush1.bf16.msra.mxu0 0
        %1891 = vmatprep.subr.bf16.mxu0 0
        %1892 = vmatpush1.bf16.msra.mxu0 0
        %1893 = vmatprep.subr.bf16.mxu0 0
        %1894 = vmatpush1.bf16.msra.mxu0 0
        %1895 = vmatprep.subr.bf16.mxu0 0
        %1896 = vmatpush1.bf16.msra.mxu0 0
        %1897 = vmatprep.subr.bf16.mxu0 0
        %1898 = vmatpush1.bf16.msra.mxu0 0
        %1899 = vmatprep.subr.bf16.mxu0 0
        %1900 = vmatpush1.bf16.msra.mxu0 0
        %1901 = vmatprep.mubr.bf16.mxu0 0
        %1902 = vmatmul.mubr.bf16.gmra.mrb[0].mxu0 %v1864
        %v1903 = vpop.f32.mrb[0].mxu0
        %v1904 = vadd.f32 0.0, %v1903
        %v1905 = vpop.f32.mrb[0].mxu0
        %v1906 = vpop.f32.mrb[0].mxu0
        %v1907 = vpop.f32.mrb[0].mxu0
        %1908 = vdwg.mxu0
        %v1910 = vsel %vm1531, %v1712, 0
        %v1913 = vsel %vm1727, %v782, 0
        %1915 = vmatprep.subr.bf16.mxu0 0
        %1916 = vmatpush1.bf16.msra.mxu0 %v1913
        %1917 = vmatprep.subr.bf16.mxu0 0
        %1918 = vmatpush1.bf16.msra.mxu0 0
        %1919 = vmatprep.subr.bf16.mxu0 0
        %1920 = vmatpush1.bf16.msra.mxu0 0
        %1921 = vmatprep.subr.bf16.mxu0 0
        %1922 = vmatpush1.bf16.msra.mxu0 0
        %1923 = vmatprep.subr.bf16.mxu0 0
        %1924 = vmatpush1.bf16.msra.mxu0 0
        %1925 = vmatprep.subr.bf16.mxu0 0
        %1926 = vmatpush1.bf16.msra.mxu0 0
        %1927 = vmatprep.subr.bf16.mxu0 0
        %1928 = vmatpush1.bf16.msra.mxu0 0
        %1929 = vmatprep.subr.bf16.mxu0 0
        %1930 = vmatpush1.bf16.msra.mxu0 0
        %1931 = vmatprep.subr.bf16.mxu0 0
        %1932 = vmatpush1.bf16.msra.mxu0 0
        %1933 = vmatprep.subr.bf16.mxu0 0
        %1934 = vmatpush1.bf16.msra.mxu0 0
        %1935 = vmatprep.subr.bf16.mxu0 0
        %1936 = vmatpush1.bf16.msra.mxu0 0
        %1937 = vmatprep.subr.bf16.mxu0 0
        %1938 = vmatpush1.bf16.msra.mxu0 0
        %1939 = vmatprep.subr.bf16.mxu0 0
        %1940 = vmatpush1.bf16.msra.mxu0 0
        %1941 = vmatprep.subr.bf16.mxu0 0
        %1942 = vmatpush1.bf16.msra.mxu0 0
        %1943 = vmatprep.subr.bf16.mxu0 0
        %1944 = vmatpush1.bf16.msra.mxu0 0
        %1945 = vmatprep.subr.bf16.mxu0 0
        %1946 = vmatpush1.bf16.msra.mxu0 0
        %1947 = vmatprep.mubr.bf16.mxu0 0
        %1948 = vmatmul.mubr.bf16.gmra.mrb[0].mxu0 %v1910
        %v1949 = vpop.f32.mrb[0].mxu0
        %v1950 = vadd.f32 0.0, %v1949
        %v1951 = vpop.f32.mrb[0].mxu0
        %v1952 = vpop.f32.mrb[0].mxu0
        %v1953 = vpop.f32.mrb[0].mxu0
        %1954 = vdwg.mxu0
        %v1956 = vsel %vm1531, %v1713, 0
        %v1959 = vsel %vm1727, %v783, 0
        %1961 = vmatprep.subr.bf16.mxu0 0
        %1962 = vmatpush1.bf16.msra.mxu0 %v1959
        %1963 = vmatprep.subr.bf16.mxu0 0
        %1964 = vmatpush1.bf16.msra.mxu0 0
        %1965 = vmatprep.subr.bf16.mxu0 0
        %1966 = vmatpush1.bf16.msra.mxu0 0
        %1967 = vmatprep.subr.bf16.mxu0 0
        %1968 = vmatpush1.bf16.msra.mxu0 0
        %1969 = vmatprep.subr.bf16.mxu0 0
        %1970 = vmatpush1.bf16.msra.mxu0 0
        %1971 = vmatprep.subr.bf16.mxu0 0
        %1972 = vmatpush1.bf16.msra.mxu0 0
        %1973 = vmatprep.subr.bf16.mxu0 0
        %1974 = vmatpush1.bf16.msra.mxu0 0
        %1975 = vmatprep.subr.bf16.mxu0 0
        %1976 = vmatpush1.bf16.msra.mxu0 0
        %1977 = vmatprep.subr.bf16.mxu0 0
        %1978 = vmatpush1.bf16.msra.mxu0 0
        %1979 = vmatprep.subr.bf16.mxu0 0
        %1980 = vmatpush1.bf16.msra.mxu0 0
        %1981 = vmatprep.subr.bf16.mxu0 0
        %1982 = vmatpush1.bf16.msra.mxu0 0
        %1983 = vmatprep.subr.bf16.mxu0 0
        %1984 = vmatpush1.bf16.msra.mxu0 0
        %1985 = vmatprep.subr.bf16.mxu0 0
        %1986 = vmatpush1.bf16.msra.mxu0 0
        %1987 = vmatprep.subr.bf16.mxu0 0
        %1988 = vmatpush1.bf16.msra.mxu0 0
        %1989 = vmatprep.subr.bf16.mxu0 0
        %1990 = vmatpush1.bf16.msra.mxu0 0
        %1991 = vmatprep.subr.bf16.mxu0 0
        %1992 = vmatpush1.bf16.msra.mxu0 0
        %1993 = vmatprep.mubr.bf16.mxu0 0
        %1994 = vmatmul.mubr.bf16.gmra.mrb[0].mxu0 %v1956
        %v1995 = vpop.f32.mrb[0].mxu0
        %v1996 = vadd.f32 0.0, %v1995
        %v1997 = vpop.f32.mrb[0].mxu0
        %v1998 = vpop.f32.mrb[0].mxu0
        %v1999 = vpop.f32.mrb[0].mxu0
        %2000 = vdwg.mxu0
        %v2002 = vsel %vm1531, %v1714, 0
        %v2005 = vsel %vm1727, %v784, 0
        %2007 = vmatprep.subr.bf16.mxu0 0
        %2008 = vmatpush1.bf16.msra.mxu0 %v2005
        %2009 = vmatprep.subr.bf16.mxu0 0
        %2010 = vmatpush1.bf16.msra.mxu0 0
        %2011 = vmatprep.subr.bf16.mxu0 0
        %2012 = vmatpush1.bf16.msra.mxu0 0
        %2013 = vmatprep.subr.bf16.mxu0 0
        %2014 = vmatpush1.bf16.msra.mxu0 0
        %2015 = vmatprep.subr.bf16.mxu0 0
        %2016 = vmatpush1.bf16.msra.mxu0 0
        %2017 = vmatprep.subr.bf16.mxu0 0
        %2018 = vmatpush1.bf16.msra.mxu0 0
        %2019 = vmatprep.subr.bf16.mxu0 0
        %2020 = vmatpush1.bf16.msra.mxu0 0
        %2021 = vmatprep.subr.bf16.mxu0 0
        %2022 = vmatpush1.bf16.msra.mxu0 0
        %2023 = vmatprep.subr.bf16.mxu0 0
        %2024 = vmatpush1.bf16.msra.mxu0 0
        %2025 = vmatprep.subr.bf16.mxu0 0
        %2026 = vmatpush1.bf16.msra.mxu0 0
        %2027 = vmatprep.subr.bf16.mxu0 0
        %2028 = vmatpush1.bf16.msra.mxu0 0
        %2029 = vmatprep.subr.bf16.mxu0 0
        %2030 = vmatpush1.bf16.msra.mxu0 0
        %2031 = vmatprep.subr.bf16.mxu0 0
        %2032 = vmatpush1.bf16.msra.mxu0 0
        %2033 = vmatprep.subr.bf16.mxu0 0
        %2034 = vmatpush1.bf16.msra.mxu0 0
        %2035 = vmatprep.subr.bf16.mxu0 0
        %2036 = vmatpush1.bf16.msra.mxu0 0
        %2037 = vmatprep.subr.bf16.mxu0 0
        %2038 = vmatpush1.bf16.msra.mxu0 0
        %2039 = vmatprep.mubr.bf16.mxu0 0
        %2040 = vmatmul.mubr.bf16.gmra.mrb[0].mxu0 %v2002
        %v2041 = vpop.f32.mrb[0].mxu0
        %v2042 = vadd.f32 0.0, %v2041
        %v2043 = vpop.f32.mrb[0].mxu0
        %v2044 = vpop.f32.mrb[0].mxu0
        %v2045 = vpop.f32.mrb[0].mxu0
        %2046 = vdwg.mxu0
        %v2048 = vsel %vm1531, %v1715, 0
        %v2051 = vsel %vm1727, %v785, 0
        %2053 = vmatprep.subr.bf16.mxu0 0
        %2054 = vmatpush1.bf16.msra.mxu0 %v2051
        %2055 = vmatprep.subr.bf16.mxu0 0
        %2056 = vmatpush1.bf16.msra.mxu0 0
        %2057 = vmatprep.subr.bf16.mxu0 0
        %2058 = vmatpush1.bf16.msra.mxu0 0
        %2059 = vmatprep.subr.bf16.mxu0 0
        %2060 = vmatpush1.bf16.msra.mxu0 0
        %2061 = vmatprep.subr.bf16.mxu0 0
        %2062 = vmatpush1.bf16.msra.mxu0 0
        %2063 = vmatprep.subr.bf16.mxu0 0
        %2064 = vmatpush1.bf16.msra.mxu0 0
        %2065 = vmatprep.subr.bf16.mxu0 0
        %2066 = vmatpush1.bf16.msra.mxu0 0
        %2067 = vmatprep.subr.bf16.mxu0 0
        %2068 = vmatpush1.bf16.msra.mxu0 0
        %2069 = vmatprep.subr.bf16.mxu0 0
        %2070 = vmatpush1.bf16.msra.mxu0 0
        %2071 = vmatprep.subr.bf16.mxu0 0
        %2072 = vmatpush1.bf16.msra.mxu0 0
        %2073 = vmatprep.subr.bf16.mxu0 0
        %2074 = vmatpush1.bf16.msra.mxu0 0
        %2075 = vmatprep.subr.bf16.mxu0 0
        %2076 = vmatpush1.bf16.msra.mxu0 0
        %2077 = vmatprep.subr.bf16.mxu0 0
        %2078 = vmatpush1.bf16.msra.mxu0 0
        %2079 = vmatprep.subr.bf16.mxu0 0
        %2080 = vmatpush1.bf16.msra.mxu0 0
        %2081 = vmatprep.subr.bf16.mxu0 0
        %2082 = vmatpush1.bf16.msra.mxu0 0
        %2083 = vmatprep.subr.bf16.mxu0 0
        %2084 = vmatpush1.bf16.msra.mxu0 0
        %2085 = vmatprep.mubr.bf16.mxu0 0
        %2086 = vmatmul.mubr.bf16.gmra.mrb[0].mxu0 %v2048
        %v2087 = vpop.f32.mrb[0].mxu0
        %v2088 = vadd.f32 0.0, %v2087
        %v2089 = vpop.f32.mrb[0].mxu0
        %v2090 = vpop.f32.mrb[0].mxu0
        %v2091 = vpop.f32.mrb[0].mxu0
        %2092 = vdwg.mxu0
        %v2094 = vsel %vm1531, %v1716, 0
        %v2097 = vsel %vm1727, %v786, 0
        %2099 = vmatprep.subr.bf16.mxu0 0
        %2100 = vmatpush1.bf16.msra.mxu0 %v2097
        %2101 = vmatprep.subr.bf16.mxu0 0
        %2102 = vmatpush1.bf16.msra.mxu0 0
        %2103 = vmatprep.subr.bf16.mxu0 0
        %2104 = vmatpush1.bf16.msra.mxu0 0
        %2105 = vmatprep.subr.bf16.mxu0 0
        %2106 = vmatpush1.bf16.msra.mxu0 0
        %2107 = vmatprep.subr.bf16.mxu0 0
        %2108 = vmatpush1.bf16.msra.mxu0 0
        %2109 = vmatprep.subr.bf16.mxu0 0
        %2110 = vmatpush1.bf16.msra.mxu0 0
        %2111 = vmatprep.subr.bf16.mxu0 0
        %2112 = vmatpush1.bf16.msra.mxu0 0
        %2113 = vmatprep.subr.bf16.mxu0 0
        %2114 = vmatpush1.bf16.msra.mxu0 0
        %2115 = vmatprep.subr.bf16.mxu0 0
        %2116 = vmatpush1.bf16.msra.mxu0 0
        %2117 = vmatprep.subr.bf16.mxu0 0
        %2118 = vmatpush1.bf16.msra.mxu0 0
        %2119 = vmatprep.subr.bf16.mxu0 0
        %2120 = vmatpush1.bf16.msra.mxu0 0
        %2121 = vmatprep.subr.bf16.mxu0 0
        %2122 = vmatpush1.bf16.msra.mxu0 0
        %2123 = vmatprep.subr.bf16.mxu0 0
        %2124 = vmatpush1.bf16.msra.mxu0 0
        %2125 = vmatprep.subr.bf16.mxu0 0
        %2126 = vmatpush1.bf16.msra.mxu0 0
        %2127 = vmatprep.subr.bf16.mxu0 0
        %2128 = vmatpush1.bf16.msra.mxu0 0
        %2129 = vmatprep.subr.bf16.mxu0 0
        %2130 = vmatpush1.bf16.msra.mxu0 0
        %2131 = vmatprep.mubr.bf16.mxu0 0
        %2132 = vmatmul.mubr.bf16.gmra.mrb[0].mxu0 %v2094
        %v2133 = vpop.f32.mrb[0].mxu0
        %v2134 = vadd.f32 0.0, %v2133
        %v2135 = vpop.f32.mrb[0].mxu0
        %v2136 = vpop.f32.mrb[0].mxu0
        %v2137 = vpop.f32.mrb[0].mxu0
        %2138 = vdwg.mxu0
        %v2140 = vsel %vm1531, %v1717, 0
        %v2143 = vsel %vm1727, %v787, 0
        %2145 = vmatprep.subr.bf16.mxu0 0
        %2146 = vmatpush1.bf16.msra.mxu0 %v2143
        %2147 = vmatprep.subr.bf16.mxu0 0
        %2148 = vmatpush1.bf16.msra.mxu0 0
        %2149 = vmatprep.subr.bf16.mxu0 0
        %2150 = vmatpush1.bf16.msra.mxu0 0
        %2151 = vmatprep.subr.bf16.mxu0 0
        %2152 = vmatpush1.bf16.msra.mxu0 0
        %2153 = vmatprep.subr.bf16.mxu0 0
        %2154 = vmatpush1.bf16.msra.mxu0 0
        %2155 = vmatprep.subr.bf16.mxu0 0
        %2156 = vmatpush1.bf16.msra.mxu0 0
        %2157 = vmatprep.subr.bf16.mxu0 0
        %2158 = vmatpush1.bf16.msra.mxu0 0
        %2159 = vmatprep.subr.bf16.mxu0 0
        %2160 = vmatpush1.bf16.msra.mxu0 0
        %2161 = vmatprep.subr.bf16.mxu0 0
        %2162 = vmatpush1.bf16.msra.mxu0 0
        %2163 = vmatprep.subr.bf16.mxu0 0
        %2164 = vmatpush1.bf16.msra.mxu0 0
        %2165 = vmatprep.subr.bf16.mxu0 0
        %2166 = vmatpush1.bf16.msra.mxu0 0
        %2167 = vmatprep.subr.bf16.mxu0 0
        %2168 = vmatpush1.bf16.msra.mxu0 0
        %2169 = vmatprep.subr.bf16.mxu0 0
        %2170 = vmatpush1.bf16.msra.mxu0 0
        %2171 = vmatprep.subr.bf16.mxu0 0
        %2172 = vmatpush1.bf16.msra.mxu0 0
        %2173 = vmatprep.subr.bf16.mxu0 0
        %2174 = vmatpush1.bf16.msra.mxu0 0
        %2175 = vmatprep.subr.bf16.mxu0 0
        %2176 = vmatpush1.bf16.msra.mxu0 0
        %2177 = vmatprep.mubr.bf16.mxu0 0
        %2178 = vmatmul.mubr.bf16.gmra.mrb[0].mxu0 %v2140
        %v2179 = vpop.f32.mrb[0].mxu0
        %v2180 = vadd.f32 0.0, %v2179
        %v2181 = vpop.f32.mrb[0].mxu0
        %v2182 = vpop.f32.mrb[0].mxu0
        %v2183 = vpop.f32.mrb[0].mxu0
        %2184 = vdwg.mxu0
        %v2186 = vsel %vm1531, %v1718, 0
        %v2189 = vsel %vm1727, %v788, 0
        %2191 = vmatprep.subr.bf16.mxu0 0
        %2192 = vmatpush1.bf16.msra.mxu0 %v2189
        %2193 = vmatprep.subr.bf16.mxu0 0
        %2194 = vmatpush1.bf16.msra.mxu0 0
        %2195 = vmatprep.subr.bf16.mxu0 0
        %2196 = vmatpush1.bf16.msra.mxu0 0
        %2197 = vmatprep.subr.bf16.mxu0 0
        %2198 = vmatpush1.bf16.msra.mxu0 0
        %2199 = vmatprep.subr.bf16.mxu0 0
        %2200 = vmatpush1.bf16.msra.mxu0 0
        %2201 = vmatprep.subr.bf16.mxu0 0
        %2202 = vmatpush1.bf16.msra.mxu0 0
        %2203 = vmatprep.subr.bf16.mxu0 0
        %2204 = vmatpush1.bf16.msra.mxu0 0
        %2205 = vmatprep.subr.bf16.mxu0 0
        %2206 = vmatpush1.bf16.msra.mxu0 0
        %2207 = vmatprep.subr.bf16.mxu0 0
        %2208 = vmatpush1.bf16.msra.mxu0 0
        %2209 = vmatprep.subr.bf16.mxu0 0
        %2210 = vmatpush1.bf16.msra.mxu0 0
        %2211 = vmatprep.subr.bf16.mxu0 0
        %2212 = vmatpush1.bf16.msra.mxu0 0
        %2213 = vmatprep.subr.bf16.mxu0 0
        %2214 = vmatpush1.bf16.msra.mxu0 0
        %2215 = vmatprep.subr.bf16.mxu0 0
        %2216 = vmatpush1.bf16.msra.mxu0 0
        %2217 = vmatprep.subr.bf16.mxu0 0
        %2218 = vmatpush1.bf16.msra.mxu0 0
        %2219 = vmatprep.subr.bf16.mxu0 0
        %2220 = vmatpush1.bf16.msra.mxu0 0
        %2221 = vmatprep.subr.bf16.mxu0 0
        %2222 = vmatpush1.bf16.msra.mxu0 0
        %2223 = vmatprep.mubr.bf16.mxu0 0
        %2224 = vmatmul.mubr.bf16.gmra.mrb[0].mxu0 %v2186
        %v2225 = vpop.f32.mrb[0].mxu0
        %v2226 = vadd.f32 0.0, %v2225
        %v2227 = vpop.f32.mrb[0].mxu0
        %v2228 = vpop.f32.mrb[0].mxu0
        %v2229 = vpop.f32.mrb[0].mxu0
        %2230 = vdwg.mxu0
        %v2232 = vsel %vm1531, %v1719, 0
        %v2235 = vsel %vm1727, %v789, 0
        %2237 = vmatprep.subr.bf16.mxu0 0
        %2238 = vmatpush1.bf16.msra.mxu0 %v2235
        %2239 = vmatprep.subr.bf16.mxu0 0
        %2240 = vmatpush1.bf16.msra.mxu0 0
        %2241 = vmatprep.subr.bf16.mxu0 0
        %2242 = vmatpush1.bf16.msra.mxu0 0
        %2243 = vmatprep.subr.bf16.mxu0 0
        %2244 = vmatpush1.bf16.msra.mxu0 0
        %2245 = vmatprep.subr.bf16.mxu0 0
        %2246 = vmatpush1.bf16.msra.mxu0 0
        %2247 = vmatprep.subr.bf16.mxu0 0
        %2248 = vmatpush1.bf16.msra.mxu0 0
        %2249 = vmatprep.subr.bf16.mxu0 0
        %2250 = vmatpush1.bf16.msra.mxu0 0
        %2251 = vmatprep.subr.bf16.mxu0 0
        %2252 = vmatpush1.bf16.msra.mxu0 0
        %2253 = vmatprep.subr.bf16.mxu0 0
        %2254 = vmatpush1.bf16.msra.mxu0 0
        %2255 = vmatprep.subr.bf16.mxu0 0
        %2256 = vmatpush1.bf16.msra.mxu0 0
        %2257 = vmatprep.subr.bf16.mxu0 0
        %2258 = vmatpush1.bf16.msra.mxu0 0
        %2259 = vmatprep.subr.bf16.mxu0 0
        %2260 = vmatpush1.bf16.msra.mxu0 0
        %2261 = vmatprep.subr.bf16.mxu0 0
        %2262 = vmatpush1.bf16.msra.mxu0 0
        %2263 = vmatprep.subr.bf16.mxu0 0
        %2264 = vmatpush1.bf16.msra.mxu0 0
        %2265 = vmatprep.subr.bf16.mxu0 0
        %2266 = vmatpush1.bf16.msra.mxu0 0
        %2267 = vmatprep.subr.bf16.mxu0 0
        %2268 = vmatpush1.bf16.msra.mxu0 0
        %2269 = vmatprep.mubr.bf16.mxu0 0
        %2270 = vmatmul.mubr.bf16.gmra.mrb[0].mxu0 %v2232
        %v2271 = vpop.f32.mrb[0].mxu0
        %v2272 = vadd.f32 0.0, %v2271
        %v2273 = vpop.f32.mrb[0].mxu0
        %v2274 = vpop.f32.mrb[0].mxu0
        %v2275 = vpop.f32.mrb[0].mxu0
        %2276 = vdwg.mxu0
        %v2278 = vsel %vm1531, %v1720, 0
        %v2281 = vsel %vm1727, %v790, 0
        %2283 = vmatprep.subr.bf16.mxu0 0
        %2284 = vmatpush1.bf16.msra.mxu0 %v2281
        %2285 = vmatprep.subr.bf16.mxu0 0
        %2286 = vmatpush1.bf16.msra.mxu0 0
        %2287 = vmatprep.subr.bf16.mxu0 0
        %2288 = vmatpush1.bf16.msra.mxu0 0
        %2289 = vmatprep.subr.bf16.mxu0 0
        %2290 = vmatpush1.bf16.msra.mxu0 0
        %2291 = vmatprep.subr.bf16.mxu0 0
        %2292 = vmatpush1.bf16.msra.mxu0 0
        %2293 = vmatprep.subr.bf16.mxu0 0
        %2294 = vmatpush1.bf16.msra.mxu0 0
        %2295 = vmatprep.subr.bf16.mxu0 0
        %2296 = vmatpush1.bf16.msra.mxu0 0
        %2297 = vmatprep.subr.bf16.mxu0 0
        %2298 = vmatpush1.bf16.msra.mxu0 0
        %2299 = vmatprep.subr.bf16.mxu0 0
        %2300 = vmatpush1.bf16.msra.mxu0 0
        %2301 = vmatprep.subr.bf16.mxu0 0
        %2302 = vmatpush1.bf16.msra.mxu0 0
        %2303 = vmatprep.subr.bf16.mxu0 0
        %2304 = vmatpush1.bf16.msra.mxu0 0
        %2305 = vmatprep.subr.bf16.mxu0 0
        %2306 = vmatpush1.bf16.msra.mxu0 0
        %2307 = vmatprep.subr.bf16.mxu0 0
        %2308 = vmatpush1.bf16.msra.mxu0 0
        %2309 = vmatprep.subr.bf16.mxu0 0
        %2310 = vmatpush1.bf16.msra.mxu0 0
        %2311 = vmatprep.subr.bf16.mxu0 0
        %2312 = vmatpush1.bf16.msra.mxu0 0
        %2313 = vmatprep.subr.bf16.mxu0 0
        %2314 = vmatpush1.bf16.msra.mxu0 0
        %2315 = vmatprep.mubr.bf16.mxu0 0
        %2316 = vmatmul.mubr.bf16.gmra.mrb[0].mxu0 %v2278
        %v2317 = vpop.f32.mrb[0].mxu0
        %v2318 = vadd.f32 0.0, %v2317
        %v2319 = vpop.f32.mrb[0].mxu0
        %v2320 = vpop.f32.mrb[0].mxu0
        %v2321 = vpop.f32.mrb[0].mxu0
        %2322 = vdwg.mxu0
        %v2324 = vsel %vm1531, %v1721, 0
        %v2327 = vsel %vm1727, %v791, 0
        %2329 = vmatprep.subr.bf16.mxu0 0
        %2330 = vmatpush1.bf16.msra.mxu0 %v2327
        %2331 = vmatprep.subr.bf16.mxu0 0
        %2332 = vmatpush1.bf16.msra.mxu0 0
        %2333 = vmatprep.subr.bf16.mxu0 0
        %2334 = vmatpush1.bf16.msra.mxu0 0
        %2335 = vmatprep.subr.bf16.mxu0 0
        %2336 = vmatpush1.bf16.msra.mxu0 0
        %2337 = vmatprep.subr.bf16.mxu0 0
        %2338 = vmatpush1.bf16.msra.mxu0 0
        %2339 = vmatprep.subr.bf16.mxu0 0
        %2340 = vmatpush1.bf16.msra.mxu0 0
        %2341 = vmatprep.subr.bf16.mxu0 0
        %2342 = vmatpush1.bf16.msra.mxu0 0
        %2343 = vmatprep.subr.bf16.mxu0 0
        %2344 = vmatpush1.bf16.msra.mxu0 0
        %2345 = vmatprep.subr.bf16.mxu0 0
        %2346 = vmatpush1.bf16.msra.mxu0 0
        %2347 = vmatprep.subr.bf16.mxu0 0
        %2348 = vmatpush1.bf16.msra.mxu0 0
        %2349 = vmatprep.subr.bf16.mxu0 0
        %2350 = vmatpush1.bf16.msra.mxu0 0
        %2351 = vmatprep.subr.bf16.mxu0 0
        %2352 = vmatpush1.bf16.msra.mxu0 0
        %2353 = vmatprep.subr.bf16.mxu0 0
        %2354 = vmatpush1.bf16.msra.mxu0 0
        %2355 = vmatprep.subr.bf16.mxu0 0
        %2356 = vmatpush1.bf16.msra.mxu0 0
        %2357 = vmatprep.subr.bf16.mxu0 0
        %2358 = vmatpush1.bf16.msra.mxu0 0
        %2359 = vmatprep.subr.bf16.mxu0 0
        %2360 = vmatpush1.bf16.msra.mxu0 0
        %2361 = vmatprep.mubr.bf16.mxu0 0
        %2362 = vmatmul.mubr.bf16.gmra.mrb[0].mxu0 %v2324
        %v2363 = vpop.f32.mrb[0].mxu0
        %v2364 = vadd.f32 0.0, %v2363
        %v2365 = vpop.f32.mrb[0].mxu0
        %v2366 = vpop.f32.mrb[0].mxu0
        %v2367 = vpop.f32.mrb[0].mxu0
        %2368 = vdwg.mxu0
        %v2370 = vsel %vm1531, %v1722, 0
        %v2373 = vsel %vm1727, %v792, 0
        %2375 = vmatprep.subr.bf16.mxu0 0
        %2376 = vmatpush1.bf16.msra.mxu0 %v2373
        %2377 = vmatprep.subr.bf16.mxu0 0
        %2378 = vmatpush1.bf16.msra.mxu0 0
        %2379 = vmatprep.subr.bf16.mxu0 0
        %2380 = vmatpush1.bf16.msra.mxu0 0
        %2381 = vmatprep.subr.bf16.mxu0 0
        %2382 = vmatpush1.bf16.msra.mxu0 0
        %2383 = vmatprep.subr.bf16.mxu0 0
        %2384 = vmatpush1.bf16.msra.mxu0 0
        %2385 = vmatprep.subr.bf16.mxu0 0
        %2386 = vmatpush1.bf16.msra.mxu0 0
        %2387 = vmatprep.subr.bf16.mxu0 0
        %2388 = vmatpush1.bf16.msra.mxu0 0
        %2389 = vmatprep.subr.bf16.mxu0 0
        %2390 = vmatpush1.bf16.msra.mxu0 0
        %2391 = vmatprep.subr.bf16.mxu0 0
        %2392 = vmatpush1.bf16.msra.mxu0 0
        %2393 = vmatprep.subr.bf16.mxu0 0
        %2394 = vmatpush1.bf16.msra.mxu0 0
        %2395 = vmatprep.subr.bf16.mxu0 0
        %2396 = vmatpush1.bf16.msra.mxu0 0
        %2397 = vmatprep.subr.bf16.mxu0 0
        %2398 = vmatpush1.bf16.msra.mxu0 0
        %2399 = vmatprep.subr.bf16.mxu0 0
        %2400 = vmatpush1.bf16.msra.mxu0 0
        %2401 = vmatprep.subr.bf16.mxu0 0
        %2402 = vmatpush1.bf16.msra.mxu0 0
        %2403 = vmatprep.subr.bf16.mxu0 0
        %2404 = vmatpush1.bf16.msra.mxu0 0
        %2405 = vmatprep.subr.bf16.mxu0 0
        %2406 = vmatpush1.bf16.msra.mxu0 0
        %2407 = vmatprep.mubr.bf16.mxu0 0
        %2408 = vmatmul.mubr.bf16.gmra.mrb[0].mxu0 %v2370
        %v2409 = vpop.f32.mrb[0].mxu0
        %v2410 = vadd.f32 0.0, %v2409
        %v2411 = vpop.f32.mrb[0].mxu0
        %v2412 = vpop.f32.mrb[0].mxu0
        %v2413 = vpop.f32.mrb[0].mxu0
        %2414 = vdwg.mxu0
        %v2416 = vsel %vm1531, %v1723, 0
        %v2419 = vsel %vm1727, %v793, 0
        %2421 = vmatprep.subr.bf16.mxu0 0
        %2422 = vmatpush1.bf16.msra.mxu0 %v2419
        %2423 = vmatprep.subr.bf16.mxu0 0
        %2424 = vmatpush1.bf16.msra.mxu0 0
        %2425 = vmatprep.subr.bf16.mxu0 0
        %2426 = vmatpush1.bf16.msra.mxu0 0
        %2427 = vmatprep.subr.bf16.mxu0 0
        %2428 = vmatpush1.bf16.msra.mxu0 0
        %2429 = vmatprep.subr.bf16.mxu0 0
        %2430 = vmatpush1.bf16.msra.mxu0 0
        %2431 = vmatprep.subr.bf16.mxu0 0
        %2432 = vmatpush1.bf16.msra.mxu0 0
        %2433 = vmatprep.subr.bf16.mxu0 0
        %2434 = vmatpush1.bf16.msra.mxu0 0
        %2435 = vmatprep.subr.bf16.mxu0 0
        %2436 = vmatpush1.bf16.msra.mxu0 0
        %2437 = vmatprep.subr.bf16.mxu0 0
        %2438 = vmatpush1.bf16.msra.mxu0 0
        %2439 = vmatprep.subr.bf16.mxu0 0
        %2440 = vmatpush1.bf16.msra.mxu0 0
        %2441 = vmatprep.subr.bf16.mxu0 0
        %2442 = vmatpush1.bf16.msra.mxu0 0
        %2443 = vmatprep.subr.bf16.mxu0 0
        %2444 = vmatpush1.bf16.msra.mxu0 0
        %2445 = vmatprep.subr.bf16.mxu0 0
        %2446 = vmatpush1.bf16.msra.mxu0 0
        %2447 = vmatprep.subr.bf16.mxu0 0
        %2448 = vmatpush1.bf16.msra.mxu0 0
        %2449 = vmatprep.subr.bf16.mxu0 0
        %2450 = vmatpush1.bf16.msra.mxu0 0
        %2451 = vmatprep.subr.bf16.mxu0 0
        %2452 = vmatpush1.bf16.msra.mxu0 0
        %2453 = vmatprep.mubr.bf16.mxu0 0
        %2454 = vmatmul.mubr.bf16.gmra.mrb[0].mxu0 %v2416
        %v2455 = vpop.f32.mrb[0].mxu0
        %v2456 = vadd.f32 0.0, %v2455
        %v2457 = vpop.f32.mrb[0].mxu0
        %v2458 = vpop.f32.mrb[0].mxu0
        %v2459 = vpop.f32.mrb[0].mxu0
        %2460 = vdwg.mxu0
        %v2461 = vpack.c.bf16 %v1766, %v1766
        %v2462 = vpack.c.bf16 %v1812, %v1812
        %v2463 = vpack.c.bf16 %v1858, %v1858
        %v2464 = vpack.c.bf16 %v1904, %v1904
        %v2465 = vpack.c.bf16 %v1950, %v1950
        %v2466 = vpack.c.bf16 %v1996, %v1996
        %v2467 = vpack.c.bf16 %v2042, %v2042
        %v2468 = vpack.c.bf16 %v2088, %v2088
        %v2469 = vpack.c.bf16 %v2134, %v2134
        %v2470 = vpack.c.bf16 %v2180, %v2180
        %v2471 = vpack.c.bf16 %v2226, %v2226
        %v2472 = vpack.c.bf16 %v2272, %v2272
        %v2473 = vpack.c.bf16 %v2318, %v2318
        %v2474 = vpack.c.bf16 %v2364, %v2364
        %v2475 = vpack.c.bf16 %v2410, %v2410
        %v2476 = vpack.c.bf16 %v2456, %v2456
        %v2479 = vunpack.c.l.b16 %v2461
        %v2480 = vunpack.c.l.b16 %v2462
        %v2481 = vpack.c.b16 %v2480, %v2479
        %v2484 = vunpack.c.l.b16 %v2463
        %v2485 = vunpack.c.l.b16 %v2464
        %v2486 = vpack.c.b16 %v2485, %v2484
        %2487 = vrot.lane.b32.xlu0 %v2486, 16
        %v2488 = vpop.permute.xlu0 %2487
        %v2491 = vunpack.c.l.b16 %v2465
        %v2492 = vunpack.c.l.b16 %v2466
        %v2493 = vpack.c.b16 %v2492, %v2491
        %2494 = vrot.lane.b32.xlu0 %v2493, 32
        %v2495 = vpop.permute.xlu0 %2494
        %v2498 = vunpack.c.l.b16 %v2467
        %v2499 = vunpack.c.l.b16 %v2468
        %v2500 = vpack.c.b16 %v2499, %v2498
        %2501 = vrot.lane.b32.xlu0 %v2500, 48
        %v2502 = vpop.permute.xlu0 %2501
        %v2505 = vunpack.c.l.b16 %v2469
        %v2506 = vunpack.c.l.b16 %v2470
        %v2507 = vpack.c.b16 %v2506, %v2505
        %2508 = vrot.lane.b32.xlu0 %v2507, 64
        %v2509 = vpop.permute.xlu0 %2508
        %v2512 = vunpack.c.l.b16 %v2471
        %v2513 = vunpack.c.l.b16 %v2472
        %v2514 = vpack.c.b16 %v2513, %v2512
        %2515 = vrot.lane.b32.xlu0 %v2514, 80
        %v2516 = vpop.permute.xlu0 %2515
        %v2519 = vunpack.c.l.b16 %v2473
        %v2520 = vunpack.c.l.b16 %v2474
        %v2521 = vpack.c.b16 %v2520, %v2519
        %2522 = vrot.lane.b32.xlu0 %v2521, 96
        %v2523 = vpop.permute.xlu0 %2522
        %v2526 = vunpack.c.l.b16 %v2475
        %v2527 = vunpack.c.l.b16 %v2476
        %v2528 = vpack.c.b16 %v2527, %v2526
        %2529 = vrot.lane.b32.xlu0 %v2528, 112
        %v2530 = vpop.permute.xlu0 %2529
        %v2533 = vsel %vm794, %v2481, %v2488
        %vm2534 = vcmask 261120
        %v2536 = vsel %vm2534, %v2533, %v2495
        %vm2537 = vcmask 392192
        %v2539 = vsel %vm2537, %v2536, %v2502
        %vm2540 = vcmask 523264
        %v2542 = vsel %vm2540, %v2539, %v2509
        %vm2543 = vcmask 654336
        %v2545 = vsel %vm2543, %v2542, %v2516
        %vm2546 = vcmask 785408
        %v2548 = vsel %vm2546, %v2545, %v2523
        %vm2549 = vcmask 916480
        %v2551 = vsel %vm2549, %v2548, %v2530
        %v2553 = vld [vmem:[#allocation7] sm:$0xf]
        %v2554 = vld [vmem:[#allocation7 + $0x4] sm:$0xf]
        %v2555 = vld [vmem:[#allocation7 + $0x8] sm:$0xf]
        %v2556 = vld [vmem:[#allocation7 + $0xc] sm:$0xf]
        %v2557 = vld [vmem:[#allocation7 + $0x10] sm:$0xf]
        %v2558 = vld [vmem:[#allocation7 + $0x14] sm:$0xf]
        %v2559 = vld [vmem:[#allocation7 + $0x18] sm:$0xf]
        %v2560 = vld [vmem:[#allocation7 + $0x1c] sm:$0xf]
        %v2561 = vld [vmem:[#allocation7 + $0x20] sm:$0xf]
        %v2562 = vld [vmem:[#allocation7 + $0x24] sm:$0xf]
        %v2563 = vld [vmem:[#allocation7 + $0x28] sm:$0xf]
        %v2564 = vld [vmem:[#allocation7 + $0x2c] sm:$0xf]
        %v2565 = vld [vmem:[#allocation7 + $0x30] sm:$0xf]
        %v2566 = vld [vmem:[#allocation7 + $0x34] sm:$0xf]
        %v2567 = vld [vmem:[#allocation7 + $0x38] sm:$0xf]
        %v2568 = vld [vmem:[#allocation7 + $0x3c] sm:$0xf]
        %v2569 = vlaneseq
        %v2570 = vshrl.u32 %v2569, 7
        %v2571 = vsub.s32 0, %v2570
        %v2572 = vrot.slane %v385, %v2571
        %v2589 = vunpack.c.l.b16 %v2553
        %v2590 = vunpack.c.l.b16 %v2554
        %v2591 = vunpack.c.l.b16 %v2555
        %v2592 = vunpack.c.l.b16 %v2556
        %v2593 = vunpack.c.l.b16 %v2557
        %v2594 = vunpack.c.l.b16 %v2558
        %v2595 = vunpack.c.l.b16 %v2559
        %v2596 = vunpack.c.l.b16 %v2560
        %v2597 = vunpack.c.l.b16 %v2561
        %v2598 = vunpack.c.l.b16 %v2562
        %v2599 = vunpack.c.l.b16 %v2563
        %v2600 = vunpack.c.l.b16 %v2564
        %v2601 = vunpack.c.l.b16 %v2565
        %v2602 = vunpack.c.l.b16 %v2566
        %v2603 = vunpack.c.l.b16 %v2567
        %v2604 = vunpack.c.l.b16 %v2568
        %v2605 = vpack.c.b16 %v2590, %v2589
        %v2606 = vpack.c.b16 %v2592, %v2591
        %v2607 = vpack.c.b16 %v2594, %v2593
        %v2608 = vpack.c.b16 %v2596, %v2595
        %v2609 = vpack.c.b16 %v2598, %v2597
        %v2610 = vpack.c.b16 %v2600, %v2599
        %v2611 = vpack.c.b16 %v2602, %v2601
        %v2612 = vpack.c.b16 %v2604, %v2603
        %2621 = vmatprep.subr.bf16.mxu0 0
        %2622 = vmatpush1.bf16.msra.mxu0 %v2605
        %2623 = vmatprep.subr.bf16.mxu0 0
        %2624 = vmatpush1.bf16.msra.mxu0 %v2606
        %2625 = vmatprep.subr.bf16.mxu0 0
        %2626 = vmatpush1.bf16.msra.mxu0 %v2607
        %2627 = vmatprep.subr.bf16.mxu0 0
        %2628 = vmatpush1.bf16.msra.mxu0 %v2608
        %2629 = vmatprep.subr.bf16.mxu0 0
        %2630 = vmatpush1.bf16.msra.mxu0 %v2609
        %2631 = vmatprep.subr.bf16.mxu0 0
        %2632 = vmatpush1.bf16.msra.mxu0 %v2610
        %2633 = vmatprep.subr.bf16.mxu0 0
        %2634 = vmatpush1.bf16.msra.mxu0 %v2611
        %2635 = vmatprep.subr.bf16.mxu0 0
        %2636 = vmatpush1.bf16.msra.mxu0 %v2612
        %2637 = vmatprep.subr.bf16.mxu0 0
        %2638 = vmatpush1.bf16.msra.mxu0 0
        %2639 = vmatprep.subr.bf16.mxu0 0
        %2640 = vmatpush1.bf16.msra.mxu0 0
        %2641 = vmatprep.subr.bf16.mxu0 0
        %2642 = vmatpush1.bf16.msra.mxu0 0
        %2643 = vmatprep.subr.bf16.mxu0 0
        %2644 = vmatpush1.bf16.msra.mxu0 0
        %2645 = vmatprep.subr.bf16.mxu0 0
        %2646 = vmatpush1.bf16.msra.mxu0 0
        %2647 = vmatprep.subr.bf16.mxu0 0
        %2648 = vmatpush1.bf16.msra.mxu0 0
        %2649 = vmatprep.subr.bf16.mxu0 0
        %2650 = vmatpush1.bf16.msra.mxu0 0
        %2651 = vmatprep.subr.bf16.mxu0 0
        %2652 = vmatpush1.bf16.msra.mxu0 0
        %2653 = vmatprep.mubr.bf16.mxu0 0
        %2654 = vmatmul.mubr.bf16.gmra.mrb[0].mxu0 %v2551
        %v2655 = vpop.f32.mrb[0].mxu0
        %v2656 = vadd.f32 %v2572, %v2655
        %v2657 = vpop.f32.mrb[0].mxu0
        %v2658 = vpop.f32.mrb[0].mxu0
        %v2659 = vadd.f32 %v2572, %v2658
        %v2660 = vpop.f32.mrb[0].mxu0
        %2661 = vdwg.mxu0
        %v2662 = vadd.f32 %v386, %v2656
        %v2663 = vadd.f32 %v387, %v2659
        %2664 = vadd.xlane.f32.xlu0 %v2662
        %v2665 = vpop.xlane.xlu0 %2664
        %2666 = vadd.xlane.f32.xlu0 %v2663
        %v2667 = vpop.xlane.xlu0 %2666
        %v2668 = vrcp.pop 128.0
        %v2669 = vmul.f32 %v2665, %v2668
        %v2670 = vmul.f32 %v2667, %v2668
        %v2671 = vsub.f32 %v2662, %v2669
        %v2672 = vsub.f32 %v2663, %v2670
        %v2673 = vmul.f32 %v2671, %v2671
        %v2674 = vmul.f32 %v2672, %v2672
        %2675 = vadd.xlane.f32.xlu0 %v2673
        %v2676 = vpop.xlane.xlu0 %2675
        %2677 = vadd.xlane.f32.xlu0 %v2674
        %v2678 = vpop.xlane.xlu0 %2677
        %v2679 = vmul.f32 %v2676, %v2668
        %v2680 = vmul.f32 %v2678, %v2668
        %v2681 = vadd.f32 %v2679, 1e-05
        %v2682 = vadd.f32 %v2680, 1e-05
        %v2683 = vrsqrt.pop %v2681
        %v2684 = vrsqrt.pop %v2682
        %v2685 = vmul.f32 %v2671, %v2683
        %v2686 = vmul.f32 %v2672, %v2684
        %v2687 = vlaneseq
        %v2688 = vshrl.u32 %v2687, 7
        %v2689 = vsub.s32 2, %v2688
        %v2690 = vrot.slane %v385, %v2689
        %v2691 = vmul.f32 %v2685, %v2690
        %v2692 = vmul.f32 %v2686, %v2690
        %v2693 = vlaneseq
        %v2694 = vshrl.u32 %v2693, 7
        %v2695 = vsub.s32 3, %v2694
        %v2696 = vrot.slane %v385, %v2695
        %v2697 = vadd.f32 %v2691, %v2696
        %v2698 = vadd.f32 %v2692, %v2696
        %v2699 = vpack.c.bf16 %v2698, %v2697
        %v2700 = vld [vmem:[#allocation8] sm:$0xff]
        %v2701 = vld [vmem:[#allocation8 + $0x8] sm:$0xff]
        %v2702 = vld [vmem:[#allocation8 + $0x10] sm:$0xff]
        %v2703 = vld [vmem:[#allocation8 + $0x18] sm:$0xff]
        %v2704 = vld [vmem:[#allocation8 + $0x20] sm:$0xff]
        %v2705 = vld [vmem:[#allocation8 + $0x28] sm:$0xff]
        %v2706 = vld [vmem:[#allocation8 + $0x30] sm:$0xff]
        %v2707 = vld [vmem:[#allocation8 + $0x38] sm:$0xff]
        %v2708 = vld [vmem:[#allocation8 + $0x40] sm:$0xff]
        %v2709 = vld [vmem:[#allocation8 + $0x48] sm:$0xff]
        %v2710 = vld [vmem:[#allocation8 + $0x50] sm:$0xff]
        %v2711 = vld [vmem:[#allocation8 + $0x58] sm:$0xff]
        %v2712 = vld [vmem:[#allocation8 + $0x60] sm:$0xff]
        %v2713 = vld [vmem:[#allocation8 + $0x68] sm:$0xff]
        %v2714 = vld [vmem:[#allocation8 + $0x70] sm:$0xff]
        %v2715 = vld [vmem:[#allocation8 + $0x78] sm:$0xff]
        %v2716 = vld [vmem:[%s5] sm:$0x3]
        %v2718 = vlaneseq
        %v2719 = vshrl.u32 %v2718, 7
        %v2720 = vsub.s32 0, %v2719
        %v2721 = vrot.slane %v2716, %v2720
        %v2722 = vlaneseq
        %v2723 = vshrl.u32 %v2722, 7
        %v2724 = vsub.s32 1, %v2723
        %v2725 = vrot.slane %v2716, %v2724
        %v2744 = vunpack.c.l.b16 %v2700
        %v2745 = vunpack.c.h.b16 %v2700
        %v2746 = vunpack.c.l.b16 %v2701
        %v2747 = vunpack.c.h.b16 %v2701
        %v2748 = vunpack.c.l.b16 %v2702
        %v2749 = vunpack.c.h.b16 %v2702
        %v2750 = vunpack.c.l.b16 %v2703
        %v2751 = vunpack.c.h.b16 %v2703
        %v2752 = vunpack.c.l.b16 %v2704
        %v2753 = vunpack.c.h.b16 %v2704
        %v2754 = vunpack.c.l.b16 %v2705
        %v2755 = vunpack.c.h.b16 %v2705
        %v2756 = vunpack.c.l.b16 %v2706
        %v2757 = vunpack.c.h.b16 %v2706
        %v2758 = vunpack.c.l.b16 %v2707
        %v2759 = vunpack.c.h.b16 %v2707
        %v2760 = vunpack.c.l.b16 %v2708
        %v2761 = vunpack.c.h.b16 %v2708
        %v2762 = vunpack.c.l.b16 %v2709
        %v2763 = vunpack.c.h.b16 %v2709
        %v2764 = vunpack.c.l.b16 %v2710
        %v2765 = vunpack.c.h.b16 %v2710
        %v2766 = vunpack.c.l.b16 %v2711
        %v2767 = vunpack.c.h.b16 %v2711
        %v2768 = vunpack.c.l.b16 %v2712
        %v2769 = vunpack.c.h.b16 %v2712
        %v2770 = vunpack.c.l.b16 %v2713
        %v2771 = vunpack.c.h.b16 %v2713
        %v2772 = vunpack.c.l.b16 %v2714
        %v2773 = vunpack.c.h.b16 %v2714
        %v2774 = vunpack.c.l.b16 %v2715
        %v2775 = vunpack.c.h.b16 %v2715
        %v2776 = vpack.c.b16 %v2746, %v2744
        %v2777 = vpack.c.b16 %v2747, %v2745
        %v2778 = vpack.c.b16 %v2750, %v2748
        %v2779 = vpack.c.b16 %v2751, %v2749
        %v2780 = vpack.c.b16 %v2754, %v2752
        %v2781 = vpack.c.b16 %v2755, %v2753
        %v2782 = vpack.c.b16 %v2758, %v2756
        %v2783 = vpack.c.b16 %v2759, %v2757
        %v2784 = vpack.c.b16 %v2762, %v2760
        %v2785 = vpack.c.b16 %v2763, %v2761
        %v2786 = vpack.c.b16 %v2766, %v2764
        %v2787 = vpack.c.b16 %v2767, %v2765
        %v2788 = vpack.c.b16 %v2770, %v2768
        %v2789 = vpack.c.b16 %v2771, %v2769
        %v2790 = vpack.c.b16 %v2774, %v2772
        %v2791 = vpack.c.b16 %v2775, %v2773
        %2808 = vmatprep.subr.bf16.mxu0 %v2777
        %2809 = vmatpush1.bf16.msra.mxu0 %v2776
        %2810 = vmatprep.subr.bf16.mxu0 %v2779
        %2811 = vmatpush1.bf16.msra.mxu0 %v2778
        %2812 = vmatprep.subr.bf16.mxu0 %v2781
        %2813 = vmatpush1.bf16.msra.mxu0 %v2780
        %2814 = vmatprep.subr.bf16.mxu0 %v2783
        %2815 = vmatpush1.bf16.msra.mxu0 %v2782
        %2816 = vmatprep.subr.bf16.mxu0 %v2785
        %2817 = vmatpush1.bf16.msra.mxu0 %v2784
        %2818 = vmatprep.subr.bf16.mxu0 %v2787
        %2819 = vmatpush1.bf16.msra.mxu0 %v2786
        %2820 = vmatprep.subr.bf16.mxu0 %v2789
        %2821 = vmatpush1.bf16.msra.mxu0 %v2788
        %2822 = vmatprep.subr.bf16.mxu0 %v2791
        %2823 = vmatpush1.bf16.msra.mxu0 %v2790
        %2824 = vmatprep.subr.bf16.mxu0 0
        %2825 = vmatpush1.bf16.msra.mxu0 0
        %2826 = vmatprep.subr.bf16.mxu0 0
        %2827 = vmatpush1.bf16.msra.mxu0 0
        %2828 = vmatprep.subr.bf16.mxu0 0
        %2829 = vmatpush1.bf16.msra.mxu0 0
        %2830 = vmatprep.subr.bf16.mxu0 0
        %2831 = vmatpush1.bf16.msra.mxu0 0
        %2832 = vmatprep.subr.bf16.mxu0 0
        %2833 = vmatpush1.bf16.msra.mxu0 0
        %2834 = vmatprep.subr.bf16.mxu0 0
        %2835 = vmatpush1.bf16.msra.mxu0 0
        %2836 = vmatprep.subr.bf16.mxu0 0
        %2837 = vmatpush1.bf16.msra.mxu0 0
        %2838 = vmatprep.subr.bf16.mxu0 0
        %2839 = vmatpush1.bf16.msra.mxu0 0
        %2840 = vmatprep.mubr.bf16.mxu0 0
        %2841 = vmatmul.mubr.bf16.gmra.mrb[0].mxu0 %v2699
        %v2842 = vpop.f32.mrb[0].mxu0
        %v2843 = vadd.f32 %v2721, %v2842
        %v2844 = vpop.f32.mrb[0].mxu0
        %v2845 = vadd.f32 %v2725, %v2844
        %v2846 = vpop.f32.mrb[0].mxu0
        %v2847 = vadd.f32 %v2721, %v2846
        %v2848 = vpop.f32.mrb[0].mxu0
        %v2849 = vadd.f32 %v2725, %v2848
        %2850 = vdwg.mxu0
        %v2851 = vmul.f32 %v2843, 0.5
        %v2852 = vmul.f32 %v2845, 0.5
        %v2853 = vmul.f32 %v2847, 0.5
        %v2854 = vmul.f32 %v2849, 0.5
        %v2855 = vmul.f32 %v2843, 0.70710677
        %v2856 = vmul.f32 %v2845, 0.70710677
        %v2857 = vmul.f32 %v2847, 0.70710677
        %v2858 = vmul.f32 %v2849, 0.70710677
        %v2859 = verf.f32.pop %v2855
        %v2860 = verf.f32.pop %v2856
        %v2861 = verf.f32.pop %v2857
        %v2862 = verf.f32.pop %v2858
        %v2863 = vadd.f32 %v2859, 1.0
        %v2864 = vadd.f32 %v2860, 1.0
        %v2865 = vadd.f32 %v2861, 1.0
        %v2866 = vadd.f32 %v2862, 1.0
        %v2867 = vmul.f32 %v2851, %v2863
        %v2868 = vmul.f32 %v2852, %v2864
        %v2869 = vmul.f32 %v2853, %v2865
        %v2870 = vmul.f32 %v2854, %v2866
        %v2871 = vpack.c.bf16 %v2869, %v2867
        %v2872 = vpack.c.bf16 %v2870, %v2868
        %v2873 = vld [vmem:[#allocation10] sm:$0xf]
        %v2874 = vld [vmem:[#allocation10 + $0x4] sm:$0xf]
        %v2875 = vld [vmem:[#allocation10 + $0x8] sm:$0xf]
        %v2876 = vld [vmem:[#allocation10 + $0xc] sm:$0xf]
        %v2877 = vld [vmem:[#allocation10 + $0x10] sm:$0xf]
        %v2878 = vld [vmem:[#allocation10 + $0x14] sm:$0xf]
        %v2879 = vld [vmem:[#allocation10 + $0x18] sm:$0xf]
        %v2880 = vld [vmem:[#allocation10 + $0x1c] sm:$0xf]
        %v2881 = vld [vmem:[#allocation10 + $0x20] sm:$0xf]
        %v2882 = vld [vmem:[#allocation10 + $0x24] sm:$0xf]
        %v2883 = vld [vmem:[#allocation10 + $0x28] sm:$0xf]
        %v2884 = vld [vmem:[#allocation10 + $0x2c] sm:$0xf]
        %v2885 = vld [vmem:[#allocation10 + $0x30] sm:$0xf]
        %v2886 = vld [vmem:[#allocation10 + $0x34] sm:$0xf]
        %v2887 = vld [vmem:[#allocation10 + $0x38] sm:$0xf]
        %v2888 = vld [vmem:[#allocation10 + $0x3c] sm:$0xf]
        %v2889 = vld [vmem:[#allocation10 + $0x40] sm:$0xf]
        %v2890 = vld [vmem:[#allocation10 + $0x44] sm:$0xf]
        %v2891 = vld [vmem:[#allocation10 + $0x48] sm:$0xf]
        %v2892 = vld [vmem:[#allocation10 + $0x4c] sm:$0xf]
        %v2893 = vld [vmem:[#allocation10 + $0x50] sm:$0xf]
        %v2894 = vld [vmem:[#allocation10 + $0x54] sm:$0xf]
        %v2895 = vld [vmem:[#allocation10 + $0x58] sm:$0xf]
        %v2896 = vld [vmem:[#allocation10 + $0x5c] sm:$0xf]
        %v2897 = vld [vmem:[#allocation10 + $0x60] sm:$0xf]
        %v2898 = vld [vmem:[#allocation10 + $0x64] sm:$0xf]
        %v2899 = vld [vmem:[#allocation10 + $0x68] sm:$0xf]
        %v2900 = vld [vmem:[#allocation10 + $0x6c] sm:$0xf]
        %v2901 = vld [vmem:[#allocation10 + $0x70] sm:$0xf]
        %v2902 = vld [vmem:[#allocation10 + $0x74] sm:$0xf]
        %v2903 = vld [vmem:[#allocation10 + $0x78] sm:$0xf]
        %v2904 = vld [vmem:[#allocation10 + $0x7c] sm:$0xf]
        %v2905 = vlaneseq
        %v2906 = vshrl.u32 %v2905, 7
        %v2907 = vsub.s32 1, %v2906
        %v2908 = vrot.slane %v385, %v2907
        %v2941 = vunpack.c.l.b16 %v2873
        %v2942 = vunpack.c.l.b16 %v2874
        %v2943 = vunpack.c.l.b16 %v2875
        %v2944 = vunpack.c.l.b16 %v2876
        %v2945 = vunpack.c.l.b16 %v2877
        %v2946 = vunpack.c.l.b16 %v2878
        %v2947 = vunpack.c.l.b16 %v2879
        %v2948 = vunpack.c.l.b16 %v2880
        %v2949 = vunpack.c.l.b16 %v2881
        %v2950 = vunpack.c.l.b16 %v2882
        %v2951 = vunpack.c.l.b16 %v2883
        %v2952 = vunpack.c.l.b16 %v2884
        %v2953 = vunpack.c.l.b16 %v2885
        %v2954 = vunpack.c.l.b16 %v2886
        %v2955 = vunpack.c.l.b16 %v2887
        %v2956 = vunpack.c.l.b16 %v2888
        %v2957 = vunpack.c.l.b16 %v2889
        %v2958 = vunpack.c.l.b16 %v2890
        %v2959 = vunpack.c.l.b16 %v2891
        %v2960 = vunpack.c.l.b16 %v2892
        %v2961 = vunpack.c.l.b16 %v2893
        %v2962 = vunpack.c.l.b16 %v2894
        %v2963 = vunpack.c.l.b16 %v2895
        %v2964 = vunpack.c.l.b16 %v2896
        %v2965 = vunpack.c.l.b16 %v2897
        %v2966 = vunpack.c.l.b16 %v2898
        %v2967 = vunpack.c.l.b16 %v2899
        %v2968 = vunpack.c.l.b16 %v2900
        %v2969 = vunpack.c.l.b16 %v2901
        %v2970 = vunpack.c.l.b16 %v2902
        %v2971 = vunpack.c.l.b16 %v2903
        %v2972 = vunpack.c.l.b16 %v2904
        %v2973 = vpack.c.b16 %v2942, %v2941
        %v2974 = vpack.c.b16 %v2944, %v2943
        %v2975 = vpack.c.b16 %v2946, %v2945
        %v2976 = vpack.c.b16 %v2948, %v2947
        %v2977 = vpack.c.b16 %v2950, %v2949
        %v2978 = vpack.c.b16 %v2952, %v2951
        %v2979 = vpack.c.b16 %v2954, %v2953
        %v2980 = vpack.c.b16 %v2956, %v2955
        %v2981 = vpack.c.b16 %v2958, %v2957
        %v2982 = vpack.c.b16 %v2960, %v2959
        %v2983 = vpack.c.b16 %v2962, %v2961
        %v2984 = vpack.c.b16 %v2964, %v2963
        %v2985 = vpack.c.b16 %v2966, %v2965
        %v2986 = vpack.c.b16 %v2968, %v2967
        %v2987 = vpack.c.b16 %v2970, %v2969
        %v2988 = vpack.c.b16 %v2972, %v2971
        %3005 = vmatprep.subr.bf16.mxu0 0
        %3006 = vmatpush1.bf16.msra.mxu0 %v2973
        %3007 = vmatprep.subr.bf16.mxu0 0
        %3008 = vmatpush1.bf16.msra.mxu0 %v2974
        %3009 = vmatprep.subr.bf16.mxu0 0
        %3010 = vmatpush1.bf16.msra.mxu0 %v2975
        %3011 = vmatprep.subr.bf16.mxu0 0
        %3012 = vmatpush1.bf16.msra.mxu0 %v2976
        %3013 = vmatprep.subr.bf16.mxu0 0
        %3014 = vmatpush1.bf16.msra.mxu0 %v2977
        %3015 = vmatprep.subr.bf16.mxu0 0
        %3016 = vmatpush1.bf16.msra.mxu0 %v2978
        %3017 = vmatprep.subr.bf16.mxu0 0
        %3018 = vmatpush1.bf16.msra.mxu0 %v2979
        %3019 = vmatprep.subr.bf16.mxu0 0
        %3020 = vmatpush1.bf16.msra.mxu0 %v2980
        %3021 = vmatprep.subr.bf16.mxu0 0
        %3022 = vmatpush1.bf16.msra.mxu0 %v2981
        %3023 = vmatprep.subr.bf16.mxu0 0
        %3024 = vmatpush1.bf16.msra.mxu0 %v2982
        %3025 = vmatprep.subr.bf16.mxu0 0
        %3026 = vmatpush1.bf16.msra.mxu0 %v2983
        %3027 = vmatprep.subr.bf16.mxu0 0
        %3028 = vmatpush1.bf16.msra.mxu0 %v2984
        %3029 = vmatprep.subr.bf16.mxu0 0
        %3030 = vmatpush1.bf16.msra.mxu0 %v2985
        %3031 = vmatprep.subr.bf16.mxu0 0
        %3032 = vmatpush1.bf16.msra.mxu0 %v2986
        %3033 = vmatprep.subr.bf16.mxu0 0
        %3034 = vmatpush1.bf16.msra.mxu0 %v2987
        %3035 = vmatprep.subr.bf16.mxu0 0
        %3036 = vmatpush1.bf16.msra.mxu0 %v2988
        %3037 = vmatprep.mubr.bf16.mxu0 %v2872
        %3038 = vmatmul.mubr.bf16.gmra.mrb[0].mxu0 %v2871
        %v3039 = vpop.f32.mrb[0].mxu0
        %v3040 = vadd.f32 %v2908, %v3039
        %v3041 = vpop.f32.mrb[0].mxu0
        %v3042 = vpop.f32.mrb[0].mxu0
        %v3043 = vadd.f32 %v2908, %v3042
        %v3044 = vpop.f32.mrb[0].mxu0
        %3045 = vdwg.mxu0
        %v3046 = vadd.f32 %v2697, %v3040
        %v3047 = vadd.f32 %v2698, %v3043
        %3048 = vadd.xlane.f32.xlu0 %v3046
        %v3049 = vpop.xlane.xlu0 %3048
        %3050 = vadd.xlane.f32.xlu0 %v3047
        %v3051 = vpop.xlane.xlu0 %3050
        %v3052 = vmul.f32 %v3049, %v2668
        %v3053 = vmul.f32 %v3051, %v2668
        %v3054 = vsub.f32 %v3046, %v3052
        %v3055 = vsub.f32 %v3047, %v3053
        %v3056 = vmul.f32 %v3054, %v3054
        %v3057 = vmul.f32 %v3055, %v3055
        %3058 = vadd.xlane.f32.xlu0 %v3056
        %v3059 = vpop.xlane.xlu0 %3058
        %3060 = vadd.xlane.f32.xlu0 %v3057
        %v3061 = vpop.xlane.xlu0 %3060
        %v3062 = vmul.f32 %v3059, %v2668
        %v3063 = vmul.f32 %v3061, %v2668
        %v3064 = vadd.f32 %v3062, 1e-05
        %v3065 = vadd.f32 %v3063, 1e-05
        %v3066 = vrsqrt.pop %v3064
        %v3067 = vrsqrt.pop %v3065
        %v3068 = vmul.f32 %v3054, %v3066
        %v3069 = vmul.f32 %v3055, %v3067
        %v3070 = vlaneseq
        %v3071 = vshrl.u32 %v3070, 7
        %v3072 = vsub.s32 4, %v3071
        %v3073 = vrot.slane %v385, %v3072
        %v3074 = vmul.f32 %v3068, %v3073
        %v3075 = vmul.f32 %v3069, %v3073
        %v3076 = vlaneseq
        %v3077 = vshrl.u32 %v3076, 7
        %v3078 = vsub.s32 5, %v3077
        %v3079 = vrot.slane %v385, %v3078
        %v3080 = vadd.f32 %v3074, %v3079
        %v3081 = vadd.f32 %v3075, %v3079
        %3082 = vadd.xlane.f32.xlu0 %v3080
        %v3083 = vpop.xlane.xlu0 %3082
        %3084 = vadd.xlane.f32.xlu0 %v3081
        %v3085 = vpop.xlane.xlu0 %3084
        %v3086 = vmul.f32 %v3083, %v2668
        %v3087 = vmul.f32 %v3085, %v2668
        %v3088 = vsub.f32 %v3080, %v3086
        %v3089 = vsub.f32 %v3081, %v3087
        %v3090 = vmul.f32 %v3088, %v3088
        %v3091 = vmul.f32 %v3089, %v3089
        %3092 = vadd.xlane.f32.xlu0 %v3090
        %v3093 = vpop.xlane.xlu0 %3092
        %3094 = vadd.xlane.f32.xlu0 %v3091
        %v3095 = vpop.xlane.xlu0 %3094
        %v3096 = vmul.f32 %v3093, %v2668
        %v3097 = vmul.f32 %v3095, %v2668
        %v3098 = vadd.f32 %v3096, 1e-05
        %v3099 = vadd.f32 %v3097, 1e-05
        %v3100 = vrsqrt.pop %v3098
        %v3101 = vrsqrt.pop %v3099
        %v3102 = vmul.f32 %v3088, %v3100
        %v3103 = vmul.f32 %v3089, %v3101
        %v3104 = vlaneseq
        %v3105 = vshrl.u32 %v3104, 7
        %v3106 = vsub.s32 6, %v3105
        %v3107 = vrot.slane %v385, %v3106
        %v3108 = vmul.f32 %v3102, %v3107
        %v3109 = vmul.f32 %v3103, %v3107
        %v3110 = vlaneseq
        %v3111 = vshrl.u32 %v3110, 7
        %v3112 = vsub.s32 7, %v3111
        %v3113 = vrot.slane %v385, %v3112
        %v3114 = vadd.f32 %v3108, %v3113
        %v3115 = vadd.f32 %v3109, %v3113
        %3116 = vst [vmem:[%s381] sm:$0xff] %v3114
        %3117 = vst [vmem:[%s381 + $0x8] sm:$0xff] %v3115
        %s3118 = sand.u32 %s208, 1
        %s3119 = scalar_lea.sflag [#allocation4], %s3118
        %s3120 = sand.u32 %s208, 1
        %s3121 = smul.addr %s3120, 16
        %s3122 = scalar_lea.vmem [#allocation11], %s3121
        // Predicated region
        $region73: #{tpu_custom_call.1} parent=51 // pred_check
          %p3123 = pneg %p218
        $region74: #{tpu_custom_call.1} parent=51 // pred_check_branch
          %3125 = sbr.rel (%p3123) target = $region76
        $region75: #{tpu_custom_call.1} parent=51 // pred_region
          %s3126 = smul.u32 2, %s27
          %s3128 = ssub.s32 256, 256
          %3129 = vsyncadd %s3119, %s3128
          %s3130 = smul.addr %s3126, 128
          %s3131 = scalar_lea.hbm %s8, %s3130
          %s3132 = sshll.u32 %s3122, 4
          %s3133 = int_to_ptr.vmem [resolvable:$true] %s3132
          %3138 = dma.vmem_to_hbm [thread:$0]  %s3133, 256, %s3131, %s3119, 128, 128, 8
        $region76: #{tpu_custom_call.1} parent=51 // pred_fallthru
          _
      $region52: #{tpu_custom_call.1} parent=5 // pred_fallthru
        _
      %p3139 = scmp.le.s32.totalorder 2, %s22
      // Predicated region
      $region77: #{tpu_custom_call.1} parent=5 // pred_check
        %p3140 = pneg %p3139
      $region78: #{tpu_custom_call.1} parent=5 // pred_check_branch
        %3142 = sbr.rel (%p3140) target = $region80
      $region79: #{tpu_custom_call.1} parent=5 // pred_region
        %s3143 = ssub.s32 %s22, 2
        // Predicated region
        $region81: #{tpu_custom_call.1} parent=79 // pred_check
          %p3144 = pneg %p224
        $region82: #{tpu_custom_call.1} parent=79 // pred_check_branch
          %3146 = sbr.rel (%p3144) target = $region84
        $region83: #{tpu_custom_call.1} parent=79 // pred_region
          %s3147 = sand.u32 %s209, 1
          %s3148 = scalar_lea.sflag [#allocation4], %s3147
          %s3149 = sand.u32 %s209, 1
          %s3150 = smul.addr %s3149, 16
          %s3151 = scalar_lea.vmem [#allocation11], %s3150
          %3152 = dma.done %s3148, 256
        $region84: #{tpu_custom_call.1} parent=79 // pred_fallthru
          _
      $region80: #{tpu_custom_call.1} parent=5 // pred_fallthru
        _
    $region6: #{tpu_custom_call.1} parent=1 // loop_footer
      %s26 = sadd.s32 1, %s22
    $region7: #{tpu_custom_call.1} parent=1 // loop_footer_branch
      %21 = sbr.rel target = $region3
    $region8: #{tpu_custom_call.1} parent=1 // loop_exit
      _
    %3153 = vsyncpa [#allocation3], 1
    %s3154 = scalar_lea.sflag [#allocation3], 1
    %3155 = vsyncpa %s3154, 1
    %3156 = vsyncpa [#allocation6], 1
    %3157 = vsyncpa [#allocation9], 1
    %3158 = vsyncpa [#allocation4], 1
    %s3159 = scalar_lea.sflag [#allocation4], 1
    %3160 = vsyncpa %s3159, 1

</llo_original>
